<compile_context>
chip_gen: v7x
topology: tpu7x:2x2x1
jax: 0.10.0
libtpu: 0.0.40
codegen_flags: <defaults>
</compile_context>

<pallas_src>
import math
import jax
import jax.numpy as jnp
from jax.experimental import pallas as pl
from jax.experimental.pallas import tpu as pltpu

CFG = dict(HIDDEN_SIZE=32, MULTI_HEAD=4, HIDDEN_SIZE_HEAD=8, FF_SIZE=64, DROPOUT_R=0.1)


def _swap_leading(x3):
    """(A, B, D) -> (B, A, D), minor (lane) dim fixed."""
    if hasattr(pltpu, "einshape"):
        return pltpu.einshape("abd->bad", x3)
    return jnp.swapaxes(x3, 0, 1)


# ----------------------------------------------------------------------------- kernel
def sa_kernel(x_ref, mask_ref, wqkv_ref, wm_ref, wf1_ref, wf2_ref, vec_ref, out_ref):
    H = CFG["HIDDEN_SIZE"]
    NH = CFG["MULTI_HEAD"]
    DH = CFG["HIDDEN_SIZE_HEAD"]
    FF = CFG["FF_SIZE"]
    Bt, L, _ = x_ref.shape
    R = Bt * L                                      # rows fed to every linear layer

    x = x_ref[...].astype(jnp.float32)              # (Bt, L, H)
    x2d = x.reshape(R, H)

    # ---- packed bias / LayerNorm vector slab (all slices start at lane 0) ----
    vec = vec_ref[...]                              # (8, 128)
    bqkv = vec[0:1, : 3 * H]
    bm = vec[1:2, :H]
    bf1 = vec[2:3, :FF]
    bf2 = vec[3:4, :H]
    g1, be1 = vec[4:5, :H], vec[5:6, :H]
    g2, be2 = vec[6:7, :H], vec[7:8, :H]

    def layernorm(v, gamma, beta, eps=1e-6):
        # MCAN LayerNorm: unbiased std, (x - mean) / (std + eps)
        mean = jnp.mean(v, axis=-1, keepdims=True)
        d = v - mean
        var = jnp.sum(d * d, axis=-1, keepdims=True) * (1.0 / (v.shape[-1] - 1))
        inv = pl.reciprocal(jnp.sqrt(var) + eps, approx=False)
        return gamma * d * inv + beta

    # ---- multi-head self-attention, all heads batched ----
    # fused QKV projection: one (R,H)x(H,3H) matmul
    qkv = jnp.dot(x2d, wqkv_ref[...], preferred_element_type=jnp.float32) + bqkv   # (R, 3H)

    # split into (q|k|v, head) batch entries: (R, 3*NH, DH) -> (3*NH, R, DH)
    qkv_g = _swap_leading(qkv.reshape(R, 3 * NH, DH))
    q3 = qkv_g[0:NH].reshape(NH * Bt, L, DH)                 # batch index = h*Bt + b
    k3 = qkv_g[NH:2 * NH].reshape(NH * Bt, L, DH)
    v3 = qkv_g[2 * NH:3 * NH].reshape(NH * Bt, L, DH)

    # additive mask bias (1.0 == masked key), broadcast ONCE to (head, batch) layout
    mask = mask_ref[...].astype(jnp.float32)                 # (Bt, 1, L)
    bias = jnp.where(mask > 0.5, -1e9, 0.0)
    bias_hb = jnp.broadcast_to(bias[None], (NH, Bt, 1, L)).reshape(NH * Bt, 1, L)

    scale = 1.0 / math.sqrt(DH)
    s = jnp.einsum("bqd,bkd->bqk", q3, k3,
                   preferred_element_type=jnp.float32) * scale + bias_hb           # (NH*Bt, L, L)
    s = s - jnp.max(s, axis=-1, keepdims=True)
    e = jnp.exp(s)
    p = e * pl.reciprocal(jnp.sum(e, axis=-1, keepdims=True), approx=False)        # one softmax
    # dropout on the attention map is identity (eval mode)
    o3 = jnp.einsum("bqk,bkd->bqd", p, v3,
                    preferred_element_type=jnp.float32)                            # (NH*Bt, L, DH)

    # merge heads: (NH, R, DH) -> (R, NH, DH) -> (R, H); single K=32 output projection
    o2d = _swap_leading(o3.reshape(NH, R, DH)).reshape(R, H)
    atted = jnp.dot(o2d, wm_ref[...], preferred_element_type=jnp.float32) + bm

    x1 = layernorm(x2d + atted, g1, be1)            # norm1(x + att)

    # ---- FFN + residual + LN ----
    hmid = jnp.maximum(jnp.dot(x1, wf1_ref[...], preferred_element_type=jnp.float32) + bf1, 0.0)
    ff = jnp.dot(hmid, wf2_ref[...], preferred_element_type=jnp.float32) + bf2
    x2 = layernorm(x1 + ff, g2, be2)                # norm2(x + ffn(x))

    out_ref[...] = x2.reshape(Bt, L, H).astype(out_ref.dtype)


# ----------------------------------------------------------------------------- wrapper
def pack_params(params):
    """wqkv / wm / wf1 / wf2 stay separate (lane-offset-0); biases+LN packed in (8,128)."""
    H, FF = CFG["HIDDEN_SIZE"], CFG["FF_SIZE"]
    wqkv = jnp.concatenate([params["wq"], params["wk"], params["wv"]], axis=1)    # (H, 3H)
    rows = [
        jnp.concatenate([params["bq"][0], params["bk"][0], params["bv"][0]]),     # 3H
        params["bm"][0], params["bf1"][0], params["bf2"][0],
        params["g1"][0], params["be1"][0], params["g2"][0], params["be2"][0],
    ]
    vec = jnp.zeros((8, 128), jnp.float32)
    for i, r in enumerate(rows):
        vec = vec.at[i, : r.shape[0]].set(r)
    return wqkv, params["wm"], params["wf1"], params["wf2"], vec


def choose_batch_block(B, L):
    rows = B * L
    if rows < 512:
        # Small workload: a single grid step. Per-step overhead (~0.35us) would
        # dominate and a megacore split returns less than it costs.
        return B
    # Large batch: split so each step carries >= ~256 rows (keeps MXU M-dim fed,
    # gives both v7x TensorCores work via "parallel" semantics).
    bt = min(B, max(1, 256 // max(L, 1)))
    while B % bt:
        bt -= 1
    return bt


def sa_forward(x, x_mask_f, params, batch_block=None):
    B, L, H = x.shape
    Bt = batch_block if batch_block is not None else choose_batch_block(B, L)
    grid = (B // Bt,)

    wqkv, wm, wf1, wf2, vec = pack_params(params)

    in_specs = [
        pl.BlockSpec((Bt, L, H), lambda b: (b, 0, 0)),     # x
        pl.BlockSpec((Bt, 1, L), lambda b: (b, 0, 0)),     # x_mask (float)
        pl.BlockSpec(wqkv.shape, lambda b: (0, 0)),        # fused q|k|v projection
        pl.BlockSpec(wm.shape, lambda b: (0, 0)),          # output projection
        pl.BlockSpec(wf1.shape, lambda b: (0, 0)),         # FFN in
        pl.BlockSpec(wf2.shape, lambda b: (0, 0)),         # FFN out
        pl.BlockSpec(vec.shape, lambda b: (0, 0)),         # packed bias / LN vectors
    ]
    out_specs = pl.BlockSpec((Bt, L, H), lambda b: (b, 0, 0))

    return pl.pallas_call(
        sa_kernel,
        out_shape=jax.ShapeDtypeStruct((B, L, H), jnp.float32),
        grid_spec=pltpu.PrefetchScalarGridSpec(
            num_scalar_prefetch=0,
            grid=grid,
            in_specs=in_specs,
            out_specs=out_specs,
        ),
        compiler_params=pltpu.CompilerParams(dimension_semantics=("parallel",)),
    )(x, x_mask_f, wqkv, wm, wf1, wf2, vec)


# ----------------------------------------------------------------------------- init / reference
def init_params(key):
    H, FF = CFG["HIDDEN_SIZE"], CFG["FF_SIZE"]
    keys = iter(jax.random.split(key, 24))

    def lin_w(k, din, dout):
        return jax.random.normal(k, (din, dout), jnp.float32) * (1.0 / math.sqrt(din))

    params = {}
    for nm in ("q", "k", "v", "m"):
        params[f"w{nm}"] = lin_w(next(keys), H, H)
        params[f"b{nm}"] = jax.random.normal(next(keys), (1, H), jnp.float32) * 0.01
    params["wf1"] = lin_w(next(keys), H, FF)
    params["bf1"] = jax.random.normal(next(keys), (1, FF), jnp.float32) * 0.01
    params["wf2"] = lin_w(next(keys), FF, H)
    params["bf2"] = jax.random.normal(next(keys), (1, H), jnp.float32) * 0.01
    for i in ("1", "2"):
        params[f"g{i}"] = jnp.ones((1, H), jnp.float32)
        params[f"be{i}"] = jnp.zeros((1, H), jnp.float32)
    return params


def reference(x, mask_f, params):
    """Pure-JAX reference faithful to the PyTorch module (vmapped over batch)."""
    nh, dh = CFG["MULTI_HEAD"], CFG["HIDDEN_SIZE_HEAD"]
    H = CFG["HIDDEN_SIZE"]

    def layernorm(v, g, b, eps=1e-6):
        mean = jnp.mean(v, axis=-1, keepdims=True)
        var = jnp.sum((v - mean) ** 2, axis=-1, keepdims=True) / (v.shape[-1] - 1)
        std = jnp.sqrt(var)
        return g * (v - mean) / (std + eps) + b

    def mhatt(v_in, k_in, q_in, mask):
        q = q_in @ params["wq"] + params["bq"][0]
        k = k_in @ params["wk"] + params["bk"][0]
        v = v_in @ params["wv"] + params["bv"][0]
        L = q.shape[0]
        qh = q.reshape(L, nh, dh).transpose(1, 0, 2)
        kh = k.reshape(-1, nh, dh).transpose(1, 0, 2)
        vh = v.reshape(-1, nh, dh).transpose(1, 0, 2)
        s = jnp.einsum("hqd,hkd->hqk", qh, kh) / math.sqrt(dh)
        s = jnp.where(mask[None, :, :] > 0.5, -1e9, s)       # masked_fill(mask, -1e9)
        p = jax.nn.softmax(s, axis=-1)
        o = jnp.einsum("hqk,hkd->hqd", p, vh)
        o = o.transpose(1, 0, 2).reshape(L, H)
        return o @ params["wm"] + params["bm"][0]

    def one(xb, mb):
        att = mhatt(xb, xb, xb, mb)
        x1 = layernorm(xb + att, params["g1"][0], params["be1"][0])
        hmid = jnp.maximum(x1 @ params["wf1"] + params["bf1"][0], 0.0)
        ff = hmid @ params["wf2"] + params["bf2"][0]
        return layernorm(x1 + ff, params["g2"][0], params["be2"][0])

    return jax.vmap(one)(x, mask_f)


if __name__ == "__main__":
    key = jax.random.PRNGKey(0)
    kx, kp = jax.random.split(key, 2)
    B, Lx, H = 2, 16, CFG["HIDDEN_SIZE"]

    x = jax.random.normal(kx, (B, Lx, H), jnp.float32)
    # x_mask: mask out the last 3 key positions of batch element 1 (bool -> float)
    mask_bool = jnp.zeros((B, 1, Lx), jnp.bool_).at[1, 0, Lx - 3:].set(True)
    mask_f = mask_bool.astype(jnp.float32)

    params = init_params(kp)

    out = sa_forward(x, mask_f, params)
    out = jax.block_until_ready(out)

    ref = reference(x, mask_f, params)
    err = float(jnp.max(jnp.abs(out - ref)))
    assert jnp.allclose(out, ref, atol=1e-4, rtol=1e-4), f"max abs err = {err}"
    print("KERNEL_OK")
</pallas_src>

<mosaic_0001>
module attributes {stable_mosaic.version = 11 : i64} {
  func.func @sa_kernel(%arg0: i32, %arg1: memref<2x16x32xf32, #tpu.memory_space<vmem>>, %arg2: memref<2x1x16xf32, #tpu.memory_space<vmem>>, %arg3: memref<32x96xf32, #tpu.memory_space<vmem>>, %arg4: memref<32x32xf32, #tpu.memory_space<vmem>>, %arg5: memref<32x64xf32, #tpu.memory_space<vmem>>, %arg6: memref<64x32xf32, #tpu.memory_space<vmem>>, %arg7: memref<8x128xf32, #tpu.memory_space<vmem>>, %arg8: memref<2x16x32xf32, #tpu.memory_space<vmem>>) attributes {dimension_semantics = [#tpu.dimension_semantics<parallel>], iteration_bounds = array<i64: 1>, scalar_prefetch = 0 : i64, scratch_operands = 0 : i64, tpu.core_type = #tpu.core_type<tc>, window_params = [{transform_indices = @transform_0, window_bounds = array<i64: 2, 16, 32>}, {transform_indices = @transform_1, window_bounds = array<i64: 2, 1, 16>}, {pipeline_mode = #tpu.pipeline_mode<synchronous>, transform_indices = @transform_2, window_bounds = array<i64: 32, 96>}, {pipeline_mode = #tpu.pipeline_mode<synchronous>, transform_indices = @transform_3, window_bounds = array<i64: 32, 32>}, {pipeline_mode = #tpu.pipeline_mode<synchronous>, transform_indices = @transform_4, window_bounds = array<i64: 32, 64>}, {pipeline_mode = #tpu.pipeline_mode<synchronous>, transform_indices = @transform_5, window_bounds = array<i64: 64, 32>}, {pipeline_mode = #tpu.pipeline_mode<synchronous>, transform_indices = @transform_6, window_bounds = array<i64: 8, 128>}, {transform_indices = @transform_7, window_bounds = array<i64: 2, 16, 32>}]} {
    %c0 = arith.constant 0 : index
    %c0_0 = arith.constant 0 : index
    %c0_1 = arith.constant 0 : index
    %0 = vector.load %arg1[%c0, %c0_0, %c0_1] : memref<2x16x32xf32, #tpu.memory_space<vmem>>, vector<2x16x32xf32>
    %1 = vector.shape_cast %0 : vector<2x16x32xf32> to vector<32x32xf32>
    %c0_2 = arith.constant 0 : index
    %c0_3 = arith.constant 0 : index
    %2 = vector.load %arg7[%c0_2, %c0_3] : memref<8x128xf32, #tpu.memory_space<vmem>>, vector<8x128xf32>
    %3 = vector.extract_strided_slice %2 {offsets = [0, 0], sizes = [1, 96], strides = [1, 1]} : vector<8x128xf32> to vector<1x96xf32>
    %4 = vector.extract_strided_slice %2 {offsets = [1, 0], sizes = [1, 32], strides = [1, 1]} : vector<8x128xf32> to vector<1x32xf32>
    %5 = vector.extract_strided_slice %2 {offsets = [2, 0], sizes = [1, 64], strides = [1, 1]} : vector<8x128xf32> to vector<1x64xf32>
    %6 = vector.extract_strided_slice %2 {offsets = [3, 0], sizes = [1, 32], strides = [1, 1]} : vector<8x128xf32> to vector<1x32xf32>
    %7 = vector.extract_strided_slice %2 {offsets = [4, 0], sizes = [1, 32], strides = [1, 1]} : vector<8x128xf32> to vector<1x32xf32>
    %8 = vector.extract_strided_slice %2 {offsets = [5, 0], sizes = [1, 32], strides = [1, 1]} : vector<8x128xf32> to vector<1x32xf32>
    %9 = vector.extract_strided_slice %2 {offsets = [6, 0], sizes = [1, 32], strides = [1, 1]} : vector<8x128xf32> to vector<1x32xf32>
    %10 = vector.extract_strided_slice %2 {offsets = [7, 0], sizes = [1, 32], strides = [1, 1]} : vector<8x128xf32> to vector<1x32xf32>
    %c0_4 = arith.constant 0 : index
    %c0_5 = arith.constant 0 : index
    %11 = vector.load %arg3[%c0_4, %c0_5] : memref<32x96xf32, #tpu.memory_space<vmem>>, vector<32x96xf32>
    %cst = arith.constant dense<0.000000e+00> : vector<32x96xf32>
    %12 = tpu.matmul %1, %11, %cst {dimension_numbers = #tpu.dot_dimension_numbers<[1], [0], [0], [1], [0, 0, 1, 1], [], []>} : vector<32x32xf32>, vector<32x96xf32>, vector<32x96xf32> -> vector<32x96xf32>
    %13 = vector.broadcast %3 : vector<1x96xf32> to vector<32x96xf32>
    %14 = arith.addf %12, %13 : vector<32x96xf32>
    %15 = vector.shape_cast %14 : vector<32x96xf32> to vector<32x12x8xf32>
    %16 = tpu.transpose %15, [1, 0, 2] : vector<32x12x8xf32> -> vector<12x32x8xf32>
    %17 = vector.extract_strided_slice %16 {offsets = [0, 0, 0], sizes = [4, 32, 8], strides = [1, 1, 1]} : vector<12x32x8xf32> to vector<4x32x8xf32>
    %18 = vector.shape_cast %17 : vector<4x32x8xf32> to vector<8x16x8xf32>
    %19 = vector.extract_strided_slice %16 {offsets = [4, 0, 0], sizes = [4, 32, 8], strides = [1, 1, 1]} : vector<12x32x8xf32> to vector<4x32x8xf32>
    %20 = vector.shape_cast %19 : vector<4x32x8xf32> to vector<8x16x8xf32>
    %21 = vector.extract_strided_slice %16 {offsets = [8, 0, 0], sizes = [4, 32, 8], strides = [1, 1, 1]} : vector<12x32x8xf32> to vector<4x32x8xf32>
    %22 = vector.shape_cast %21 : vector<4x32x8xf32> to vector<8x16x8xf32>
    %c0_6 = arith.constant 0 : index
    %c0_7 = arith.constant 0 : index
    %c0_8 = arith.constant 0 : index
    %23 = vector.load %arg2[%c0_6, %c0_7, %c0_8] : memref<2x1x16xf32, #tpu.memory_space<vmem>>, vector<2x1x16xf32>
    %cst_9 = arith.constant 5.000000e-01 : f32
    %24 = vector.broadcast %cst_9 : f32 to vector<2x1x16xf32>
    %25 = arith.cmpf ogt, %23, %24 : vector<2x1x16xf32>
    %cst_10 = arith.constant -1.000000e+09 : f32
    %cst_11 = arith.constant 0.000000e+00 : f32
    %26 = vector.broadcast %cst_10 : f32 to vector<2x1x16xf32>
    %27 = vector.broadcast %cst_11 : f32 to vector<2x1x16xf32>
    %28 = arith.select %25, %26, %27 : vector<2x1x16xi1>, vector<2x1x16xf32>
    %29 = vector.shape_cast %28 : vector<2x1x16xf32> to vector<1x2x1x16xf32>
    %30 = vector.shape_cast %29 : vector<1x2x1x16xf32> to vector<1x2x1x16xf32>
    %31 = vector.broadcast %30 : vector<1x2x1x16xf32> to vector<4x2x1x16xf32>
    %32 = vector.shape_cast %31 : vector<4x2x1x16xf32> to vector<8x1x16xf32>
    "tpu.trace_start"() <{level = 10 : i32, message = "bqd,bkd->bqk"}> : () -> ()
    %cst_12 = arith.constant dense<0.000000e+00> : vector<8x16x16xf32>
    %33 = tpu.matmul %18, %20, %cst_12 {dimension_numbers = #tpu.dot_dimension_numbers<[2], [2], [1], [1], [0, 0, 0, 1, 1, 1], [0], [0]>} : vector<8x16x8xf32>, vector<8x16x8xf32>, vector<8x16x16xf32> -> vector<8x16x16xf32>
    "tpu.trace_stop"() : () -> ()
    %cst_13 = arith.constant 0.353553385 : f32
    %34 = vector.broadcast %cst_13 : f32 to vector<8x16x16xf32>
    %35 = arith.mulf %33, %34 : vector<8x16x16xf32>
    %36 = vector.broadcast %32 : vector<8x1x16xf32> to vector<8x16x16xf32>
    %37 = arith.addf %35, %36 : vector<8x16x16xf32>
    %cst_14 = arith.constant dense<0xFF800000> : vector<8x16xf32>
    %38 = vector.multi_reduction <maximumf>, %37, %cst_14 [2] : vector<8x16x16xf32> to vector<8x16xf32>
    %39 = vector.shape_cast %38 : vector<8x16xf32> to vector<8x16x1xf32>
    %40 = vector.broadcast %39 : vector<8x16x1xf32> to vector<8x16x16xf32>
    %41 = arith.subf %37, %40 : vector<8x16x16xf32>
    %42 = math.exp %41 : vector<8x16x16xf32>
    %cst_15 = arith.constant dense<0.000000e+00> : vector<8x16xf32>
    %43 = vector.multi_reduction <add>, %42, %cst_15 [2] : vector<8x16x16xf32> to vector<8x16xf32>
    %44 = vector.shape_cast %43 : vector<8x16xf32> to vector<8x16x1xf32>
    %45 = tpu.reciprocal %44 : vector<8x16x1xf32> -> vector<8x16x1xf32>
    %46 = vector.broadcast %45 : vector<8x16x1xf32> to vector<8x16x16xf32>
    %47 = arith.mulf %42, %46 : vector<8x16x16xf32>
    "tpu.trace_start"() <{level = 10 : i32, message = "bqk,bkd->bqd"}> : () -> ()
    %cst_16 = arith.constant dense<0.000000e+00> : vector<8x16x8xf32>
    %48 = tpu.matmul %47, %22, %cst_16 {dimension_numbers = #tpu.dot_dimension_numbers<[2], [1], [1], [2], [0, 0, 0, 1, 1, 2], [0], [0]>} : vector<8x16x16xf32>, vector<8x16x8xf32>, vector<8x16x8xf32> -> vector<8x16x8xf32>
    "tpu.trace_stop"() : () -> ()
    %49 = vector.shape_cast %48 : vector<8x16x8xf32> to vector<4x32x8xf32>
    %50 = tpu.transpose %49, [1, 0, 2] : vector<4x32x8xf32> -> vector<32x4x8xf32>
    %51 = vector.shape_cast %50 : vector<32x4x8xf32> to vector<32x32xf32>
    %c0_17 = arith.constant 0 : index
    %c0_18 = arith.constant 0 : index
    %52 = vector.load %arg4[%c0_17, %c0_18] : memref<32x32xf32, #tpu.memory_space<vmem>>, vector<32x32xf32>
    %cst_19 = arith.constant dense<0.000000e+00> : vector<32x32xf32>
    %53 = tpu.matmul %51, %52, %cst_19 {dimension_numbers = #tpu.dot_dimension_numbers<[1], [0], [0], [1], [0, 0, 1, 1], [], []>} : vector<32x32xf32>, vector<32x32xf32>, vector<32x32xf32> -> vector<32x32xf32>
    %54 = vector.broadcast %4 : vector<1x32xf32> to vector<32x32xf32>
    %55 = arith.addf %53, %54 : vector<32x32xf32>
    %56 = arith.addf %1, %55 : vector<32x32xf32>
    %cst_20 = arith.constant dense<0.000000e+00> : vector<32xf32>
    %57 = vector.multi_reduction <add>, %56, %cst_20 [1] : vector<32x32xf32> to vector<32xf32>
    %58 = vector.shape_cast %57 : vector<32xf32> to vector<32x1xf32>
    %cst_21 = arith.constant 3.200000e+01 : f32
    %59 = vector.broadcast %cst_21 : f32 to vector<32x1xf32>
    %60 = arith.divf %58, %59 : vector<32x1xf32>
    %61 = vector.broadcast %60 : vector<32x1xf32> to vector<32x32xf32>
    %62 = arith.subf %56, %61 : vector<32x32xf32>
    %63 = arith.mulf %62, %62 : vector<32x32xf32>
    %cst_22 = arith.constant dense<0.000000e+00> : vector<32xf32>
    %64 = vector.multi_reduction <add>, %63, %cst_22 [1] : vector<32x32xf32> to vector<32xf32>
    %65 = vector.shape_cast %64 : vector<32xf32> to vector<32x1xf32>
    %cst_23 = arith.constant 0.0322580636 : f32
    %66 = vector.broadcast %cst_23 : f32 to vector<32x1xf32>
    %67 = arith.mulf %65, %66 : vector<32x1xf32>
    %68 = math.sqrt %67 : vector<32x1xf32>
    %cst_24 = arith.constant 9.99999997E-7 : f32
    %69 = vector.broadcast %cst_24 : f32 to vector<32x1xf32>
    %70 = arith.addf %68, %69 : vector<32x1xf32>
    %71 = tpu.reciprocal %70 : vector<32x1xf32> -> vector<32x1xf32>
    %72 = vector.broadcast %7 : vector<1x32xf32> to vector<32x32xf32>
    %73 = arith.mulf %72, %62 : vector<32x32xf32>
    %74 = vector.broadcast %71 : vector<32x1xf32> to vector<32x32xf32>
    %75 = arith.mulf %73, %74 : vector<32x32xf32>
    %76 = vector.broadcast %8 : vector<1x32xf32> to vector<32x32xf32>
    %77 = arith.addf %75, %76 : vector<32x32xf32>
    %c0_25 = arith.constant 0 : index
    %c0_26 = arith.constant 0 : index
    %78 = vector.load %arg5[%c0_25, %c0_26] : memref<32x64xf32, #tpu.memory_space<vmem>>, vector<32x64xf32>
    %cst_27 = arith.constant dense<0.000000e+00> : vector<32x64xf32>
    %79 = tpu.matmul %77, %78, %cst_27 {dimension_numbers = #tpu.dot_dimension_numbers<[1], [0], [0], [1], [0, 0, 1, 1], [], []>} : vector<32x32xf32>, vector<32x64xf32>, vector<32x64xf32> -> vector<32x64xf32>
    %80 = vector.broadcast %5 : vector<1x64xf32> to vector<32x64xf32>
    %81 = arith.addf %79, %80 : vector<32x64xf32>
    %cst_28 = arith.constant 0.000000e+00 : f32
    %82 = vector.broadcast %cst_28 : f32 to vector<32x64xf32>
    %83 = arith.maximumf %81, %82 : vector<32x64xf32>
    %c0_29 = arith.constant 0 : index
    %c0_30 = arith.constant 0 : index
    %84 = vector.load %arg6[%c0_29, %c0_30] : memref<64x32xf32, #tpu.memory_space<vmem>>, vector<64x32xf32>
    %cst_31 = arith.constant dense<0.000000e+00> : vector<32x32xf32>
    %85 = tpu.matmul %83, %84, %cst_31 {dimension_numbers = #tpu.dot_dimension_numbers<[1], [0], [0], [1], [0, 0, 1, 1], [], []>} : vector<32x64xf32>, vector<64x32xf32>, vector<32x32xf32> -> vector<32x32xf32>
    %86 = vector.broadcast %6 : vector<1x32xf32> to vector<32x32xf32>
    %87 = arith.addf %85, %86 : vector<32x32xf32>
    %88 = arith.addf %77, %87 : vector<32x32xf32>
    %cst_32 = arith.constant dense<0.000000e+00> : vector<32xf32>
    %89 = vector.multi_reduction <add>, %88, %cst_32 [1] : vector<32x32xf32> to vector<32xf32>
    %90 = vector.shape_cast %89 : vector<32xf32> to vector<32x1xf32>
    %cst_33 = arith.constant 3.200000e+01 : f32
    %91 = vector.broadcast %cst_33 : f32 to vector<32x1xf32>
    %92 = arith.divf %90, %91 : vector<32x1xf32>
    %93 = vector.broadcast %92 : vector<32x1xf32> to vector<32x32xf32>
    %94 = arith.subf %88, %93 : vector<32x32xf32>
    %95 = arith.mulf %94, %94 : vector<32x32xf32>
    %cst_34 = arith.constant dense<0.000000e+00> : vector<32xf32>
    %96 = vector.multi_reduction <add>, %95, %cst_34 [1] : vector<32x32xf32> to vector<32xf32>
    %97 = vector.shape_cast %96 : vector<32xf32> to vector<32x1xf32>
    %cst_35 = arith.constant 0.0322580636 : f32
    %98 = vector.broadcast %cst_35 : f32 to vector<32x1xf32>
    %99 = arith.mulf %97, %98 : vector<32x1xf32>
    %100 = math.sqrt %99 : vector<32x1xf32>
    %cst_36 = arith.constant 9.99999997E-7 : f32
    %101 = vector.broadcast %cst_36 : f32 to vector<32x1xf32>
    %102 = arith.addf %100, %101 : vector<32x1xf32>
    %103 = tpu.reciprocal %102 : vector<32x1xf32> -> vector<32x1xf32>
    %104 = vector.broadcast %9 : vector<1x32xf32> to vector<32x32xf32>
    %105 = arith.mulf %104, %94 : vector<32x32xf32>
    %106 = vector.broadcast %103 : vector<32x1xf32> to vector<32x32xf32>
    %107 = arith.mulf %105, %106 : vector<32x32xf32>
    %108 = vector.broadcast %10 : vector<1x32xf32> to vector<32x32xf32>
    %109 = arith.addf %107, %108 : vector<32x32xf32>
    %110 = vector.shape_cast %109 : vector<32x32xf32> to vector<2x16x32xf32>
    %c0_37 = arith.constant 0 : index
    %c0_38 = arith.constant 0 : index
    %c0_39 = arith.constant 0 : index
    %111 = vector.load %arg8[%c0_37, %c0_38, %c0_39] : memref<2x16x32xf32, #tpu.memory_space<vmem>>, vector<2x16x32xf32>
    tpu.vector_store %arg8[%c0_37, %c0_38, %c0_39], %110 {strides = array<i32>} : memref<2x16x32xf32, #tpu.memory_space<vmem>>, vector<2x16x32xf32>,
    return
  }
  func.func @transform_0(%arg0: i32) -> (i32, i32, i32) {
    %c0_i32 = arith.constant 0 : i32
    %c0_i32_0 = arith.constant 0 : i32
    %c0_i32_1 = arith.constant 0 : i32
    return %arg0, %c0_i32, %c0_i32_0 : i32, i32, i32
  }
  func.func @transform_1(%arg0: i32) -> (i32, i32, i32) {
    %c0_i32 = arith.constant 0 : i32
    %c0_i32_0 = arith.constant 0 : i32
    %c0_i32_1 = arith.constant 0 : i32
    return %arg0, %c0_i32, %c0_i32_0 : i32, i32, i32
  }
  func.func @transform_2(%arg0: i32) -> (i32, i32) {
    %c0_i32 = arith.constant 0 : i32
    %c0_i32_0 = arith.constant 0 : i32
    %c0_i32_1 = arith.constant 0 : i32
    return %c0_i32, %c0_i32_0 : i32, i32
  }
  func.func @transform_3(%arg0: i32) -> (i32, i32) {
    %c0_i32 = arith.constant 0 : i32
    %c0_i32_0 = arith.constant 0 : i32
    %c0_i32_1 = arith.constant 0 : i32
    return %c0_i32, %c0_i32_0 : i32, i32
  }
  func.func @transform_4(%arg0: i32) -> (i32, i32) {
    %c0_i32 = arith.constant 0 : i32
    %c0_i32_0 = arith.constant 0 : i32
    %c0_i32_1 = arith.constant 0 : i32
    return %c0_i32, %c0_i32_0 : i32, i32
  }
  func.func @transform_5(%arg0: i32) -> (i32, i32) {
    %c0_i32 = arith.constant 0 : i32
    %c0_i32_0 = arith.constant 0 : i32
    %c0_i32_1 = arith.constant 0 : i32
    return %c0_i32, %c0_i32_0 : i32, i32
  }
  func.func @transform_6(%arg0: i32) -> (i32, i32) {
    %c0_i32 = arith.constant 0 : i32
    %c0_i32_0 = arith.constant 0 : i32
    %c0_i32_1 = arith.constant 0 : i32
    return %c0_i32, %c0_i32_0 : i32, i32
  }
  func.func @transform_7(%arg0: i32) -> (i32, i32, i32) {
    %c0_i32 = arith.constant 0 : i32
    %c0_i32_0 = arith.constant 0 : i32
    %c0_i32_1 = arith.constant 0 : i32
    return %arg0, %c0_i32, %c0_i32_0 : i32, i32, i32
  }
}

</mosaic_0001>

<llo_original>
// kernel: tpu_custom_call.1
$region0: #{tpu_custom_call.1}
  #allocation0 [shape = 'u32[]', space=smem, size = 0x4, offset = 0x4, fixed_abs, tag = 'smem constant byte address 0x4 - core index']
  #allocation1 [shape = 'u32[144,128]{1,0:T(1,128)}', space=vmem, size = 0x12000, scoped, tag = 'internal scratch']
  %s0 = inlined_call_operand.vmem [shape: f32[2,16,32], index: 0, kind: input, shape index: {}]
  %s1 = inlined_call_operand.vmem [shape: f32[2,1,16], index: 1, kind: input, shape index: {}]
  %s2 = inlined_call_operand.vmem [shape: f32[32,96], index: 2, kind: input, shape index: {}]
  %s3 = inlined_call_operand.vmem [shape: f32[32,32], index: 3, kind: input, shape index: {}]
  %s4 = inlined_call_operand.hbm [shape: f32[32,64], index: 4, kind: input, shape index: {}]
  %s5 = inlined_call_operand.vmem [shape: f32[64,32], index: 5, kind: input, shape index: {}]
  %s6 = inlined_call_operand.vmem [shape: f32[8,128], index: 6, kind: input, shape index: {}]
  %s7 = inlined_call_operand.hbm [shape: f32[2,16,32], index: 7, kind: output, shape index: {}]
  %s8 = sld [smem:[#allocation0]]
  $region42: #{tpu_custom_call.1} parent=0
    _
  %s10 = ssub.s32 1, %s8
  %s11 = scalar_select 0, %s10, %s8
  $region1: #{tpu_custom_call.1} parent=0
    #allocation2 [shape = 'u8[16384]{0}', space=vmem, size = 0x4000, scoped, tag = 'input window, operand 4, single buffered']
    #allocation3 [shape = 's32[1]{0}', space=sflag, size = 0x4, scoped, tag = 'scoped memory for tpu_custom_call.1']
    #allocation4 [shape = 's32[1]{0}', space=sflag, size = 0x4, scoped, tag = 'scoped memory for tpu_custom_call.1']
    #allocation5 [shape = 'u8[16384]{0}', space=vmem, size = 0x4000, scoped, tag = 'output window, operand 0, single buffered']
    %12 = vsyncpa [#allocation3], 0
    %13 = vsyncpa [#allocation4], 0
    // Predicated region
    $region2: #{tpu_custom_call.1} parent=1 // pred_check
      _
    $region3: #{tpu_custom_call.1} parent=1 // pred_check_branch
      %15 = sbr.rel (0) target = $region5
    $region4: #{tpu_custom_call.1} parent=1 // pred_region
      _
    $region5: #{tpu_custom_call.1} parent=1 // pred_fallthru
      _
    // Predicated region
    $region6: #{tpu_custom_call.1} parent=1 // pred_check
      _
    $region7: #{tpu_custom_call.1} parent=1 // pred_check_branch
      %17 = sbr.rel (0) target = $region9
    $region8: #{tpu_custom_call.1} parent=1 // pred_region
      _
    $region9: #{tpu_custom_call.1} parent=1 // pred_fallthru
      _
    // Predicated region
    $region10: #{tpu_custom_call.1} parent=1 // pred_check
      _
    $region11: #{tpu_custom_call.1} parent=1 // pred_check_branch
      %19 = sbr.rel (0) target = $region13
    $region12: #{tpu_custom_call.1} parent=1 // pred_region
      _
    $region13: #{tpu_custom_call.1} parent=1 // pred_fallthru
      _
    // Predicated region
    $region14: #{tpu_custom_call.1} parent=1 // pred_check
      _
    $region15: #{tpu_custom_call.1} parent=1 // pred_check_branch
      %21 = sbr.rel (0) target = $region17
    $region16: #{tpu_custom_call.1} parent=1 // pred_region
      _
    $region17: #{tpu_custom_call.1} parent=1 // pred_fallthru
      _
    // Predicated region
    $region18: #{tpu_custom_call.1} parent=1 // pred_check
      _
    $region19: #{tpu_custom_call.1} parent=1 // pred_check_branch
      %23 = sbr.rel (0) target = $region21
    $region20: #{tpu_custom_call.1} parent=1 // pred_region
      %s25 = ssub.s32 512, 512
      %26 = vsyncadd [#allocation3], %s25
      %s27 = sshll.u32 [#allocation2], 4
      %s28 = int_to_ptr.vmem [resolvable:$true] %s27
      %33 = dma.hbm_to_vmem [thread:$0]  %s4, 512, %s28, [#allocation3], 128, 128, 8
    $region21: #{tpu_custom_call.1} parent=1 // pred_fallthru
      _
    // Predicated region
    $region22: #{tpu_custom_call.1} parent=1 // pred_check
      _
    $region23: #{tpu_custom_call.1} parent=1 // pred_check_branch
      %35 = sbr.rel (0) target = $region25
    $region24: #{tpu_custom_call.1} parent=1 // pred_region
      _
    $region25: #{tpu_custom_call.1} parent=1 // pred_fallthru
      _
    // Predicated region
    $region26: #{tpu_custom_call.1} parent=1 // pred_check
      _
    $region27: #{tpu_custom_call.1} parent=1 // pred_check_branch
      %37 = sbr.rel (0) target = $region29
    $region28: #{tpu_custom_call.1} parent=1 // pred_region
      _
    $region29: #{tpu_custom_call.1} parent=1 // pred_fallthru
      _
    // Predicated region
    $region30: #{tpu_custom_call.1} parent=1 // pred_check
      _
    $region31: #{tpu_custom_call.1} parent=1 // pred_check_branch
      %39 = sbr.rel (0) target = $region33
    $region32: #{tpu_custom_call.1} parent=1 // pred_region
      %40 = dma.done [#allocation3], 512
    $region33: #{tpu_custom_call.1} parent=1 // pred_fallthru
      _
    %v41 = vld [vmem:[%s0] sm:$0xff]
    %v42 = vld [vmem:[%s0 + $0x8] sm:$0xff]
    %v43 = vld [vmem:[%s0 + $0x10] sm:$0xff]
    %v44 = vld [vmem:[%s0 + $0x18] sm:$0xff]
    %v45 = vld [vmem:[%s6] sm:$0xff]
    %v46 = vld [vmem:[%s2] sm:$0xff]
    %v47 = vld [vmem:[%s2 + $0x8] sm:$0xff]
    %v48 = vld [vmem:[%s2 + $0x10] sm:$0xff]
    %v49 = vld [vmem:[%s2 + $0x18] sm:$0xff]
    %v50 = vlaneseq
    %v51 = vshrl.u32 %v50, 7
    %v52 = vsub.s32 0, %v51
    %v53 = vrot.slane %v45, %v52
    %vm54 = vcmask 261120
    %v56 = vsel %vm54, %v41, 0
    %v59 = vsel %vm54, %v42, 0
    %v62 = vsel %vm54, %v43, 0
    %v65 = vsel %vm54, %v44, 0
    %67 = vmatprep.subr.mxu0 0.0
    %68 = vmatpush1.msra.mxu0 %v46
    %69 = vmatprep.subr.mxu0 0.0
    %70 = vmatpush1.msra.mxu0 %v47
    %71 = vmatprep.subr.mxu0 0.0
    %72 = vmatpush1.msra.mxu0 %v48
    %73 = vmatprep.subr.mxu0 0.0
    %74 = vmatpush1.msra.mxu0 %v49
    %75 = vmatprep.subr.mxu0 0.0
    %76 = vmatpush1.msra.mxu0 0.0
    %77 = vmatprep.subr.mxu0 0.0
    %78 = vmatpush1.msra.mxu0 0.0
    %79 = vmatprep.subr.mxu0 0.0
    %80 = vmatpush1.msra.mxu0 0.0
    %81 = vmatprep.subr.mxu0 0.0
    %82 = vmatpush1.msra.mxu0 0.0
    %83 = vmatprep.subr.mxu0 0.0
    %84 = vmatpush1.msra.mxu0 0.0
    %85 = vmatprep.subr.mxu0 0.0
    %86 = vmatpush1.msra.mxu0 0.0
    %87 = vmatprep.subr.mxu0 0.0
    %88 = vmatpush1.msra.mxu0 0.0
    %89 = vmatprep.subr.mxu0 0.0
    %90 = vmatpush1.msra.mxu0 0.0
    %91 = vmatprep.subr.mxu0 0.0
    %92 = vmatpush1.msra.mxu0 0.0
    %93 = vmatprep.subr.mxu0 0.0
    %94 = vmatpush1.msra.mxu0 0.0
    %95 = vmatprep.subr.mxu0 0.0
    %96 = vmatpush1.msra.mxu0 0.0
    %97 = vmatprep.subr.mxu0 0.0
    %98 = vmatpush1.msra.mxu0 0.0
    %99 = vmatprep.subr.mxu0 0.0
    %100 = vmatpush1.msra.mxu0 0.0
    %101 = vmatprep.subr.mxu0 0.0
    %102 = vmatpush1.msra.mxu0 0.0
    %103 = vmatprep.subr.mxu0 0.0
    %104 = vmatpush1.msra.mxu0 0.0
    %105 = vmatprep.subr.mxu0 0.0
    %106 = vmatpush1.msra.mxu0 0.0
    %107 = vmatprep.subr.mxu0 0.0
    %108 = vmatpush1.msra.mxu0 0.0
    %109 = vmatprep.subr.mxu0 0.0
    %110 = vmatpush1.msra.mxu0 0.0
    %111 = vmatprep.subr.mxu0 0.0
    %112 = vmatpush1.msra.mxu0 0.0
    %113 = vmatprep.subr.mxu0 0.0
    %114 = vmatpush1.msra.mxu0 0.0
    %115 = vmatprep.subr.mxu0 0.0
    %116 = vmatpush1.msra.mxu0 0.0
    %117 = vmatprep.subr.mxu0 0.0
    %118 = vmatpush1.msra.mxu0 0.0
    %119 = vmatprep.subr.mxu0 0.0
    %120 = vmatpush1.msra.mxu0 0.0
    %121 = vmatprep.subr.mxu0 0.0
    %122 = vmatpush1.msra.mxu0 0.0
    %123 = vmatprep.subr.mxu0 0.0
    %124 = vmatpush1.msra.mxu0 0.0
    %125 = vmatprep.subr.mxu0 0.0
    %126 = vmatpush1.msra.mxu0 0.0
    %127 = vmatprep.subr.mxu0 0.0
    %128 = vmatpush1.msra.mxu0 0.0
    %129 = vmatprep.subr.mxu0 0.0
    %130 = vmatpush1.msra.mxu0 0.0
    %131 = vmatprep.mubr.f32.mxu0 0.0
    %132 = vmatmul.mubr.f32.gmra.mrb[0].mxu0 %v56
    %v133 = vpop.f32.mrb[0].mxu0
    %v134 = vadd.f32 %v53, %v133
    %v135 = vpop.f32.mrb[0].mxu0
    %136 = vmatprep.mubr.f32.mxu0 0.0
    %137 = vmatmul.mubr.f32.gmra.mrb[0].mxu0 %v59
    %v138 = vpop.f32.mrb[0].mxu0
    %v139 = vadd.f32 %v53, %v138
    %v140 = vpop.f32.mrb[0].mxu0
    %141 = vmatprep.mubr.f32.mxu0 0.0
    %142 = vmatmul.mubr.f32.gmra.mrb[0].mxu0 %v62
    %v143 = vpop.f32.mrb[0].mxu0
    %v144 = vadd.f32 %v53, %v143
    %v145 = vpop.f32.mrb[0].mxu0
    %146 = vmatprep.mubr.f32.mxu0 0.0
    %147 = vmatmul.mubr.f32.gmra.mrb[0].mxu0 %v65
    %v148 = vpop.f32.mrb[0].mxu0
    %v149 = vadd.f32 %v53, %v148
    %v150 = vpop.f32.mrb[0].mxu0
    %151 = vdwg.mxu0
    %156 = vrot.lane.b32.xlu0 %v134, 120
    %v157 = vpop.permute.xlu0 %156
    %158 = vrot.lane.b32.xlu0 %v139, 120
    %v159 = vpop.permute.xlu0 %158
    %160 = vrot.lane.b32.xlu0 %v144, 120
    %v161 = vpop.permute.xlu0 %160
    %162 = vrot.lane.b32.xlu0 %v149, 120
    %v163 = vpop.permute.xlu0 %162
    %168 = vrot.lane.b32.xlu0 %v134, 112
    %v169 = vpop.permute.xlu0 %168
    %170 = vrot.lane.b32.xlu0 %v139, 112
    %v171 = vpop.permute.xlu0 %170
    %172 = vrot.lane.b32.xlu0 %v144, 112
    %v173 = vpop.permute.xlu0 %172
    %174 = vrot.lane.b32.xlu0 %v149, 112
    %v175 = vpop.permute.xlu0 %174
    %180 = vrot.lane.b32.xlu0 %v134, 104
    %v181 = vpop.permute.xlu0 %180
    %182 = vrot.lane.b32.xlu0 %v139, 104
    %v183 = vpop.permute.xlu0 %182
    %184 = vrot.lane.b32.xlu0 %v144, 104
    %v185 = vpop.permute.xlu0 %184
    %186 = vrot.lane.b32.xlu0 %v149, 104
    %v187 = vpop.permute.xlu0 %186
    %192 = vrot.lane.b32.xlu0 %v134, 96
    %v193 = vpop.permute.xlu0 %192
    %194 = vrot.lane.b32.xlu0 %v139, 96
    %v195 = vpop.permute.xlu0 %194
    %196 = vrot.lane.b32.xlu0 %v144, 96
    %v197 = vpop.permute.xlu0 %196
    %198 = vrot.lane.b32.xlu0 %v149, 96
    %v199 = vpop.permute.xlu0 %198
    %204 = vrot.lane.b32.xlu0 %v134, 88
    %v205 = vpop.permute.xlu0 %204
    %206 = vrot.lane.b32.xlu0 %v139, 88
    %v207 = vpop.permute.xlu0 %206
    %208 = vrot.lane.b32.xlu0 %v144, 88
    %v209 = vpop.permute.xlu0 %208
    %210 = vrot.lane.b32.xlu0 %v149, 88
    %v211 = vpop.permute.xlu0 %210
    %216 = vrot.lane.b32.xlu0 %v134, 80
    %v217 = vpop.permute.xlu0 %216
    %218 = vrot.lane.b32.xlu0 %v139, 80
    %v219 = vpop.permute.xlu0 %218
    %220 = vrot.lane.b32.xlu0 %v144, 80
    %v221 = vpop.permute.xlu0 %220
    %222 = vrot.lane.b32.xlu0 %v149, 80
    %v223 = vpop.permute.xlu0 %222
    %228 = vrot.lane.b32.xlu0 %v134, 72
    %v229 = vpop.permute.xlu0 %228
    %230 = vrot.lane.b32.xlu0 %v139, 72
    %v231 = vpop.permute.xlu0 %230
    %232 = vrot.lane.b32.xlu0 %v144, 72
    %v233 = vpop.permute.xlu0 %232
    %234 = vrot.lane.b32.xlu0 %v149, 72
    %v235 = vpop.permute.xlu0 %234
    %240 = vrot.lane.b32.xlu0 %v134, 64
    %v241 = vpop.permute.xlu0 %240
    %242 = vrot.lane.b32.xlu0 %v139, 64
    %v243 = vpop.permute.xlu0 %242
    %244 = vrot.lane.b32.xlu0 %v144, 64
    %v245 = vpop.permute.xlu0 %244
    %246 = vrot.lane.b32.xlu0 %v149, 64
    %v247 = vpop.permute.xlu0 %246
    %252 = vrot.lane.b32.xlu0 %v134, 56
    %v253 = vpop.permute.xlu0 %252
    %254 = vrot.lane.b32.xlu0 %v139, 56
    %v255 = vpop.permute.xlu0 %254
    %256 = vrot.lane.b32.xlu0 %v144, 56
    %v257 = vpop.permute.xlu0 %256
    %258 = vrot.lane.b32.xlu0 %v149, 56
    %v259 = vpop.permute.xlu0 %258
    %264 = vrot.lane.b32.xlu0 %v134, 48
    %v265 = vpop.permute.xlu0 %264
    %266 = vrot.lane.b32.xlu0 %v139, 48
    %v267 = vpop.permute.xlu0 %266
    %268 = vrot.lane.b32.xlu0 %v144, 48
    %v269 = vpop.permute.xlu0 %268
    %270 = vrot.lane.b32.xlu0 %v149, 48
    %v271 = vpop.permute.xlu0 %270
    %276 = vrot.lane.b32.xlu0 %v134, 40
    %v277 = vpop.permute.xlu0 %276
    %278 = vrot.lane.b32.xlu0 %v139, 40
    %v279 = vpop.permute.xlu0 %278
    %280 = vrot.lane.b32.xlu0 %v144, 40
    %v281 = vpop.permute.xlu0 %280
    %282 = vrot.lane.b32.xlu0 %v149, 40
    %v283 = vpop.permute.xlu0 %282
    %v288 = vcombine.low %v134, %v169
    %v289 = vcombine.high %v134, %v169
    %v291 = vunpack.c.l.s4 1983009808
    %v292 = vunpack.c.0.s8 %v291
    %v293 = vlaneseq
    %v294 = vshrl.u32 %v293, 7
    %v295 = vsub.s32 %v292, %v294
    %v296 = vrot.slane %v288, %v295
    %v298 = vunpack.c.l.s4 1983009808
    %v299 = vunpack.c.0.s8 %v298
    %v300 = vlaneseq
    %v301 = vshrl.u32 %v300, 7
    %v302 = vsub.s32 %v299, %v301
    %v303 = vrot.slane %v289, %v302
    %v304 = vcombine.low %v157, %v181
    %v305 = vcombine.high %v157, %v181
    %v307 = vunpack.c.l.s4 1983009808
    %v308 = vunpack.c.0.s8 %v307
    %v309 = vlaneseq
    %v310 = vshrl.u32 %v309, 7
    %v311 = vsub.s32 %v308, %v310
    %v312 = vrot.slane %v304, %v311
    %v314 = vunpack.c.l.s4 1983009808
    %v315 = vunpack.c.0.s8 %v314
    %v316 = vlaneseq
    %v317 = vshrl.u32 %v316, 7
    %v318 = vsub.s32 %v315, %v317
    %v319 = vrot.slane %v305, %v318
    %v320 = vcombine.low %v193, %v217
    %v321 = vcombine.high %v193, %v217
    %v323 = vunpack.c.l.s4 1983009808
    %v324 = vunpack.c.0.s8 %v323
    %v325 = vlaneseq
    %v326 = vshrl.u32 %v325, 7
    %v327 = vsub.s32 %v324, %v326
    %v328 = vrot.slane %v320, %v327
    %v330 = vunpack.c.l.s4 1983009808
    %v331 = vunpack.c.0.s8 %v330
    %v332 = vlaneseq
    %v333 = vshrl.u32 %v332, 7
    %v334 = vsub.s32 %v331, %v333
    %v335 = vrot.slane %v321, %v334
    %v336 = vcombine.low %v205, %v229
    %v337 = vcombine.high %v205, %v229
    %v339 = vunpack.c.l.s4 1983009808
    %v340 = vunpack.c.0.s8 %v339
    %v341 = vlaneseq
    %v342 = vshrl.u32 %v341, 7
    %v343 = vsub.s32 %v340, %v342
    %v344 = vrot.slane %v336, %v343
    %v346 = vunpack.c.l.s4 1983009808
    %v347 = vunpack.c.0.s8 %v346
    %v348 = vlaneseq
    %v349 = vshrl.u32 %v348, 7
    %v350 = vsub.s32 %v347, %v349
    %v351 = vrot.slane %v337, %v350
    %v352 = vcombine.low %v296, %v312
    %v353 = vcombine.high %v296, %v312
    %v355 = vunpack.c.l.s4 1934713408
    %v356 = vunpack.c.0.s8 %v355
    %v357 = vlaneseq
    %v358 = vshrl.u32 %v357, 7
    %v359 = vsub.s32 %v356, %v358
    %v360 = vrot.slane %v352, %v359
    %v362 = vunpack.c.l.s4 1934713408
    %v363 = vunpack.c.0.s8 %v362
    %v364 = vlaneseq
    %v365 = vshrl.u32 %v364, 7
    %v366 = vsub.s32 %v363, %v365
    %v367 = vrot.slane %v353, %v366
    %v368 = vcombine.low %v303, %v319
    %v369 = vcombine.high %v303, %v319
    %v371 = vunpack.c.l.s4 1934713408
    %v372 = vunpack.c.0.s8 %v371
    %v373 = vlaneseq
    %v374 = vshrl.u32 %v373, 7
    %v375 = vsub.s32 %v372, %v374
    %v376 = vrot.slane %v368, %v375
    %v378 = vunpack.c.l.s4 1934713408
    %v379 = vunpack.c.0.s8 %v378
    %v380 = vlaneseq
    %v381 = vshrl.u32 %v380, 7
    %v382 = vsub.s32 %v379, %v381
    %v383 = vrot.slane %v369, %v382
    %v384 = vcombine.low %v328, %v344
    %v385 = vcombine.high %v328, %v344
    %v387 = vunpack.c.l.s4 1934713408
    %v388 = vunpack.c.0.s8 %v387
    %v389 = vlaneseq
    %v390 = vshrl.u32 %v389, 7
    %v391 = vsub.s32 %v388, %v390
    %v392 = vrot.slane %v384, %v391
    %v394 = vunpack.c.l.s4 1934713408
    %v395 = vunpack.c.0.s8 %v394
    %v396 = vlaneseq
    %v397 = vshrl.u32 %v396, 7
    %v398 = vsub.s32 %v395, %v397
    %v399 = vrot.slane %v385, %v398
    %v400 = vcombine.low %v335, %v351
    %v401 = vcombine.high %v335, %v351
    %v403 = vunpack.c.l.s4 1934713408
    %v404 = vunpack.c.0.s8 %v403
    %v405 = vlaneseq
    %v406 = vshrl.u32 %v405, 7
    %v407 = vsub.s32 %v404, %v406
    %v408 = vrot.slane %v400, %v407
    %v410 = vunpack.c.l.s4 1934713408
    %v411 = vunpack.c.0.s8 %v410
    %v412 = vlaneseq
    %v413 = vshrl.u32 %v412, 7
    %v414 = vsub.s32 %v411, %v413
    %v415 = vrot.slane %v401, %v414
    %v416 = vcombine.low %v360, %v392
    %v417 = vcombine.high %v360, %v392
    %v418 = vcombine.low %v367, %v399
    %v419 = vcombine.high %v367, %v399
    %v420 = vcombine.low %v376, %v408
    %v421 = vcombine.high %v376, %v408
    %v422 = vcombine.low %v383, %v415
    %v423 = vcombine.high %v383, %v415
    %v424 = vcombine.low %v241, %v265
    %v425 = vcombine.high %v241, %v265
    %v427 = vunpack.c.l.s4 1983009808
    %v428 = vunpack.c.0.s8 %v427
    %v429 = vlaneseq
    %v430 = vshrl.u32 %v429, 7
    %v431 = vsub.s32 %v428, %v430
    %v432 = vrot.slane %v424, %v431
    %v434 = vunpack.c.l.s4 1983009808
    %v435 = vunpack.c.0.s8 %v434
    %v436 = vlaneseq
    %v437 = vshrl.u32 %v436, 7
    %v438 = vsub.s32 %v435, %v437
    %v439 = vrot.slane %v425, %v438
    %v440 = vcombine.low %v253, %v277
    %v441 = vcombine.high %v253, %v277
    %v443 = vunpack.c.l.s4 1983009808
    %v444 = vunpack.c.0.s8 %v443
    %v445 = vlaneseq
    %v446 = vshrl.u32 %v445, 7
    %v447 = vsub.s32 %v444, %v446
    %v448 = vrot.slane %v440, %v447
    %v450 = vunpack.c.l.s4 1983009808
    %v451 = vunpack.c.0.s8 %v450
    %v452 = vlaneseq
    %v453 = vshrl.u32 %v452, 7
    %v454 = vsub.s32 %v451, %v453
    %v455 = vrot.slane %v441, %v454
    %v456 = vcombine.low %v432, %v448
    %v457 = vcombine.high %v432, %v448
    %v459 = vunpack.c.l.s4 1934713408
    %v460 = vunpack.c.0.s8 %v459
    %v461 = vlaneseq
    %v462 = vshrl.u32 %v461, 7
    %v463 = vsub.s32 %v460, %v462
    %v464 = vrot.slane %v456, %v463
    %v466 = vunpack.c.l.s4 1934713408
    %v467 = vunpack.c.0.s8 %v466
    %v468 = vlaneseq
    %v469 = vshrl.u32 %v468, 7
    %v470 = vsub.s32 %v467, %v469
    %v471 = vrot.slane %v457, %v470
    %v472 = vcombine.low %v439, %v455
    %v473 = vcombine.high %v439, %v455
    %v475 = vunpack.c.l.s4 1934713408
    %v476 = vunpack.c.0.s8 %v475
    %v477 = vlaneseq
    %v478 = vshrl.u32 %v477, 7
    %v479 = vsub.s32 %v476, %v478
    %v480 = vrot.slane %v472, %v479
    %v482 = vunpack.c.l.s4 1934713408
    %v483 = vunpack.c.0.s8 %v482
    %v484 = vlaneseq
    %v485 = vshrl.u32 %v484, 7
    %v486 = vsub.s32 %v483, %v485
    %v487 = vrot.slane %v473, %v486
    %v488 = vcombine.high %v464, 0.0
    %v489 = vcombine.high %v471, 0.0
    %v490 = vcombine.high %v480, 0.0
    %v491 = vcombine.high %v487, 0.0
    %v492 = vcombine.low %v139, %v171
    %v493 = vcombine.high %v139, %v171
    %v495 = vunpack.c.l.s4 1983009808
    %v496 = vunpack.c.0.s8 %v495
    %v497 = vlaneseq
    %v498 = vshrl.u32 %v497, 7
    %v499 = vsub.s32 %v496, %v498
    %v500 = vrot.slane %v492, %v499
    %v502 = vunpack.c.l.s4 1983009808
    %v503 = vunpack.c.0.s8 %v502
    %v504 = vlaneseq
    %v505 = vshrl.u32 %v504, 7
    %v506 = vsub.s32 %v503, %v505
    %v507 = vrot.slane %v493, %v506
    %v508 = vcombine.low %v159, %v183
    %v509 = vcombine.high %v159, %v183
    %v511 = vunpack.c.l.s4 1983009808
    %v512 = vunpack.c.0.s8 %v511
    %v513 = vlaneseq
    %v514 = vshrl.u32 %v513, 7
    %v515 = vsub.s32 %v512, %v514
    %v516 = vrot.slane %v508, %v515
    %v518 = vunpack.c.l.s4 1983009808
    %v519 = vunpack.c.0.s8 %v518
    %v520 = vlaneseq
    %v521 = vshrl.u32 %v520, 7
    %v522 = vsub.s32 %v519, %v521
    %v523 = vrot.slane %v509, %v522
    %v524 = vcombine.low %v195, %v219
    %v525 = vcombine.high %v195, %v219
    %v527 = vunpack.c.l.s4 1983009808
    %v528 = vunpack.c.0.s8 %v527
    %v529 = vlaneseq
    %v530 = vshrl.u32 %v529, 7
    %v531 = vsub.s32 %v528, %v530
    %v532 = vrot.slane %v524, %v531
    %v534 = vunpack.c.l.s4 1983009808
    %v535 = vunpack.c.0.s8 %v534
    %v536 = vlaneseq
    %v537 = vshrl.u32 %v536, 7
    %v538 = vsub.s32 %v535, %v537
    %v539 = vrot.slane %v525, %v538
    %v540 = vcombine.low %v207, %v231
    %v541 = vcombine.high %v207, %v231
    %v543 = vunpack.c.l.s4 1983009808
    %v544 = vunpack.c.0.s8 %v543
    %v545 = vlaneseq
    %v546 = vshrl.u32 %v545, 7
    %v547 = vsub.s32 %v544, %v546
    %v548 = vrot.slane %v540, %v547
    %v550 = vunpack.c.l.s4 1983009808
    %v551 = vunpack.c.0.s8 %v550
    %v552 = vlaneseq
    %v553 = vshrl.u32 %v552, 7
    %v554 = vsub.s32 %v551, %v553
    %v555 = vrot.slane %v541, %v554
    %v556 = vcombine.low %v500, %v516
    %v557 = vcombine.high %v500, %v516
    %v559 = vunpack.c.l.s4 1934713408
    %v560 = vunpack.c.0.s8 %v559
    %v561 = vlaneseq
    %v562 = vshrl.u32 %v561, 7
    %v563 = vsub.s32 %v560, %v562
    %v564 = vrot.slane %v556, %v563
    %v566 = vunpack.c.l.s4 1934713408
    %v567 = vunpack.c.0.s8 %v566
    %v568 = vlaneseq
    %v569 = vshrl.u32 %v568, 7
    %v570 = vsub.s32 %v567, %v569
    %v571 = vrot.slane %v557, %v570
    %v572 = vcombine.low %v507, %v523
    %v573 = vcombine.high %v507, %v523
    %v575 = vunpack.c.l.s4 1934713408
    %v576 = vunpack.c.0.s8 %v575
    %v577 = vlaneseq
    %v578 = vshrl.u32 %v577, 7
    %v579 = vsub.s32 %v576, %v578
    %v580 = vrot.slane %v572, %v579
    %v582 = vunpack.c.l.s4 1934713408
    %v583 = vunpack.c.0.s8 %v582
    %v584 = vlaneseq
    %v585 = vshrl.u32 %v584, 7
    %v586 = vsub.s32 %v583, %v585
    %v587 = vrot.slane %v573, %v586
    %v588 = vcombine.low %v532, %v548
    %v589 = vcombine.high %v532, %v548
    %v591 = vunpack.c.l.s4 1934713408
    %v592 = vunpack.c.0.s8 %v591
    %v593 = vlaneseq
    %v594 = vshrl.u32 %v593, 7
    %v595 = vsub.s32 %v592, %v594
    %v596 = vrot.slane %v588, %v595
    %v598 = vunpack.c.l.s4 1934713408
    %v599 = vunpack.c.0.s8 %v598
    %v600 = vlaneseq
    %v601 = vshrl.u32 %v600, 7
    %v602 = vsub.s32 %v599, %v601
    %v603 = vrot.slane %v589, %v602
    %v604 = vcombine.low %v539, %v555
    %v605 = vcombine.high %v539, %v555
    %v607 = vunpack.c.l.s4 1934713408
    %v608 = vunpack.c.0.s8 %v607
    %v609 = vlaneseq
    %v610 = vshrl.u32 %v609, 7
    %v611 = vsub.s32 %v608, %v610
    %v612 = vrot.slane %v604, %v611
    %v614 = vunpack.c.l.s4 1934713408
    %v615 = vunpack.c.0.s8 %v614
    %v616 = vlaneseq
    %v617 = vshrl.u32 %v616, 7
    %v618 = vsub.s32 %v615, %v617
    %v619 = vrot.slane %v605, %v618
    %v620 = vcombine.low %v564, %v596
    %v621 = vcombine.high %v564, %v596
    %v622 = vcombine.low %v571, %v603
    %v623 = vcombine.high %v571, %v603
    %v624 = vcombine.low %v580, %v612
    %v625 = vcombine.high %v580, %v612
    %v626 = vcombine.low %v587, %v619
    %v627 = vcombine.high %v587, %v619
    %v628 = vcombine.low %v243, %v267
    %v629 = vcombine.high %v243, %v267
    %v631 = vunpack.c.l.s4 1983009808
    %v632 = vunpack.c.0.s8 %v631
    %v633 = vlaneseq
    %v634 = vshrl.u32 %v633, 7
    %v635 = vsub.s32 %v632, %v634
    %v636 = vrot.slane %v628, %v635
    %v638 = vunpack.c.l.s4 1983009808
    %v639 = vunpack.c.0.s8 %v638
    %v640 = vlaneseq
    %v641 = vshrl.u32 %v640, 7
    %v642 = vsub.s32 %v639, %v641
    %v643 = vrot.slane %v629, %v642
    %v644 = vcombine.low %v255, %v279
    %v645 = vcombine.high %v255, %v279
    %v647 = vunpack.c.l.s4 1983009808
    %v648 = vunpack.c.0.s8 %v647
    %v649 = vlaneseq
    %v650 = vshrl.u32 %v649, 7
    %v651 = vsub.s32 %v648, %v650
    %v652 = vrot.slane %v644, %v651
    %v654 = vunpack.c.l.s4 1983009808
    %v655 = vunpack.c.0.s8 %v654
    %v656 = vlaneseq
    %v657 = vshrl.u32 %v656, 7
    %v658 = vsub.s32 %v655, %v657
    %v659 = vrot.slane %v645, %v658
    %v660 = vcombine.low %v636, %v652
    %v661 = vcombine.high %v636, %v652
    %v663 = vunpack.c.l.s4 1934713408
    %v664 = vunpack.c.0.s8 %v663
    %v665 = vlaneseq
    %v666 = vshrl.u32 %v665, 7
    %v667 = vsub.s32 %v664, %v666
    %v668 = vrot.slane %v660, %v667
    %v670 = vunpack.c.l.s4 1934713408
    %v671 = vunpack.c.0.s8 %v670
    %v672 = vlaneseq
    %v673 = vshrl.u32 %v672, 7
    %v674 = vsub.s32 %v671, %v673
    %v675 = vrot.slane %v661, %v674
    %v676 = vcombine.low %v643, %v659
    %v677 = vcombine.high %v643, %v659
    %v679 = vunpack.c.l.s4 1934713408
    %v680 = vunpack.c.0.s8 %v679
    %v681 = vlaneseq
    %v682 = vshrl.u32 %v681, 7
    %v683 = vsub.s32 %v680, %v682
    %v684 = vrot.slane %v676, %v683
    %v686 = vunpack.c.l.s4 1934713408
    %v687 = vunpack.c.0.s8 %v686
    %v688 = vlaneseq
    %v689 = vshrl.u32 %v688, 7
    %v690 = vsub.s32 %v687, %v689
    %v691 = vrot.slane %v677, %v690
    %v692 = vcombine.high %v668, 0.0
    %v693 = vcombine.high %v675, 0.0
    %v694 = vcombine.high %v684, 0.0
    %v695 = vcombine.high %v691, 0.0
    %v696 = vcombine.low %v144, %v173
    %v697 = vcombine.high %v144, %v173
    %v699 = vunpack.c.l.s4 1983009808
    %v700 = vunpack.c.0.s8 %v699
    %v701 = vlaneseq
    %v702 = vshrl.u32 %v701, 7
    %v703 = vsub.s32 %v700, %v702
    %v704 = vrot.slane %v696, %v703
    %v706 = vunpack.c.l.s4 1983009808
    %v707 = vunpack.c.0.s8 %v706
    %v708 = vlaneseq
    %v709 = vshrl.u32 %v708, 7
    %v710 = vsub.s32 %v707, %v709
    %v711 = vrot.slane %v697, %v710
    %v712 = vcombine.low %v161, %v185
    %v713 = vcombine.high %v161, %v185
    %v715 = vunpack.c.l.s4 1983009808
    %v716 = vunpack.c.0.s8 %v715
    %v717 = vlaneseq
    %v718 = vshrl.u32 %v717, 7
    %v719 = vsub.s32 %v716, %v718
    %v720 = vrot.slane %v712, %v719
    %v722 = vunpack.c.l.s4 1983009808
    %v723 = vunpack.c.0.s8 %v722
    %v724 = vlaneseq
    %v725 = vshrl.u32 %v724, 7
    %v726 = vsub.s32 %v723, %v725
    %v727 = vrot.slane %v713, %v726
    %v728 = vcombine.low %v197, %v221
    %v729 = vcombine.high %v197, %v221
    %v731 = vunpack.c.l.s4 1983009808
    %v732 = vunpack.c.0.s8 %v731
    %v733 = vlaneseq
    %v734 = vshrl.u32 %v733, 7
    %v735 = vsub.s32 %v732, %v734
    %v736 = vrot.slane %v728, %v735
    %v738 = vunpack.c.l.s4 1983009808
    %v739 = vunpack.c.0.s8 %v738
    %v740 = vlaneseq
    %v741 = vshrl.u32 %v740, 7
    %v742 = vsub.s32 %v739, %v741
    %v743 = vrot.slane %v729, %v742
    %v744 = vcombine.low %v209, %v233
    %v745 = vcombine.high %v209, %v233
    %v747 = vunpack.c.l.s4 1983009808
    %v748 = vunpack.c.0.s8 %v747
    %v749 = vlaneseq
    %v750 = vshrl.u32 %v749, 7
    %v751 = vsub.s32 %v748, %v750
    %v752 = vrot.slane %v744, %v751
    %v754 = vunpack.c.l.s4 1983009808
    %v755 = vunpack.c.0.s8 %v754
    %v756 = vlaneseq
    %v757 = vshrl.u32 %v756, 7
    %v758 = vsub.s32 %v755, %v757
    %v759 = vrot.slane %v745, %v758
    %v760 = vcombine.low %v704, %v720
    %v761 = vcombine.high %v704, %v720
    %v763 = vunpack.c.l.s4 1934713408
    %v764 = vunpack.c.0.s8 %v763
    %v765 = vlaneseq
    %v766 = vshrl.u32 %v765, 7
    %v767 = vsub.s32 %v764, %v766
    %v768 = vrot.slane %v760, %v767
    %v770 = vunpack.c.l.s4 1934713408
    %v771 = vunpack.c.0.s8 %v770
    %v772 = vlaneseq
    %v773 = vshrl.u32 %v772, 7
    %v774 = vsub.s32 %v771, %v773
    %v775 = vrot.slane %v761, %v774
    %v776 = vcombine.low %v711, %v727
    %v777 = vcombine.high %v711, %v727
    %v779 = vunpack.c.l.s4 1934713408
    %v780 = vunpack.c.0.s8 %v779
    %v781 = vlaneseq
    %v782 = vshrl.u32 %v781, 7
    %v783 = vsub.s32 %v780, %v782
    %v784 = vrot.slane %v776, %v783
    %v786 = vunpack.c.l.s4 1934713408
    %v787 = vunpack.c.0.s8 %v786
    %v788 = vlaneseq
    %v789 = vshrl.u32 %v788, 7
    %v790 = vsub.s32 %v787, %v789
    %v791 = vrot.slane %v777, %v790
    %v792 = vcombine.low %v736, %v752
    %v793 = vcombine.high %v736, %v752
    %v795 = vunpack.c.l.s4 1934713408
    %v796 = vunpack.c.0.s8 %v795
    %v797 = vlaneseq
    %v798 = vshrl.u32 %v797, 7
    %v799 = vsub.s32 %v796, %v798
    %v800 = vrot.slane %v792, %v799
    %v802 = vunpack.c.l.s4 1934713408
    %v803 = vunpack.c.0.s8 %v802
    %v804 = vlaneseq
    %v805 = vshrl.u32 %v804, 7
    %v806 = vsub.s32 %v803, %v805
    %v807 = vrot.slane %v793, %v806
    %v808 = vcombine.low %v743, %v759
    %v809 = vcombine.high %v743, %v759
    %v811 = vunpack.c.l.s4 1934713408
    %v812 = vunpack.c.0.s8 %v811
    %v813 = vlaneseq
    %v814 = vshrl.u32 %v813, 7
    %v815 = vsub.s32 %v812, %v814
    %v816 = vrot.slane %v808, %v815
    %v818 = vunpack.c.l.s4 1934713408
    %v819 = vunpack.c.0.s8 %v818
    %v820 = vlaneseq
    %v821 = vshrl.u32 %v820, 7
    %v822 = vsub.s32 %v819, %v821
    %v823 = vrot.slane %v809, %v822
    %v824 = vcombine.low %v768, %v800
    %v825 = vcombine.high %v768, %v800
    %v826 = vcombine.low %v775, %v807
    %v827 = vcombine.high %v775, %v807
    %v828 = vcombine.low %v784, %v816
    %v829 = vcombine.high %v784, %v816
    %v830 = vcombine.low %v791, %v823
    %v831 = vcombine.high %v791, %v823
    %v832 = vcombine.low %v245, %v269
    %v833 = vcombine.high %v245, %v269
    %v835 = vunpack.c.l.s4 1983009808
    %v836 = vunpack.c.0.s8 %v835
    %v837 = vlaneseq
    %v838 = vshrl.u32 %v837, 7
    %v839 = vsub.s32 %v836, %v838
    %v840 = vrot.slane %v832, %v839
    %v842 = vunpack.c.l.s4 1983009808
    %v843 = vunpack.c.0.s8 %v842
    %v844 = vlaneseq
    %v845 = vshrl.u32 %v844, 7
    %v846 = vsub.s32 %v843, %v845
    %v847 = vrot.slane %v833, %v846
    %v848 = vcombine.low %v257, %v281
    %v849 = vcombine.high %v257, %v281
    %v851 = vunpack.c.l.s4 1983009808
    %v852 = vunpack.c.0.s8 %v851
    %v853 = vlaneseq
    %v854 = vshrl.u32 %v853, 7
    %v855 = vsub.s32 %v852, %v854
    %v856 = vrot.slane %v848, %v855
    %v858 = vunpack.c.l.s4 1983009808
    %v859 = vunpack.c.0.s8 %v858
    %v860 = vlaneseq
    %v861 = vshrl.u32 %v860, 7
    %v862 = vsub.s32 %v859, %v861
    %v863 = vrot.slane %v849, %v862
    %v864 = vcombine.low %v840, %v856
    %v865 = vcombine.high %v840, %v856
    %v867 = vunpack.c.l.s4 1934713408
    %v868 = vunpack.c.0.s8 %v867
    %v869 = vlaneseq
    %v870 = vshrl.u32 %v869, 7
    %v871 = vsub.s32 %v868, %v870
    %v872 = vrot.slane %v864, %v871
    %v874 = vunpack.c.l.s4 1934713408
    %v875 = vunpack.c.0.s8 %v874
    %v876 = vlaneseq
    %v877 = vshrl.u32 %v876, 7
    %v878 = vsub.s32 %v875, %v877
    %v879 = vrot.slane %v865, %v878
    %v880 = vcombine.low %v847, %v863
    %v881 = vcombine.high %v847, %v863
    %v883 = vunpack.c.l.s4 1934713408
    %v884 = vunpack.c.0.s8 %v883
    %v885 = vlaneseq
    %v886 = vshrl.u32 %v885, 7
    %v887 = vsub.s32 %v884, %v886
    %v888 = vrot.slane %v880, %v887
    %v890 = vunpack.c.l.s4 1934713408
    %v891 = vunpack.c.0.s8 %v890
    %v892 = vlaneseq
    %v893 = vshrl.u32 %v892, 7
    %v894 = vsub.s32 %v891, %v893
    %v895 = vrot.slane %v881, %v894
    %v896 = vcombine.high %v872, 0.0
    %v897 = vcombine.high %v879, 0.0
    %v898 = vcombine.high %v888, 0.0
    %v899 = vcombine.high %v895, 0.0
    %v900 = vcombine.low %v149, %v175
    %v901 = vcombine.high %v149, %v175
    %v903 = vunpack.c.l.s4 1983009808
    %v904 = vunpack.c.0.s8 %v903
    %v905 = vlaneseq
    %v906 = vshrl.u32 %v905, 7
    %v907 = vsub.s32 %v904, %v906
    %v908 = vrot.slane %v900, %v907
    %v910 = vunpack.c.l.s4 1983009808
    %v911 = vunpack.c.0.s8 %v910
    %v912 = vlaneseq
    %v913 = vshrl.u32 %v912, 7
    %v914 = vsub.s32 %v911, %v913
    %v915 = vrot.slane %v901, %v914
    %v916 = vcombine.low %v163, %v187
    %v917 = vcombine.high %v163, %v187
    %v919 = vunpack.c.l.s4 1983009808
    %v920 = vunpack.c.0.s8 %v919
    %v921 = vlaneseq
    %v922 = vshrl.u32 %v921, 7
    %v923 = vsub.s32 %v920, %v922
    %v924 = vrot.slane %v916, %v923
    %v926 = vunpack.c.l.s4 1983009808
    %v927 = vunpack.c.0.s8 %v926
    %v928 = vlaneseq
    %v929 = vshrl.u32 %v928, 7
    %v930 = vsub.s32 %v927, %v929
    %v931 = vrot.slane %v917, %v930
    %v932 = vcombine.low %v199, %v223
    %v933 = vcombine.high %v199, %v223
    %v935 = vunpack.c.l.s4 1983009808
    %v936 = vunpack.c.0.s8 %v935
    %v937 = vlaneseq
    %v938 = vshrl.u32 %v937, 7
    %v939 = vsub.s32 %v936, %v938
    %v940 = vrot.slane %v932, %v939
    %v942 = vunpack.c.l.s4 1983009808
    %v943 = vunpack.c.0.s8 %v942
    %v944 = vlaneseq
    %v945 = vshrl.u32 %v944, 7
    %v946 = vsub.s32 %v943, %v945
    %v947 = vrot.slane %v933, %v946
    %v948 = vcombine.low %v211, %v235
    %v949 = vcombine.high %v211, %v235
    %v951 = vunpack.c.l.s4 1983009808
    %v952 = vunpack.c.0.s8 %v951
    %v953 = vlaneseq
    %v954 = vshrl.u32 %v953, 7
    %v955 = vsub.s32 %v952, %v954
    %v956 = vrot.slane %v948, %v955
    %v958 = vunpack.c.l.s4 1983009808
    %v959 = vunpack.c.0.s8 %v958
    %v960 = vlaneseq
    %v961 = vshrl.u32 %v960, 7
    %v962 = vsub.s32 %v959, %v961
    %v963 = vrot.slane %v949, %v962
    %v964 = vcombine.low %v908, %v924
    %v965 = vcombine.high %v908, %v924
    %v967 = vunpack.c.l.s4 1934713408
    %v968 = vunpack.c.0.s8 %v967
    %v969 = vlaneseq
    %v970 = vshrl.u32 %v969, 7
    %v971 = vsub.s32 %v968, %v970
    %v972 = vrot.slane %v964, %v971
    %v974 = vunpack.c.l.s4 1934713408
    %v975 = vunpack.c.0.s8 %v974
    %v976 = vlaneseq
    %v977 = vshrl.u32 %v976, 7
    %v978 = vsub.s32 %v975, %v977
    %v979 = vrot.slane %v965, %v978
    %v980 = vcombine.low %v915, %v931
    %v981 = vcombine.high %v915, %v931
    %v983 = vunpack.c.l.s4 1934713408
    %v984 = vunpack.c.0.s8 %v983
    %v985 = vlaneseq
    %v986 = vshrl.u32 %v985, 7
    %v987 = vsub.s32 %v984, %v986
    %v988 = vrot.slane %v980, %v987
    %v990 = vunpack.c.l.s4 1934713408
    %v991 = vunpack.c.0.s8 %v990
    %v992 = vlaneseq
    %v993 = vshrl.u32 %v992, 7
    %v994 = vsub.s32 %v991, %v993
    %v995 = vrot.slane %v981, %v994
    %v996 = vcombine.low %v940, %v956
    %v997 = vcombine.high %v940, %v956
    %v999 = vunpack.c.l.s4 1934713408
    %v1000 = vunpack.c.0.s8 %v999
    %v1001 = vlaneseq
    %v1002 = vshrl.u32 %v1001, 7
    %v1003 = vsub.s32 %v1000, %v1002
    %v1004 = vrot.slane %v996, %v1003
    %v1006 = vunpack.c.l.s4 1934713408
    %v1007 = vunpack.c.0.s8 %v1006
    %v1008 = vlaneseq
    %v1009 = vshrl.u32 %v1008, 7
    %v1010 = vsub.s32 %v1007, %v1009
    %v1011 = vrot.slane %v997, %v1010
    %v1012 = vcombine.low %v947, %v963
    %v1013 = vcombine.high %v947, %v963
    %v1015 = vunpack.c.l.s4 1934713408
    %v1016 = vunpack.c.0.s8 %v1015
    %v1017 = vlaneseq
    %v1018 = vshrl.u32 %v1017, 7
    %v1019 = vsub.s32 %v1016, %v1018
    %v1020 = vrot.slane %v1012, %v1019
    %v1022 = vunpack.c.l.s4 1934713408
    %v1023 = vunpack.c.0.s8 %v1022
    %v1024 = vlaneseq
    %v1025 = vshrl.u32 %v1024, 7
    %v1026 = vsub.s32 %v1023, %v1025
    %v1027 = vrot.slane %v1013, %v1026
    %v1028 = vcombine.low %v972, %v1004
    %v1029 = vcombine.high %v972, %v1004
    %v1030 = vcombine.low %v979, %v1011
    %v1031 = vcombine.high %v979, %v1011
    %v1032 = vcombine.low %v988, %v1020
    %v1033 = vcombine.high %v988, %v1020
    %v1034 = vcombine.low %v995, %v1027
    %v1035 = vcombine.high %v995, %v1027
    %v1036 = vcombine.low %v247, %v271
    %v1037 = vcombine.high %v247, %v271
    %v1039 = vunpack.c.l.s4 1983009808
    %v1040 = vunpack.c.0.s8 %v1039
    %v1041 = vlaneseq
    %v1042 = vshrl.u32 %v1041, 7
    %v1043 = vsub.s32 %v1040, %v1042
    %v1044 = vrot.slane %v1036, %v1043
    %v1046 = vunpack.c.l.s4 1983009808
    %v1047 = vunpack.c.0.s8 %v1046
    %v1048 = vlaneseq
    %v1049 = vshrl.u32 %v1048, 7
    %v1050 = vsub.s32 %v1047, %v1049
    %v1051 = vrot.slane %v1037, %v1050
    %v1052 = vcombine.low %v259, %v283
    %v1053 = vcombine.high %v259, %v283
    %v1055 = vunpack.c.l.s4 1983009808
    %v1056 = vunpack.c.0.s8 %v1055
    %v1057 = vlaneseq
    %v1058 = vshrl.u32 %v1057, 7
    %v1059 = vsub.s32 %v1056, %v1058
    %v1060 = vrot.slane %v1052, %v1059
    %v1062 = vunpack.c.l.s4 1983009808
    %v1063 = vunpack.c.0.s8 %v1062
    %v1064 = vlaneseq
    %v1065 = vshrl.u32 %v1064, 7
    %v1066 = vsub.s32 %v1063, %v1065
    %v1067 = vrot.slane %v1053, %v1066
    %v1068 = vcombine.low %v1044, %v1060
    %v1069 = vcombine.high %v1044, %v1060
    %v1071 = vunpack.c.l.s4 1934713408
    %v1072 = vunpack.c.0.s8 %v1071
    %v1073 = vlaneseq
    %v1074 = vshrl.u32 %v1073, 7
    %v1075 = vsub.s32 %v1072, %v1074
    %v1076 = vrot.slane %v1068, %v1075
    %v1078 = vunpack.c.l.s4 1934713408
    %v1079 = vunpack.c.0.s8 %v1078
    %v1080 = vlaneseq
    %v1081 = vshrl.u32 %v1080, 7
    %v1082 = vsub.s32 %v1079, %v1081
    %v1083 = vrot.slane %v1069, %v1082
    %v1084 = vcombine.low %v1051, %v1067
    %v1085 = vcombine.high %v1051, %v1067
    %v1087 = vunpack.c.l.s4 1934713408
    %v1088 = vunpack.c.0.s8 %v1087
    %v1089 = vlaneseq
    %v1090 = vshrl.u32 %v1089, 7
    %v1091 = vsub.s32 %v1088, %v1090
    %v1092 = vrot.slane %v1084, %v1091
    %v1094 = vunpack.c.l.s4 1934713408
    %v1095 = vunpack.c.0.s8 %v1094
    %v1096 = vlaneseq
    %v1097 = vshrl.u32 %v1096, 7
    %v1098 = vsub.s32 %v1095, %v1097
    %v1099 = vrot.slane %v1085, %v1098
    %v1100 = vcombine.high %v1076, 0.0
    %v1101 = vcombine.high %v1083, 0.0
    %v1102 = vcombine.high %v1092, 0.0
    %v1103 = vcombine.high %v1099, 0.0
    %v1104 = vcombine.low %v416, %v418
    %v1105 = vcombine.high %v416, %v418
    %v1107 = vunpack.c.l.s4 1983009808
    %v1108 = vunpack.c.0.s8 %v1107
    %v1109 = vlaneseq
    %v1110 = vshrl.u32 %v1109, 7
    %v1111 = vsub.s32 %v1108, %v1110
    %v1112 = vrot.slane %v1104, %v1111
    %v1114 = vunpack.c.l.s4 1983009808
    %v1115 = vunpack.c.0.s8 %v1114
    %v1116 = vlaneseq
    %v1117 = vshrl.u32 %v1116, 7
    %v1118 = vsub.s32 %v1115, %v1117
    %v1119 = vrot.slane %v1105, %v1118
    %v1120 = vcombine.low %v417, %v419
    %v1121 = vcombine.high %v417, %v419
    %v1123 = vunpack.c.l.s4 1983009808
    %v1124 = vunpack.c.0.s8 %v1123
    %v1125 = vlaneseq
    %v1126 = vshrl.u32 %v1125, 7
    %v1127 = vsub.s32 %v1124, %v1126
    %v1128 = vrot.slane %v1120, %v1127
    %v1130 = vunpack.c.l.s4 1983009808
    %v1131 = vunpack.c.0.s8 %v1130
    %v1132 = vlaneseq
    %v1133 = vshrl.u32 %v1132, 7
    %v1134 = vsub.s32 %v1131, %v1133
    %v1135 = vrot.slane %v1121, %v1134
    %v1136 = vcombine.low %v420, %v422
    %v1137 = vcombine.high %v420, %v422
    %v1139 = vunpack.c.l.s4 1983009808
    %v1140 = vunpack.c.0.s8 %v1139
    %v1141 = vlaneseq
    %v1142 = vshrl.u32 %v1141, 7
    %v1143 = vsub.s32 %v1140, %v1142
    %v1144 = vrot.slane %v1136, %v1143
    %v1146 = vunpack.c.l.s4 1983009808
    %v1147 = vunpack.c.0.s8 %v1146
    %v1148 = vlaneseq
    %v1149 = vshrl.u32 %v1148, 7
    %v1150 = vsub.s32 %v1147, %v1149
    %v1151 = vrot.slane %v1137, %v1150
    %v1152 = vcombine.low %v421, %v423
    %v1153 = vcombine.high %v421, %v423
    %v1155 = vunpack.c.l.s4 1983009808
    %v1156 = vunpack.c.0.s8 %v1155
    %v1157 = vlaneseq
    %v1158 = vshrl.u32 %v1157, 7
    %v1159 = vsub.s32 %v1156, %v1158
    %v1160 = vrot.slane %v1152, %v1159
    %v1162 = vunpack.c.l.s4 1983009808
    %v1163 = vunpack.c.0.s8 %v1162
    %v1164 = vlaneseq
    %v1165 = vshrl.u32 %v1164, 7
    %v1166 = vsub.s32 %v1163, %v1165
    %v1167 = vrot.slane %v1153, %v1166
    %v1168 = vcombine.low %v1112, %v1128
    %v1169 = vcombine.high %v1112, %v1128
    %v1171 = vunpack.c.l.s4 1934713408
    %v1172 = vunpack.c.0.s8 %v1171
    %v1173 = vlaneseq
    %v1174 = vshrl.u32 %v1173, 7
    %v1175 = vsub.s32 %v1172, %v1174
    %v1176 = vrot.slane %v1168, %v1175
    %v1178 = vunpack.c.l.s4 1934713408
    %v1179 = vunpack.c.0.s8 %v1178
    %v1180 = vlaneseq
    %v1181 = vshrl.u32 %v1180, 7
    %v1182 = vsub.s32 %v1179, %v1181
    %v1183 = vrot.slane %v1169, %v1182
    %v1184 = vcombine.low %v1119, %v1135
    %v1185 = vcombine.high %v1119, %v1135
    %v1187 = vunpack.c.l.s4 1934713408
    %v1188 = vunpack.c.0.s8 %v1187
    %v1189 = vlaneseq
    %v1190 = vshrl.u32 %v1189, 7
    %v1191 = vsub.s32 %v1188, %v1190
    %v1192 = vrot.slane %v1184, %v1191
    %v1194 = vunpack.c.l.s4 1934713408
    %v1195 = vunpack.c.0.s8 %v1194
    %v1196 = vlaneseq
    %v1197 = vshrl.u32 %v1196, 7
    %v1198 = vsub.s32 %v1195, %v1197
    %v1199 = vrot.slane %v1185, %v1198
    %v1200 = vcombine.low %v1144, %v1160
    %v1201 = vcombine.high %v1144, %v1160
    %v1203 = vunpack.c.l.s4 1934713408
    %v1204 = vunpack.c.0.s8 %v1203
    %v1205 = vlaneseq
    %v1206 = vshrl.u32 %v1205, 7
    %v1207 = vsub.s32 %v1204, %v1206
    %v1208 = vrot.slane %v1200, %v1207
    %v1210 = vunpack.c.l.s4 1934713408
    %v1211 = vunpack.c.0.s8 %v1210
    %v1212 = vlaneseq
    %v1213 = vshrl.u32 %v1212, 7
    %v1214 = vsub.s32 %v1211, %v1213
    %v1215 = vrot.slane %v1201, %v1214
    %v1216 = vcombine.low %v1151, %v1167
    %v1217 = vcombine.high %v1151, %v1167
    %v1219 = vunpack.c.l.s4 1934713408
    %v1220 = vunpack.c.0.s8 %v1219
    %v1221 = vlaneseq
    %v1222 = vshrl.u32 %v1221, 7
    %v1223 = vsub.s32 %v1220, %v1222
    %v1224 = vrot.slane %v1216, %v1223
    %v1226 = vunpack.c.l.s4 1934713408
    %v1227 = vunpack.c.0.s8 %v1226
    %v1228 = vlaneseq
    %v1229 = vshrl.u32 %v1228, 7
    %v1230 = vsub.s32 %v1227, %v1229
    %v1231 = vrot.slane %v1217, %v1230
    %v1232 = vcombine.low %v1176, %v1208
    %v1233 = vcombine.high %v1176, %v1208
    %v1234 = vcombine.low %v1183, %v1215
    %v1235 = vcombine.high %v1183, %v1215
    %v1236 = vcombine.low %v1192, %v1224
    %v1237 = vcombine.high %v1192, %v1224
    %v1238 = vcombine.low %v1199, %v1231
    %v1239 = vcombine.high %v1199, %v1231
    %v1240 = vcombine.low %v620, %v622
    %v1241 = vcombine.high %v620, %v622
    %v1243 = vunpack.c.l.s4 1983009808
    %v1244 = vunpack.c.0.s8 %v1243
    %v1245 = vlaneseq
    %v1246 = vshrl.u32 %v1245, 7
    %v1247 = vsub.s32 %v1244, %v1246
    %v1248 = vrot.slane %v1240, %v1247
    %v1250 = vunpack.c.l.s4 1983009808
    %v1251 = vunpack.c.0.s8 %v1250
    %v1252 = vlaneseq
    %v1253 = vshrl.u32 %v1252, 7
    %v1254 = vsub.s32 %v1251, %v1253
    %v1255 = vrot.slane %v1241, %v1254
    %v1256 = vcombine.low %v621, %v623
    %v1257 = vcombine.high %v621, %v623
    %v1259 = vunpack.c.l.s4 1983009808
    %v1260 = vunpack.c.0.s8 %v1259
    %v1261 = vlaneseq
    %v1262 = vshrl.u32 %v1261, 7
    %v1263 = vsub.s32 %v1260, %v1262
    %v1264 = vrot.slane %v1256, %v1263
    %v1266 = vunpack.c.l.s4 1983009808
    %v1267 = vunpack.c.0.s8 %v1266
    %v1268 = vlaneseq
    %v1269 = vshrl.u32 %v1268, 7
    %v1270 = vsub.s32 %v1267, %v1269
    %v1271 = vrot.slane %v1257, %v1270
    %v1272 = vcombine.low %v624, %v626
    %v1273 = vcombine.high %v624, %v626
    %v1275 = vunpack.c.l.s4 1983009808
    %v1276 = vunpack.c.0.s8 %v1275
    %v1277 = vlaneseq
    %v1278 = vshrl.u32 %v1277, 7
    %v1279 = vsub.s32 %v1276, %v1278
    %v1280 = vrot.slane %v1272, %v1279
    %v1282 = vunpack.c.l.s4 1983009808
    %v1283 = vunpack.c.0.s8 %v1282
    %v1284 = vlaneseq
    %v1285 = vshrl.u32 %v1284, 7
    %v1286 = vsub.s32 %v1283, %v1285
    %v1287 = vrot.slane %v1273, %v1286
    %v1288 = vcombine.low %v625, %v627
    %v1289 = vcombine.high %v625, %v627
    %v1291 = vunpack.c.l.s4 1983009808
    %v1292 = vunpack.c.0.s8 %v1291
    %v1293 = vlaneseq
    %v1294 = vshrl.u32 %v1293, 7
    %v1295 = vsub.s32 %v1292, %v1294
    %v1296 = vrot.slane %v1288, %v1295
    %v1298 = vunpack.c.l.s4 1983009808
    %v1299 = vunpack.c.0.s8 %v1298
    %v1300 = vlaneseq
    %v1301 = vshrl.u32 %v1300, 7
    %v1302 = vsub.s32 %v1299, %v1301
    %v1303 = vrot.slane %v1289, %v1302
    %v1304 = vcombine.low %v1248, %v1264
    %v1305 = vcombine.high %v1248, %v1264
    %v1307 = vunpack.c.l.s4 1934713408
    %v1308 = vunpack.c.0.s8 %v1307
    %v1309 = vlaneseq
    %v1310 = vshrl.u32 %v1309, 7
    %v1311 = vsub.s32 %v1308, %v1310
    %v1312 = vrot.slane %v1304, %v1311
    %v1314 = vunpack.c.l.s4 1934713408
    %v1315 = vunpack.c.0.s8 %v1314
    %v1316 = vlaneseq
    %v1317 = vshrl.u32 %v1316, 7
    %v1318 = vsub.s32 %v1315, %v1317
    %v1319 = vrot.slane %v1305, %v1318
    %v1320 = vcombine.low %v1255, %v1271
    %v1321 = vcombine.high %v1255, %v1271
    %v1323 = vunpack.c.l.s4 1934713408
    %v1324 = vunpack.c.0.s8 %v1323
    %v1325 = vlaneseq
    %v1326 = vshrl.u32 %v1325, 7
    %v1327 = vsub.s32 %v1324, %v1326
    %v1328 = vrot.slane %v1320, %v1327
    %v1330 = vunpack.c.l.s4 1934713408
    %v1331 = vunpack.c.0.s8 %v1330
    %v1332 = vlaneseq
    %v1333 = vshrl.u32 %v1332, 7
    %v1334 = vsub.s32 %v1331, %v1333
    %v1335 = vrot.slane %v1321, %v1334
    %v1336 = vcombine.low %v1280, %v1296
    %v1337 = vcombine.high %v1280, %v1296
    %v1339 = vunpack.c.l.s4 1934713408
    %v1340 = vunpack.c.0.s8 %v1339
    %v1341 = vlaneseq
    %v1342 = vshrl.u32 %v1341, 7
    %v1343 = vsub.s32 %v1340, %v1342
    %v1344 = vrot.slane %v1336, %v1343
    %v1346 = vunpack.c.l.s4 1934713408
    %v1347 = vunpack.c.0.s8 %v1346
    %v1348 = vlaneseq
    %v1349 = vshrl.u32 %v1348, 7
    %v1350 = vsub.s32 %v1347, %v1349
    %v1351 = vrot.slane %v1337, %v1350
    %v1352 = vcombine.low %v1287, %v1303
    %v1353 = vcombine.high %v1287, %v1303
    %v1355 = vunpack.c.l.s4 1934713408
    %v1356 = vunpack.c.0.s8 %v1355
    %v1357 = vlaneseq
    %v1358 = vshrl.u32 %v1357, 7
    %v1359 = vsub.s32 %v1356, %v1358
    %v1360 = vrot.slane %v1352, %v1359
    %v1362 = vunpack.c.l.s4 1934713408
    %v1363 = vunpack.c.0.s8 %v1362
    %v1364 = vlaneseq
    %v1365 = vshrl.u32 %v1364, 7
    %v1366 = vsub.s32 %v1363, %v1365
    %v1367 = vrot.slane %v1353, %v1366
    %v1368 = vcombine.low %v1312, %v1344
    %v1369 = vcombine.high %v1312, %v1344
    %v1370 = vcombine.low %v1319, %v1351
    %v1371 = vcombine.high %v1319, %v1351
    %v1372 = vcombine.low %v1328, %v1360
    %v1373 = vcombine.high %v1328, %v1360
    %v1374 = vcombine.low %v1335, %v1367
    %v1375 = vcombine.high %v1335, %v1367
    %v1376 = vcombine.low %v824, %v826
    %v1377 = vcombine.high %v824, %v826
    %v1379 = vunpack.c.l.s4 1983009808
    %v1380 = vunpack.c.0.s8 %v1379
    %v1381 = vlaneseq
    %v1382 = vshrl.u32 %v1381, 7
    %v1383 = vsub.s32 %v1380, %v1382
    %v1384 = vrot.slane %v1376, %v1383
    %v1386 = vunpack.c.l.s4 1983009808
    %v1387 = vunpack.c.0.s8 %v1386
    %v1388 = vlaneseq
    %v1389 = vshrl.u32 %v1388, 7
    %v1390 = vsub.s32 %v1387, %v1389
    %v1391 = vrot.slane %v1377, %v1390
    %v1392 = vcombine.low %v825, %v827
    %v1393 = vcombine.high %v825, %v827
    %v1395 = vunpack.c.l.s4 1983009808
    %v1396 = vunpack.c.0.s8 %v1395
    %v1397 = vlaneseq
    %v1398 = vshrl.u32 %v1397, 7
    %v1399 = vsub.s32 %v1396, %v1398
    %v1400 = vrot.slane %v1392, %v1399
    %v1402 = vunpack.c.l.s4 1983009808
    %v1403 = vunpack.c.0.s8 %v1402
    %v1404 = vlaneseq
    %v1405 = vshrl.u32 %v1404, 7
    %v1406 = vsub.s32 %v1403, %v1405
    %v1407 = vrot.slane %v1393, %v1406
    %v1408 = vcombine.low %v828, %v830
    %v1409 = vcombine.high %v828, %v830
    %v1411 = vunpack.c.l.s4 1983009808
    %v1412 = vunpack.c.0.s8 %v1411
    %v1413 = vlaneseq
    %v1414 = vshrl.u32 %v1413, 7
    %v1415 = vsub.s32 %v1412, %v1414
    %v1416 = vrot.slane %v1408, %v1415
    %v1418 = vunpack.c.l.s4 1983009808
    %v1419 = vunpack.c.0.s8 %v1418
    %v1420 = vlaneseq
    %v1421 = vshrl.u32 %v1420, 7
    %v1422 = vsub.s32 %v1419, %v1421
    %v1423 = vrot.slane %v1409, %v1422
    %v1424 = vcombine.low %v829, %v831
    %v1425 = vcombine.high %v829, %v831
    %v1427 = vunpack.c.l.s4 1983009808
    %v1428 = vunpack.c.0.s8 %v1427
    %v1429 = vlaneseq
    %v1430 = vshrl.u32 %v1429, 7
    %v1431 = vsub.s32 %v1428, %v1430
    %v1432 = vrot.slane %v1424, %v1431
    %v1434 = vunpack.c.l.s4 1983009808
    %v1435 = vunpack.c.0.s8 %v1434
    %v1436 = vlaneseq
    %v1437 = vshrl.u32 %v1436, 7
    %v1438 = vsub.s32 %v1435, %v1437
    %v1439 = vrot.slane %v1425, %v1438
    %v1440 = vcombine.low %v1384, %v1400
    %v1441 = vcombine.high %v1384, %v1400
    %v1443 = vunpack.c.l.s4 1934713408
    %v1444 = vunpack.c.0.s8 %v1443
    %v1445 = vlaneseq
    %v1446 = vshrl.u32 %v1445, 7
    %v1447 = vsub.s32 %v1444, %v1446
    %v1448 = vrot.slane %v1440, %v1447
    %v1450 = vunpack.c.l.s4 1934713408
    %v1451 = vunpack.c.0.s8 %v1450
    %v1452 = vlaneseq
    %v1453 = vshrl.u32 %v1452, 7
    %v1454 = vsub.s32 %v1451, %v1453
    %v1455 = vrot.slane %v1441, %v1454
    %v1456 = vcombine.low %v1391, %v1407
    %v1457 = vcombine.high %v1391, %v1407
    %v1459 = vunpack.c.l.s4 1934713408
    %v1460 = vunpack.c.0.s8 %v1459
    %v1461 = vlaneseq
    %v1462 = vshrl.u32 %v1461, 7
    %v1463 = vsub.s32 %v1460, %v1462
    %v1464 = vrot.slane %v1456, %v1463
    %v1466 = vunpack.c.l.s4 1934713408
    %v1467 = vunpack.c.0.s8 %v1466
    %v1468 = vlaneseq
    %v1469 = vshrl.u32 %v1468, 7
    %v1470 = vsub.s32 %v1467, %v1469
    %v1471 = vrot.slane %v1457, %v1470
    %v1472 = vcombine.low %v1416, %v1432
    %v1473 = vcombine.high %v1416, %v1432
    %v1475 = vunpack.c.l.s4 1934713408
    %v1476 = vunpack.c.0.s8 %v1475
    %v1477 = vlaneseq
    %v1478 = vshrl.u32 %v1477, 7
    %v1479 = vsub.s32 %v1476, %v1478
    %v1480 = vrot.slane %v1472, %v1479
    %v1482 = vunpack.c.l.s4 1934713408
    %v1483 = vunpack.c.0.s8 %v1482
    %v1484 = vlaneseq
    %v1485 = vshrl.u32 %v1484, 7
    %v1486 = vsub.s32 %v1483, %v1485
    %v1487 = vrot.slane %v1473, %v1486
    %v1488 = vcombine.low %v1423, %v1439
    %v1489 = vcombine.high %v1423, %v1439
    %v1491 = vunpack.c.l.s4 1934713408
    %v1492 = vunpack.c.0.s8 %v1491
    %v1493 = vlaneseq
    %v1494 = vshrl.u32 %v1493, 7
    %v1495 = vsub.s32 %v1492, %v1494
    %v1496 = vrot.slane %v1488, %v1495
    %v1498 = vunpack.c.l.s4 1934713408
    %v1499 = vunpack.c.0.s8 %v1498
    %v1500 = vlaneseq
    %v1501 = vshrl.u32 %v1500, 7
    %v1502 = vsub.s32 %v1499, %v1501
    %v1503 = vrot.slane %v1489, %v1502
    %v1504 = vcombine.low %v1448, %v1480
    %v1505 = vcombine.high %v1448, %v1480
    %v1506 = vcombine.low %v1455, %v1487
    %v1507 = vcombine.high %v1455, %v1487
    %v1508 = vcombine.low %v1464, %v1496
    %v1509 = vcombine.high %v1464, %v1496
    %v1510 = vcombine.low %v1471, %v1503
    %v1511 = vcombine.high %v1471, %v1503
    %v1512 = vcombine.low %v1028, %v1030
    %v1513 = vcombine.high %v1028, %v1030
    %v1515 = vunpack.c.l.s4 1983009808
    %v1516 = vunpack.c.0.s8 %v1515
    %v1517 = vlaneseq
    %v1518 = vshrl.u32 %v1517, 7
    %v1519 = vsub.s32 %v1516, %v1518
    %v1520 = vrot.slane %v1512, %v1519
    %v1522 = vunpack.c.l.s4 1983009808
    %v1523 = vunpack.c.0.s8 %v1522
    %v1524 = vlaneseq
    %v1525 = vshrl.u32 %v1524, 7
    %v1526 = vsub.s32 %v1523, %v1525
    %v1527 = vrot.slane %v1513, %v1526
    %v1528 = vcombine.low %v1029, %v1031
    %v1529 = vcombine.high %v1029, %v1031
    %v1531 = vunpack.c.l.s4 1983009808
    %v1532 = vunpack.c.0.s8 %v1531
    %v1533 = vlaneseq
    %v1534 = vshrl.u32 %v1533, 7
    %v1535 = vsub.s32 %v1532, %v1534
    %v1536 = vrot.slane %v1528, %v1535
    %v1538 = vunpack.c.l.s4 1983009808
    %v1539 = vunpack.c.0.s8 %v1538
    %v1540 = vlaneseq
    %v1541 = vshrl.u32 %v1540, 7
    %v1542 = vsub.s32 %v1539, %v1541
    %v1543 = vrot.slane %v1529, %v1542
    %v1544 = vcombine.low %v1032, %v1034
    %v1545 = vcombine.high %v1032, %v1034
    %v1547 = vunpack.c.l.s4 1983009808
    %v1548 = vunpack.c.0.s8 %v1547
    %v1549 = vlaneseq
    %v1550 = vshrl.u32 %v1549, 7
    %v1551 = vsub.s32 %v1548, %v1550
    %v1552 = vrot.slane %v1544, %v1551
    %v1554 = vunpack.c.l.s4 1983009808
    %v1555 = vunpack.c.0.s8 %v1554
    %v1556 = vlaneseq
    %v1557 = vshrl.u32 %v1556, 7
    %v1558 = vsub.s32 %v1555, %v1557
    %v1559 = vrot.slane %v1545, %v1558
    %v1560 = vcombine.low %v1033, %v1035
    %v1561 = vcombine.high %v1033, %v1035
    %v1563 = vunpack.c.l.s4 1983009808
    %v1564 = vunpack.c.0.s8 %v1563
    %v1565 = vlaneseq
    %v1566 = vshrl.u32 %v1565, 7
    %v1567 = vsub.s32 %v1564, %v1566
    %v1568 = vrot.slane %v1560, %v1567
    %v1570 = vunpack.c.l.s4 1983009808
    %v1571 = vunpack.c.0.s8 %v1570
    %v1572 = vlaneseq
    %v1573 = vshrl.u32 %v1572, 7
    %v1574 = vsub.s32 %v1571, %v1573
    %v1575 = vrot.slane %v1561, %v1574
    %v1576 = vcombine.low %v1520, %v1536
    %v1577 = vcombine.high %v1520, %v1536
    %v1579 = vunpack.c.l.s4 1934713408
    %v1580 = vunpack.c.0.s8 %v1579
    %v1581 = vlaneseq
    %v1582 = vshrl.u32 %v1581, 7
    %v1583 = vsub.s32 %v1580, %v1582
    %v1584 = vrot.slane %v1576, %v1583
    %v1586 = vunpack.c.l.s4 1934713408
    %v1587 = vunpack.c.0.s8 %v1586
    %v1588 = vlaneseq
    %v1589 = vshrl.u32 %v1588, 7
    %v1590 = vsub.s32 %v1587, %v1589
    %v1591 = vrot.slane %v1577, %v1590
    %v1592 = vcombine.low %v1527, %v1543
    %v1593 = vcombine.high %v1527, %v1543
    %v1595 = vunpack.c.l.s4 1934713408
    %v1596 = vunpack.c.0.s8 %v1595
    %v1597 = vlaneseq
    %v1598 = vshrl.u32 %v1597, 7
    %v1599 = vsub.s32 %v1596, %v1598
    %v1600 = vrot.slane %v1592, %v1599
    %v1602 = vunpack.c.l.s4 1934713408
    %v1603 = vunpack.c.0.s8 %v1602
    %v1604 = vlaneseq
    %v1605 = vshrl.u32 %v1604, 7
    %v1606 = vsub.s32 %v1603, %v1605
    %v1607 = vrot.slane %v1593, %v1606
    %v1608 = vcombine.low %v1552, %v1568
    %v1609 = vcombine.high %v1552, %v1568
    %v1611 = vunpack.c.l.s4 1934713408
    %v1612 = vunpack.c.0.s8 %v1611
    %v1613 = vlaneseq
    %v1614 = vshrl.u32 %v1613, 7
    %v1615 = vsub.s32 %v1612, %v1614
    %v1616 = vrot.slane %v1608, %v1615
    %v1618 = vunpack.c.l.s4 1934713408
    %v1619 = vunpack.c.0.s8 %v1618
    %v1620 = vlaneseq
    %v1621 = vshrl.u32 %v1620, 7
    %v1622 = vsub.s32 %v1619, %v1621
    %v1623 = vrot.slane %v1609, %v1622
    %v1624 = vcombine.low %v1559, %v1575
    %v1625 = vcombine.high %v1559, %v1575
    %v1627 = vunpack.c.l.s4 1934713408
    %v1628 = vunpack.c.0.s8 %v1627
    %v1629 = vlaneseq
    %v1630 = vshrl.u32 %v1629, 7
    %v1631 = vsub.s32 %v1628, %v1630
    %v1632 = vrot.slane %v1624, %v1631
    %v1634 = vunpack.c.l.s4 1934713408
    %v1635 = vunpack.c.0.s8 %v1634
    %v1636 = vlaneseq
    %v1637 = vshrl.u32 %v1636, 7
    %v1638 = vsub.s32 %v1635, %v1637
    %v1639 = vrot.slane %v1625, %v1638
    %v1640 = vcombine.low %v1584, %v1616
    %v1641 = vcombine.high %v1584, %v1616
    %v1642 = vcombine.low %v1591, %v1623
    %v1643 = vcombine.high %v1591, %v1623
    %v1644 = vcombine.low %v1600, %v1632
    %v1645 = vcombine.high %v1600, %v1632
    %v1646 = vcombine.low %v1607, %v1639
    %v1647 = vcombine.high %v1607, %v1639
    %v1648 = vcombine.low %v464, %v471
    %v1650 = vunpack.c.l.s4 1983009808
    %v1651 = vunpack.c.0.s8 %v1650
    %v1652 = vlaneseq
    %v1653 = vshrl.u32 %v1652, 7
    %v1654 = vsub.s32 %v1651, %v1653
    %v1655 = vrot.slane %v1648, %v1654
    %v1656 = vcombine.low %v488, %v489
    %v1658 = vunpack.c.l.s4 1983009808
    %v1659 = vunpack.c.0.s8 %v1658
    %v1660 = vlaneseq
    %v1661 = vshrl.u32 %v1660, 7
    %v1662 = vsub.s32 %v1659, %v1661
    %v1663 = vrot.slane %v1656, %v1662
    %v1664 = vcombine.low %v480, %v487
    %v1666 = vunpack.c.l.s4 1983009808
    %v1667 = vunpack.c.0.s8 %v1666
    %v1668 = vlaneseq
    %v1669 = vshrl.u32 %v1668, 7
    %v1670 = vsub.s32 %v1667, %v1669
    %v1671 = vrot.slane %v1664, %v1670
    %v1672 = vcombine.low %v490, %v491
    %v1674 = vunpack.c.l.s4 1983009808
    %v1675 = vunpack.c.0.s8 %v1674
    %v1676 = vlaneseq
    %v1677 = vshrl.u32 %v1676, 7
    %v1678 = vsub.s32 %v1675, %v1677
    %v1679 = vrot.slane %v1672, %v1678
    %v1680 = vcombine.low %v1655, %v1663
    %v1681 = vcombine.high %v1655, %v1663
    %v1683 = vunpack.c.l.s4 1934713408
    %v1684 = vunpack.c.0.s8 %v1683
    %v1685 = vlaneseq
    %v1686 = vshrl.u32 %v1685, 7
    %v1687 = vsub.s32 %v1684, %v1686
    %v1688 = vrot.slane %v1680, %v1687
    %v1690 = vunpack.c.l.s4 1934713408
    %v1691 = vunpack.c.0.s8 %v1690
    %v1692 = vlaneseq
    %v1693 = vshrl.u32 %v1692, 7
    %v1694 = vsub.s32 %v1691, %v1693
    %v1695 = vrot.slane %v1681, %v1694
    %v1696 = vcombine.low %v1671, %v1679
    %v1697 = vcombine.high %v1671, %v1679
    %v1699 = vunpack.c.l.s4 1934713408
    %v1700 = vunpack.c.0.s8 %v1699
    %v1701 = vlaneseq
    %v1702 = vshrl.u32 %v1701, 7
    %v1703 = vsub.s32 %v1700, %v1702
    %v1704 = vrot.slane %v1696, %v1703
    %v1706 = vunpack.c.l.s4 1934713408
    %v1707 = vunpack.c.0.s8 %v1706
    %v1708 = vlaneseq
    %v1709 = vshrl.u32 %v1708, 7
    %v1710 = vsub.s32 %v1707, %v1709
    %v1711 = vrot.slane %v1697, %v1710
    %v1712 = vcombine.low %v1688, %v1704
    %v1713 = vcombine.high %v1688, %v1704
    %v1714 = vcombine.low %v1695, %v1711
    %v1715 = vcombine.high %v1695, %v1711
    %v1716 = vcombine.low %v668, %v675
    %v1718 = vunpack.c.l.s4 1983009808
    %v1719 = vunpack.c.0.s8 %v1718
    %v1720 = vlaneseq
    %v1721 = vshrl.u32 %v1720, 7
    %v1722 = vsub.s32 %v1719, %v1721
    %v1723 = vrot.slane %v1716, %v1722
    %v1724 = vcombine.low %v692, %v693
    %v1726 = vunpack.c.l.s4 1983009808
    %v1727 = vunpack.c.0.s8 %v1726
    %v1728 = vlaneseq
    %v1729 = vshrl.u32 %v1728, 7
    %v1730 = vsub.s32 %v1727, %v1729
    %v1731 = vrot.slane %v1724, %v1730
    %v1732 = vcombine.low %v684, %v691
    %v1734 = vunpack.c.l.s4 1983009808
    %v1735 = vunpack.c.0.s8 %v1734
    %v1736 = vlaneseq
    %v1737 = vshrl.u32 %v1736, 7
    %v1738 = vsub.s32 %v1735, %v1737
    %v1739 = vrot.slane %v1732, %v1738
    %v1740 = vcombine.low %v694, %v695
    %v1742 = vunpack.c.l.s4 1983009808
    %v1743 = vunpack.c.0.s8 %v1742
    %v1744 = vlaneseq
    %v1745 = vshrl.u32 %v1744, 7
    %v1746 = vsub.s32 %v1743, %v1745
    %v1747 = vrot.slane %v1740, %v1746
    %v1748 = vcombine.low %v1723, %v1731
    %v1749 = vcombine.high %v1723, %v1731
    %v1751 = vunpack.c.l.s4 1934713408
    %v1752 = vunpack.c.0.s8 %v1751
    %v1753 = vlaneseq
    %v1754 = vshrl.u32 %v1753, 7
    %v1755 = vsub.s32 %v1752, %v1754
    %v1756 = vrot.slane %v1748, %v1755
    %v1758 = vunpack.c.l.s4 1934713408
    %v1759 = vunpack.c.0.s8 %v1758
    %v1760 = vlaneseq
    %v1761 = vshrl.u32 %v1760, 7
    %v1762 = vsub.s32 %v1759, %v1761
    %v1763 = vrot.slane %v1749, %v1762
    %v1764 = vcombine.low %v1739, %v1747
    %v1765 = vcombine.high %v1739, %v1747
    %v1767 = vunpack.c.l.s4 1934713408
    %v1768 = vunpack.c.0.s8 %v1767
    %v1769 = vlaneseq
    %v1770 = vshrl.u32 %v1769, 7
    %v1771 = vsub.s32 %v1768, %v1770
    %v1772 = vrot.slane %v1764, %v1771
    %v1774 = vunpack.c.l.s4 1934713408
    %v1775 = vunpack.c.0.s8 %v1774
    %v1776 = vlaneseq
    %v1777 = vshrl.u32 %v1776, 7
    %v1778 = vsub.s32 %v1775, %v1777
    %v1779 = vrot.slane %v1765, %v1778
    %v1780 = vcombine.low %v1756, %v1772
    %v1781 = vcombine.high %v1756, %v1772
    %v1782 = vcombine.low %v1763, %v1779
    %v1783 = vcombine.high %v1763, %v1779
    %v1784 = vcombine.low %v872, %v879
    %v1786 = vunpack.c.l.s4 1983009808
    %v1787 = vunpack.c.0.s8 %v1786
    %v1788 = vlaneseq
    %v1789 = vshrl.u32 %v1788, 7
    %v1790 = vsub.s32 %v1787, %v1789
    %v1791 = vrot.slane %v1784, %v1790
    %v1792 = vcombine.low %v896, %v897
    %v1794 = vunpack.c.l.s4 1983009808
    %v1795 = vunpack.c.0.s8 %v1794
    %v1796 = vlaneseq
    %v1797 = vshrl.u32 %v1796, 7
    %v1798 = vsub.s32 %v1795, %v1797
    %v1799 = vrot.slane %v1792, %v1798
    %v1800 = vcombine.low %v888, %v895
    %v1802 = vunpack.c.l.s4 1983009808
    %v1803 = vunpack.c.0.s8 %v1802
    %v1804 = vlaneseq
    %v1805 = vshrl.u32 %v1804, 7
    %v1806 = vsub.s32 %v1803, %v1805
    %v1807 = vrot.slane %v1800, %v1806
    %v1808 = vcombine.low %v898, %v899
    %v1810 = vunpack.c.l.s4 1983009808
    %v1811 = vunpack.c.0.s8 %v1810
    %v1812 = vlaneseq
    %v1813 = vshrl.u32 %v1812, 7
    %v1814 = vsub.s32 %v1811, %v1813
    %v1815 = vrot.slane %v1808, %v1814
    %v1816 = vcombine.low %v1791, %v1799
    %v1817 = vcombine.high %v1791, %v1799
    %v1819 = vunpack.c.l.s4 1934713408
    %v1820 = vunpack.c.0.s8 %v1819
    %v1821 = vlaneseq
    %v1822 = vshrl.u32 %v1821, 7
    %v1823 = vsub.s32 %v1820, %v1822
    %v1824 = vrot.slane %v1816, %v1823
    %v1826 = vunpack.c.l.s4 1934713408
    %v1827 = vunpack.c.0.s8 %v1826
    %v1828 = vlaneseq
    %v1829 = vshrl.u32 %v1828, 7
    %v1830 = vsub.s32 %v1827, %v1829
    %v1831 = vrot.slane %v1817, %v1830
    %v1832 = vcombine.low %v1807, %v1815
    %v1833 = vcombine.high %v1807, %v1815
    %v1835 = vunpack.c.l.s4 1934713408
    %v1836 = vunpack.c.0.s8 %v1835
    %v1837 = vlaneseq
    %v1838 = vshrl.u32 %v1837, 7
    %v1839 = vsub.s32 %v1836, %v1838
    %v1840 = vrot.slane %v1832, %v1839
    %v1842 = vunpack.c.l.s4 1934713408
    %v1843 = vunpack.c.0.s8 %v1842
    %v1844 = vlaneseq
    %v1845 = vshrl.u32 %v1844, 7
    %v1846 = vsub.s32 %v1843, %v1845
    %v1847 = vrot.slane %v1833, %v1846
    %v1848 = vcombine.low %v1824, %v1840
    %v1849 = vcombine.high %v1824, %v1840
    %v1850 = vcombine.low %v1831, %v1847
    %v1851 = vcombine.high %v1831, %v1847
    %v1852 = vcombine.low %v1076, %v1083
    %v1854 = vunpack.c.l.s4 1983009808
    %v1855 = vunpack.c.0.s8 %v1854
    %v1856 = vlaneseq
    %v1857 = vshrl.u32 %v1856, 7
    %v1858 = vsub.s32 %v1855, %v1857
    %v1859 = vrot.slane %v1852, %v1858
    %v1860 = vcombine.low %v1100, %v1101
    %v1862 = vunpack.c.l.s4 1983009808
    %v1863 = vunpack.c.0.s8 %v1862
    %v1864 = vlaneseq
    %v1865 = vshrl.u32 %v1864, 7
    %v1866 = vsub.s32 %v1863, %v1865
    %v1867 = vrot.slane %v1860, %v1866
    %v1868 = vcombine.low %v1092, %v1099
    %v1870 = vunpack.c.l.s4 1983009808
    %v1871 = vunpack.c.0.s8 %v1870
    %v1872 = vlaneseq
    %v1873 = vshrl.u32 %v1872, 7
    %v1874 = vsub.s32 %v1871, %v1873
    %v1875 = vrot.slane %v1868, %v1874
    %v1876 = vcombine.low %v1102, %v1103
    %v1878 = vunpack.c.l.s4 1983009808
    %v1879 = vunpack.c.0.s8 %v1878
    %v1880 = vlaneseq
    %v1881 = vshrl.u32 %v1880, 7
    %v1882 = vsub.s32 %v1879, %v1881
    %v1883 = vrot.slane %v1876, %v1882
    %v1884 = vcombine.low %v1859, %v1867
    %v1885 = vcombine.high %v1859, %v1867
    %v1887 = vunpack.c.l.s4 1934713408
    %v1888 = vunpack.c.0.s8 %v1887
    %v1889 = vlaneseq
    %v1890 = vshrl.u32 %v1889, 7
    %v1891 = vsub.s32 %v1888, %v1890
    %v1892 = vrot.slane %v1884, %v1891
    %v1894 = vunpack.c.l.s4 1934713408
    %v1895 = vunpack.c.0.s8 %v1894
    %v1896 = vlaneseq
    %v1897 = vshrl.u32 %v1896, 7
    %v1898 = vsub.s32 %v1895, %v1897
    %v1899 = vrot.slane %v1885, %v1898
    %v1900 = vcombine.low %v1875, %v1883
    %v1901 = vcombine.high %v1875, %v1883
    %v1903 = vunpack.c.l.s4 1934713408
    %v1904 = vunpack.c.0.s8 %v1903
    %v1905 = vlaneseq
    %v1906 = vshrl.u32 %v1905, 7
    %v1907 = vsub.s32 %v1904, %v1906
    %v1908 = vrot.slane %v1900, %v1907
    %v1910 = vunpack.c.l.s4 1934713408
    %v1911 = vunpack.c.0.s8 %v1910
    %v1912 = vlaneseq
    %v1913 = vshrl.u32 %v1912, 7
    %v1914 = vsub.s32 %v1911, %v1913
    %v1915 = vrot.slane %v1901, %v1914
    %v1916 = vcombine.low %v1892, %v1908
    %v1917 = vcombine.high %v1892, %v1908
    %v1918 = vcombine.low %v1899, %v1915
    %v1919 = vcombine.high %v1899, %v1915
    %v1920 = vld [vmem:[%s1] sm:$0x1]
    %v1921 = vld [vmem:[%s1 + $0x1] sm:$0x1]
    %vm1922 = vcmp.gt.f32.partialorder %v1920, 0.5
    %vm1923 = vcmp.gt.f32.partialorder %v1921, 0.5
    %v1924 = vsel %vm1922, -1e+09, 0.0
    %v1925 = vsel %vm1923, -1e+09, 0.0
    %vm1926 = vcmask 64512
    %v1928 = vsel %vm1926, %v1232, 0
    %v1931 = vsel %vm1926, %v1368, 0
    %v1934 = vsel %vm1926, %v1236, 0
    %v1937 = vsel %vm1926, %v1372, 0
    %1939 = vmatprep.subr.mxu0 0.0
    %1940 = vmatpush1.xpose.msra.mxu0 %v1934
    %1941 = vmatprep.subr.mxu0 0.0
    %1942 = vmatpush1.xpose.msra.mxu0 %v1937
    %1943 = vmatprep.subr.mxu0 0.0
    %1944 = vmatpush1.xpose.msra.mxu0 0.0
    %1945 = vmatprep.subr.mxu0 0.0
    %1946 = vmatpush1.xpose.msra.mxu0 0.0
    %1947 = vmatprep.subr.mxu0 0.0
    %1948 = vmatpush1.xpose.msra.mxu0 0.0
    %1949 = vmatprep.subr.mxu0 0.0
    %1950 = vmatpush1.xpose.msra.mxu0 0.0
    %1951 = vmatprep.subr.mxu0 0.0
    %1952 = vmatpush1.xpose.msra.mxu0 0.0
    %1953 = vmatprep.subr.mxu0 0.0
    %1954 = vmatpush1.xpose.msra.mxu0 0.0
    %1955 = vmatprep.subr.mxu0 0.0
    %1956 = vmatpush1.xpose.msra.mxu0 0.0
    %1957 = vmatprep.subr.mxu0 0.0
    %1958 = vmatpush1.xpose.msra.mxu0 0.0
    %1959 = vmatprep.subr.mxu0 0.0
    %1960 = vmatpush1.xpose.msra.mxu0 0.0
    %1961 = vmatprep.subr.mxu0 0.0
    %1962 = vmatpush1.xpose.msra.mxu0 0.0
    %1963 = vmatprep.subr.mxu0 0.0
    %1964 = vmatpush1.xpose.msra.mxu0 0.0
    %1965 = vmatprep.subr.mxu0 0.0
    %1966 = vmatpush1.xpose.msra.mxu0 0.0
    %1967 = vmatprep.subr.mxu0 0.0
    %1968 = vmatpush1.xpose.msra.mxu0 0.0
    %1969 = vmatprep.subr.mxu0 0.0
    %1970 = vmatpush1.xpose.msra.mxu0 0.0
    %1971 = vmatprep.subr.mxu0 0.0
    %1972 = vmatpush1.xpose.msra.mxu0 0.0
    %1973 = vmatprep.subr.mxu0 0.0
    %1974 = vmatpush1.xpose.msra.mxu0 0.0
    %1975 = vmatprep.subr.mxu0 0.0
    %1976 = vmatpush1.xpose.msra.mxu0 0.0
    %1977 = vmatprep.subr.mxu0 0.0
    %1978 = vmatpush1.xpose.msra.mxu0 0.0
    %1979 = vmatprep.subr.mxu0 0.0
    %1980 = vmatpush1.xpose.msra.mxu0 0.0
    %1981 = vmatprep.subr.mxu0 0.0
    %1982 = vmatpush1.xpose.msra.mxu0 0.0
    %1983 = vmatprep.subr.mxu0 0.0
    %1984 = vmatpush1.xpose.msra.mxu0 0.0
    %1985 = vmatprep.subr.mxu0 0.0
    %1986 = vmatpush1.xpose.msra.mxu0 0.0
    %1987 = vmatprep.subr.mxu0 0.0
    %1988 = vmatpush1.xpose.msra.mxu0 0.0
    %1989 = vmatprep.subr.mxu0 0.0
    %1990 = vmatpush1.xpose.msra.mxu0 0.0
    %1991 = vmatprep.subr.mxu0 0.0
    %1992 = vmatpush1.xpose.msra.mxu0 0.0
    %1993 = vmatprep.subr.mxu0 0.0
    %1994 = vmatpush1.xpose.msra.mxu0 0.0
    %1995 = vmatprep.subr.mxu0 0.0
    %1996 = vmatpush1.xpose.msra.mxu0 0.0
    %1997 = vmatprep.subr.mxu0 0.0
    %1998 = vmatpush1.xpose.msra.mxu0 0.0
    %1999 = vmatprep.subr.mxu0 0.0
    %2000 = vmatpush1.xpose.msra.mxu0 0.0
    %2001 = vmatprep.subr.mxu0 0.0
    %2002 = vmatpush1.xpose.msra.mxu0 0.0
    %2003 = vmatprep.mubr.f32.mxu0 0.0
    %2004 = vmatmul.mubr.f32.gmra.mrb[0].mxu0 %v1928
    %v2005 = vpop.f32.mrb[0].mxu0
    %v2006 = vadd.f32 0.0, %v2005
    %v2007 = vpop.f32.mrb[0].mxu0
    %2008 = vmatprep.mubr.f32.mxu0 0.0
    %2009 = vmatmul.mubr.f32.gmra.mrb[0].mxu0 %v1931
    %v2010 = vpop.f32.mrb[0].mxu0
    %v2011 = vadd.f32 0.0, %v2010
    %v2012 = vpop.f32.mrb[0].mxu0
    %2013 = vdwg.mxu0
    %v2015 = vsel %vm1926, %v1504, 0
    %v2018 = vsel %vm1926, %v1640, 0
    %v2021 = vsel %vm1926, %v1508, 0
    %v2024 = vsel %vm1926, %v1644, 0
    %2026 = vmatprep.subr.mxu0 0.0
    %2027 = vmatpush1.xpose.msra.mxu0 %v2021
    %2028 = vmatprep.subr.mxu0 0.0
    %2029 = vmatpush1.xpose.msra.mxu0 %v2024
    %2030 = vmatprep.subr.mxu0 0.0
    %2031 = vmatpush1.xpose.msra.mxu0 0.0
    %2032 = vmatprep.subr.mxu0 0.0
    %2033 = vmatpush1.xpose.msra.mxu0 0.0
    %2034 = vmatprep.subr.mxu0 0.0
    %2035 = vmatpush1.xpose.msra.mxu0 0.0
    %2036 = vmatprep.subr.mxu0 0.0
    %2037 = vmatpush1.xpose.msra.mxu0 0.0
    %2038 = vmatprep.subr.mxu0 0.0
    %2039 = vmatpush1.xpose.msra.mxu0 0.0
    %2040 = vmatprep.subr.mxu0 0.0
    %2041 = vmatpush1.xpose.msra.mxu0 0.0
    %2042 = vmatprep.subr.mxu0 0.0
    %2043 = vmatpush1.xpose.msra.mxu0 0.0
    %2044 = vmatprep.subr.mxu0 0.0
    %2045 = vmatpush1.xpose.msra.mxu0 0.0
    %2046 = vmatprep.subr.mxu0 0.0
    %2047 = vmatpush1.xpose.msra.mxu0 0.0
    %2048 = vmatprep.subr.mxu0 0.0
    %2049 = vmatpush1.xpose.msra.mxu0 0.0
    %2050 = vmatprep.subr.mxu0 0.0
    %2051 = vmatpush1.xpose.msra.mxu0 0.0
    %2052 = vmatprep.subr.mxu0 0.0
    %2053 = vmatpush1.xpose.msra.mxu0 0.0
    %2054 = vmatprep.subr.mxu0 0.0
    %2055 = vmatpush1.xpose.msra.mxu0 0.0
    %2056 = vmatprep.subr.mxu0 0.0
    %2057 = vmatpush1.xpose.msra.mxu0 0.0
    %2058 = vmatprep.subr.mxu0 0.0
    %2059 = vmatpush1.xpose.msra.mxu0 0.0
    %2060 = vmatprep.subr.mxu0 0.0
    %2061 = vmatpush1.xpose.msra.mxu0 0.0
    %2062 = vmatprep.subr.mxu0 0.0
    %2063 = vmatpush1.xpose.msra.mxu0 0.0
    %2064 = vmatprep.subr.mxu0 0.0
    %2065 = vmatpush1.xpose.msra.mxu0 0.0
    %2066 = vmatprep.subr.mxu0 0.0
    %2067 = vmatpush1.xpose.msra.mxu0 0.0
    %2068 = vmatprep.subr.mxu0 0.0
    %2069 = vmatpush1.xpose.msra.mxu0 0.0
    %2070 = vmatprep.subr.mxu0 0.0
    %2071 = vmatpush1.xpose.msra.mxu0 0.0
    %2072 = vmatprep.subr.mxu0 0.0
    %2073 = vmatpush1.xpose.msra.mxu0 0.0
    %2074 = vmatprep.subr.mxu0 0.0
    %2075 = vmatpush1.xpose.msra.mxu0 0.0
    %2076 = vmatprep.subr.mxu0 0.0
    %2077 = vmatpush1.xpose.msra.mxu0 0.0
    %2078 = vmatprep.subr.mxu0 0.0
    %2079 = vmatpush1.xpose.msra.mxu0 0.0
    %2080 = vmatprep.subr.mxu0 0.0
    %2081 = vmatpush1.xpose.msra.mxu0 0.0
    %2082 = vmatprep.subr.mxu0 0.0
    %2083 = vmatpush1.xpose.msra.mxu0 0.0
    %2084 = vmatprep.subr.mxu0 0.0
    %2085 = vmatpush1.xpose.msra.mxu0 0.0
    %2086 = vmatprep.subr.mxu0 0.0
    %2087 = vmatpush1.xpose.msra.mxu0 0.0
    %2088 = vmatprep.subr.mxu0 0.0
    %2089 = vmatpush1.xpose.msra.mxu0 0.0
    %2090 = vmatprep.mubr.f32.mxu0 0.0
    %2091 = vmatmul.mubr.f32.gmra.mrb[0].mxu0 %v2015
    %v2092 = vpop.f32.mrb[0].mxu0
    %v2093 = vadd.f32 0.0, %v2092
    %v2094 = vpop.f32.mrb[0].mxu0
    %2095 = vmatprep.mubr.f32.mxu0 0.0
    %2096 = vmatmul.mubr.f32.gmra.mrb[0].mxu0 %v2018
    %v2097 = vpop.f32.mrb[0].mxu0
    %v2098 = vadd.f32 0.0, %v2097
    %v2099 = vpop.f32.mrb[0].mxu0
    %2100 = vdwg.mxu0
    %v2102 = vsel %vm1926, %v1233, 0
    %v2105 = vsel %vm1926, %v1369, 0
    %v2108 = vsel %vm1926, %v1237, 0
    %v2111 = vsel %vm1926, %v1373, 0
    %2113 = vmatprep.subr.mxu0 0.0
    %2114 = vmatpush1.xpose.msra.mxu0 %v2108
    %2115 = vmatprep.subr.mxu0 0.0
    %2116 = vmatpush1.xpose.msra.mxu0 %v2111
    %2117 = vmatprep.subr.mxu0 0.0
    %2118 = vmatpush1.xpose.msra.mxu0 0.0
    %2119 = vmatprep.subr.mxu0 0.0
    %2120 = vmatpush1.xpose.msra.mxu0 0.0
    %2121 = vmatprep.subr.mxu0 0.0
    %2122 = vmatpush1.xpose.msra.mxu0 0.0
    %2123 = vmatprep.subr.mxu0 0.0
    %2124 = vmatpush1.xpose.msra.mxu0 0.0
    %2125 = vmatprep.subr.mxu0 0.0
    %2126 = vmatpush1.xpose.msra.mxu0 0.0
    %2127 = vmatprep.subr.mxu0 0.0
    %2128 = vmatpush1.xpose.msra.mxu0 0.0
    %2129 = vmatprep.subr.mxu0 0.0
    %2130 = vmatpush1.xpose.msra.mxu0 0.0
    %2131 = vmatprep.subr.mxu0 0.0
    %2132 = vmatpush1.xpose.msra.mxu0 0.0
    %2133 = vmatprep.subr.mxu0 0.0
    %2134 = vmatpush1.xpose.msra.mxu0 0.0
    %2135 = vmatprep.subr.mxu0 0.0
    %2136 = vmatpush1.xpose.msra.mxu0 0.0
    %2137 = vmatprep.subr.mxu0 0.0
    %2138 = vmatpush1.xpose.msra.mxu0 0.0
    %2139 = vmatprep.subr.mxu0 0.0
    %2140 = vmatpush1.xpose.msra.mxu0 0.0
    %2141 = vmatprep.subr.mxu0 0.0
    %2142 = vmatpush1.xpose.msra.mxu0 0.0
    %2143 = vmatprep.subr.mxu0 0.0
    %2144 = vmatpush1.xpose.msra.mxu0 0.0
    %2145 = vmatprep.subr.mxu0 0.0
    %2146 = vmatpush1.xpose.msra.mxu0 0.0
    %2147 = vmatprep.subr.mxu0 0.0
    %2148 = vmatpush1.xpose.msra.mxu0 0.0
    %2149 = vmatprep.subr.mxu0 0.0
    %2150 = vmatpush1.xpose.msra.mxu0 0.0
    %2151 = vmatprep.subr.mxu0 0.0
    %2152 = vmatpush1.xpose.msra.mxu0 0.0
    %2153 = vmatprep.subr.mxu0 0.0
    %2154 = vmatpush1.xpose.msra.mxu0 0.0
    %2155 = vmatprep.subr.mxu0 0.0
    %2156 = vmatpush1.xpose.msra.mxu0 0.0
    %2157 = vmatprep.subr.mxu0 0.0
    %2158 = vmatpush1.xpose.msra.mxu0 0.0
    %2159 = vmatprep.subr.mxu0 0.0
    %2160 = vmatpush1.xpose.msra.mxu0 0.0
    %2161 = vmatprep.subr.mxu0 0.0
    %2162 = vmatpush1.xpose.msra.mxu0 0.0
    %2163 = vmatprep.subr.mxu0 0.0
    %2164 = vmatpush1.xpose.msra.mxu0 0.0
    %2165 = vmatprep.subr.mxu0 0.0
    %2166 = vmatpush1.xpose.msra.mxu0 0.0
    %2167 = vmatprep.subr.mxu0 0.0
    %2168 = vmatpush1.xpose.msra.mxu0 0.0
    %2169 = vmatprep.subr.mxu0 0.0
    %2170 = vmatpush1.xpose.msra.mxu0 0.0
    %2171 = vmatprep.subr.mxu0 0.0
    %2172 = vmatpush1.xpose.msra.mxu0 0.0
    %2173 = vmatprep.subr.mxu0 0.0
    %2174 = vmatpush1.xpose.msra.mxu0 0.0
    %2175 = vmatprep.subr.mxu0 0.0
    %2176 = vmatpush1.xpose.msra.mxu0 0.0
    %2177 = vmatprep.mubr.f32.mxu0 0.0
    %2178 = vmatmul.mubr.f32.gmra.mrb[0].mxu0 %v2102
    %v2179 = vpop.f32.mrb[0].mxu0
    %v2180 = vadd.f32 0.0, %v2179
    %v2181 = vpop.f32.mrb[0].mxu0
    %2182 = vmatprep.mubr.f32.mxu0 0.0
    %2183 = vmatmul.mubr.f32.gmra.mrb[0].mxu0 %v2105
    %v2184 = vpop.f32.mrb[0].mxu0
    %v2185 = vadd.f32 0.0, %v2184
    %v2186 = vpop.f32.mrb[0].mxu0
    %2187 = vdwg.mxu0
    %v2189 = vsel %vm1926, %v1505, 0
    %v2192 = vsel %vm1926, %v1641, 0
    %v2195 = vsel %vm1926, %v1509, 0
    %v2198 = vsel %vm1926, %v1645, 0
    %2200 = vmatprep.subr.mxu0 0.0
    %2201 = vmatpush1.xpose.msra.mxu0 %v2195
    %2202 = vmatprep.subr.mxu0 0.0
    %2203 = vmatpush1.xpose.msra.mxu0 %v2198
    %2204 = vmatprep.subr.mxu0 0.0
    %2205 = vmatpush1.xpose.msra.mxu0 0.0
    %2206 = vmatprep.subr.mxu0 0.0
    %2207 = vmatpush1.xpose.msra.mxu0 0.0
    %2208 = vmatprep.subr.mxu0 0.0
    %2209 = vmatpush1.xpose.msra.mxu0 0.0
    %2210 = vmatprep.subr.mxu0 0.0
    %2211 = vmatpush1.xpose.msra.mxu0 0.0
    %2212 = vmatprep.subr.mxu0 0.0
    %2213 = vmatpush1.xpose.msra.mxu0 0.0
    %2214 = vmatprep.subr.mxu0 0.0
    %2215 = vmatpush1.xpose.msra.mxu0 0.0
    %2216 = vmatprep.subr.mxu0 0.0
    %2217 = vmatpush1.xpose.msra.mxu0 0.0
    %2218 = vmatprep.subr.mxu0 0.0
    %2219 = vmatpush1.xpose.msra.mxu0 0.0
    %2220 = vmatprep.subr.mxu0 0.0
    %2221 = vmatpush1.xpose.msra.mxu0 0.0
    %2222 = vmatprep.subr.mxu0 0.0
    %2223 = vmatpush1.xpose.msra.mxu0 0.0
    %2224 = vmatprep.subr.mxu0 0.0
    %2225 = vmatpush1.xpose.msra.mxu0 0.0
    %2226 = vmatprep.subr.mxu0 0.0
    %2227 = vmatpush1.xpose.msra.mxu0 0.0
    %2228 = vmatprep.subr.mxu0 0.0
    %2229 = vmatpush1.xpose.msra.mxu0 0.0
    %2230 = vmatprep.subr.mxu0 0.0
    %2231 = vmatpush1.xpose.msra.mxu0 0.0
    %2232 = vmatprep.subr.mxu0 0.0
    %2233 = vmatpush1.xpose.msra.mxu0 0.0
    %2234 = vmatprep.subr.mxu0 0.0
    %2235 = vmatpush1.xpose.msra.mxu0 0.0
    %2236 = vmatprep.subr.mxu0 0.0
    %2237 = vmatpush1.xpose.msra.mxu0 0.0
    %2238 = vmatprep.subr.mxu0 0.0
    %2239 = vmatpush1.xpose.msra.mxu0 0.0
    %2240 = vmatprep.subr.mxu0 0.0
    %2241 = vmatpush1.xpose.msra.mxu0 0.0
    %2242 = vmatprep.subr.mxu0 0.0
    %2243 = vmatpush1.xpose.msra.mxu0 0.0
    %2244 = vmatprep.subr.mxu0 0.0
    %2245 = vmatpush1.xpose.msra.mxu0 0.0
    %2246 = vmatprep.subr.mxu0 0.0
    %2247 = vmatpush1.xpose.msra.mxu0 0.0
    %2248 = vmatprep.subr.mxu0 0.0
    %2249 = vmatpush1.xpose.msra.mxu0 0.0
    %2250 = vmatprep.subr.mxu0 0.0
    %2251 = vmatpush1.xpose.msra.mxu0 0.0
    %2252 = vmatprep.subr.mxu0 0.0
    %2253 = vmatpush1.xpose.msra.mxu0 0.0
    %2254 = vmatprep.subr.mxu0 0.0
    %2255 = vmatpush1.xpose.msra.mxu0 0.0
    %2256 = vmatprep.subr.mxu0 0.0
    %2257 = vmatpush1.xpose.msra.mxu0 0.0
    %2258 = vmatprep.subr.mxu0 0.0
    %2259 = vmatpush1.xpose.msra.mxu0 0.0
    %2260 = vmatprep.subr.mxu0 0.0
    %2261 = vmatpush1.xpose.msra.mxu0 0.0
    %2262 = vmatprep.subr.mxu0 0.0
    %2263 = vmatpush1.xpose.msra.mxu0 0.0
    %2264 = vmatprep.mubr.f32.mxu0 0.0
    %2265 = vmatmul.mubr.f32.gmra.mrb[0].mxu0 %v2189
    %v2266 = vpop.f32.mrb[0].mxu0
    %v2267 = vadd.f32 0.0, %v2266
    %v2268 = vpop.f32.mrb[0].mxu0
    %2269 = vmatprep.mubr.f32.mxu0 0.0
    %2270 = vmatmul.mubr.f32.gmra.mrb[0].mxu0 %v2192
    %v2271 = vpop.f32.mrb[0].mxu0
    %v2272 = vadd.f32 0.0, %v2271
    %v2273 = vpop.f32.mrb[0].mxu0
    %2274 = vdwg.mxu0
    %v2276 = vsel %vm1926, %v1234, 0
    %v2279 = vsel %vm1926, %v1370, 0
    %v2282 = vsel %vm1926, %v1238, 0
    %v2285 = vsel %vm1926, %v1374, 0
    %2287 = vmatprep.subr.mxu0 0.0
    %2288 = vmatpush1.xpose.msra.mxu0 %v2282
    %2289 = vmatprep.subr.mxu0 0.0
    %2290 = vmatpush1.xpose.msra.mxu0 %v2285
    %2291 = vmatprep.subr.mxu0 0.0
    %2292 = vmatpush1.xpose.msra.mxu0 0.0
    %2293 = vmatprep.subr.mxu0 0.0
    %2294 = vmatpush1.xpose.msra.mxu0 0.0
    %2295 = vmatprep.subr.mxu0 0.0
    %2296 = vmatpush1.xpose.msra.mxu0 0.0
    %2297 = vmatprep.subr.mxu0 0.0
    %2298 = vmatpush1.xpose.msra.mxu0 0.0
    %2299 = vmatprep.subr.mxu0 0.0
    %2300 = vmatpush1.xpose.msra.mxu0 0.0
    %2301 = vmatprep.subr.mxu0 0.0
    %2302 = vmatpush1.xpose.msra.mxu0 0.0
    %2303 = vmatprep.subr.mxu0 0.0
    %2304 = vmatpush1.xpose.msra.mxu0 0.0
    %2305 = vmatprep.subr.mxu0 0.0
    %2306 = vmatpush1.xpose.msra.mxu0 0.0
    %2307 = vmatprep.subr.mxu0 0.0
    %2308 = vmatpush1.xpose.msra.mxu0 0.0
    %2309 = vmatprep.subr.mxu0 0.0
    %2310 = vmatpush1.xpose.msra.mxu0 0.0
    %2311 = vmatprep.subr.mxu0 0.0
    %2312 = vmatpush1.xpose.msra.mxu0 0.0
    %2313 = vmatprep.subr.mxu0 0.0
    %2314 = vmatpush1.xpose.msra.mxu0 0.0
    %2315 = vmatprep.subr.mxu0 0.0
    %2316 = vmatpush1.xpose.msra.mxu0 0.0
    %2317 = vmatprep.subr.mxu0 0.0
    %2318 = vmatpush1.xpose.msra.mxu0 0.0
    %2319 = vmatprep.subr.mxu0 0.0
    %2320 = vmatpush1.xpose.msra.mxu0 0.0
    %2321 = vmatprep.subr.mxu0 0.0
    %2322 = vmatpush1.xpose.msra.mxu0 0.0
    %2323 = vmatprep.subr.mxu0 0.0
    %2324 = vmatpush1.xpose.msra.mxu0 0.0
    %2325 = vmatprep.subr.mxu0 0.0
    %2326 = vmatpush1.xpose.msra.mxu0 0.0
    %2327 = vmatprep.subr.mxu0 0.0
    %2328 = vmatpush1.xpose.msra.mxu0 0.0
    %2329 = vmatprep.subr.mxu0 0.0
    %2330 = vmatpush1.xpose.msra.mxu0 0.0
    %2331 = vmatprep.subr.mxu0 0.0
    %2332 = vmatpush1.xpose.msra.mxu0 0.0
    %2333 = vmatprep.subr.mxu0 0.0
    %2334 = vmatpush1.xpose.msra.mxu0 0.0
    %2335 = vmatprep.subr.mxu0 0.0
    %2336 = vmatpush1.xpose.msra.mxu0 0.0
    %2337 = vmatprep.subr.mxu0 0.0
    %2338 = vmatpush1.xpose.msra.mxu0 0.0
    %2339 = vmatprep.subr.mxu0 0.0
    %2340 = vmatpush1.xpose.msra.mxu0 0.0
    %2341 = vmatprep.subr.mxu0 0.0
    %2342 = vmatpush1.xpose.msra.mxu0 0.0
    %2343 = vmatprep.subr.mxu0 0.0
    %2344 = vmatpush1.xpose.msra.mxu0 0.0
    %2345 = vmatprep.subr.mxu0 0.0
    %2346 = vmatpush1.xpose.msra.mxu0 0.0
    %2347 = vmatprep.subr.mxu0 0.0
    %2348 = vmatpush1.xpose.msra.mxu0 0.0
    %2349 = vmatprep.subr.mxu0 0.0
    %2350 = vmatpush1.xpose.msra.mxu0 0.0
    %2351 = vmatprep.mubr.f32.mxu0 0.0
    %2352 = vmatmul.mubr.f32.gmra.mrb[0].mxu0 %v2276
    %v2353 = vpop.f32.mrb[0].mxu0
    %v2354 = vadd.f32 0.0, %v2353
    %v2355 = vpop.f32.mrb[0].mxu0
    %2356 = vmatprep.mubr.f32.mxu0 0.0
    %2357 = vmatmul.mubr.f32.gmra.mrb[0].mxu0 %v2279
    %v2358 = vpop.f32.mrb[0].mxu0
    %v2359 = vadd.f32 0.0, %v2358
    %v2360 = vpop.f32.mrb[0].mxu0
    %2361 = vdwg.mxu0
    %v2363 = vsel %vm1926, %v1506, 0
    %v2366 = vsel %vm1926, %v1642, 0
    %v2369 = vsel %vm1926, %v1510, 0
    %v2372 = vsel %vm1926, %v1646, 0
    %2374 = vmatprep.subr.mxu0 0.0
    %2375 = vmatpush1.xpose.msra.mxu0 %v2369
    %2376 = vmatprep.subr.mxu0 0.0
    %2377 = vmatpush1.xpose.msra.mxu0 %v2372
    %2378 = vmatprep.subr.mxu0 0.0
    %2379 = vmatpush1.xpose.msra.mxu0 0.0
    %2380 = vmatprep.subr.mxu0 0.0
    %2381 = vmatpush1.xpose.msra.mxu0 0.0
    %2382 = vmatprep.subr.mxu0 0.0
    %2383 = vmatpush1.xpose.msra.mxu0 0.0
    %2384 = vmatprep.subr.mxu0 0.0
    %2385 = vmatpush1.xpose.msra.mxu0 0.0
    %2386 = vmatprep.subr.mxu0 0.0
    %2387 = vmatpush1.xpose.msra.mxu0 0.0
    %2388 = vmatprep.subr.mxu0 0.0
    %2389 = vmatpush1.xpose.msra.mxu0 0.0
    %2390 = vmatprep.subr.mxu0 0.0
    %2391 = vmatpush1.xpose.msra.mxu0 0.0
    %2392 = vmatprep.subr.mxu0 0.0
    %2393 = vmatpush1.xpose.msra.mxu0 0.0
    %2394 = vmatprep.subr.mxu0 0.0
    %2395 = vmatpush1.xpose.msra.mxu0 0.0
    %2396 = vmatprep.subr.mxu0 0.0
    %2397 = vmatpush1.xpose.msra.mxu0 0.0
    %2398 = vmatprep.subr.mxu0 0.0
    %2399 = vmatpush1.xpose.msra.mxu0 0.0
    %2400 = vmatprep.subr.mxu0 0.0
    %2401 = vmatpush1.xpose.msra.mxu0 0.0
    %2402 = vmatprep.subr.mxu0 0.0
    %2403 = vmatpush1.xpose.msra.mxu0 0.0
    %2404 = vmatprep.subr.mxu0 0.0
    %2405 = vmatpush1.xpose.msra.mxu0 0.0
    %2406 = vmatprep.subr.mxu0 0.0
    %2407 = vmatpush1.xpose.msra.mxu0 0.0
    %2408 = vmatprep.subr.mxu0 0.0
    %2409 = vmatpush1.xpose.msra.mxu0 0.0
    %2410 = vmatprep.subr.mxu0 0.0
    %2411 = vmatpush1.xpose.msra.mxu0 0.0
    %2412 = vmatprep.subr.mxu0 0.0
    %2413 = vmatpush1.xpose.msra.mxu0 0.0
    %2414 = vmatprep.subr.mxu0 0.0
    %2415 = vmatpush1.xpose.msra.mxu0 0.0
    %2416 = vmatprep.subr.mxu0 0.0
    %2417 = vmatpush1.xpose.msra.mxu0 0.0
    %2418 = vmatprep.subr.mxu0 0.0
    %2419 = vmatpush1.xpose.msra.mxu0 0.0
    %2420 = vmatprep.subr.mxu0 0.0
    %2421 = vmatpush1.xpose.msra.mxu0 0.0
    %2422 = vmatprep.subr.mxu0 0.0
    %2423 = vmatpush1.xpose.msra.mxu0 0.0
    %2424 = vmatprep.subr.mxu0 0.0
    %2425 = vmatpush1.xpose.msra.mxu0 0.0
    %2426 = vmatprep.subr.mxu0 0.0
    %2427 = vmatpush1.xpose.msra.mxu0 0.0
    %2428 = vmatprep.subr.mxu0 0.0
    %2429 = vmatpush1.xpose.msra.mxu0 0.0
    %2430 = vmatprep.subr.mxu0 0.0
    %2431 = vmatpush1.xpose.msra.mxu0 0.0
    %2432 = vmatprep.subr.mxu0 0.0
    %2433 = vmatpush1.xpose.msra.mxu0 0.0
    %2434 = vmatprep.subr.mxu0 0.0
    %2435 = vmatpush1.xpose.msra.mxu0 0.0
    %2436 = vmatprep.subr.mxu0 0.0
    %2437 = vmatpush1.xpose.msra.mxu0 0.0
    %2438 = vmatprep.mubr.f32.mxu0 0.0
    %2439 = vmatmul.mubr.f32.gmra.mrb[0].mxu0 %v2363
    %v2440 = vpop.f32.mrb[0].mxu0
    %v2441 = vadd.f32 0.0, %v2440
    %v2442 = vpop.f32.mrb[0].mxu0
    %2443 = vmatprep.mubr.f32.mxu0 0.0
    %2444 = vmatmul.mubr.f32.gmra.mrb[0].mxu0 %v2366
    %v2445 = vpop.f32.mrb[0].mxu0
    %v2446 = vadd.f32 0.0, %v2445
    %v2447 = vpop.f32.mrb[0].mxu0
    %2448 = vdwg.mxu0
    %v2450 = vsel %vm1926, %v1235, 0
    %v2453 = vsel %vm1926, %v1371, 0
    %v2456 = vsel %vm1926, %v1239, 0
    %v2459 = vsel %vm1926, %v1375, 0
    %2461 = vmatprep.subr.mxu0 0.0
    %2462 = vmatpush1.xpose.msra.mxu0 %v2456
    %2463 = vmatprep.subr.mxu0 0.0
    %2464 = vmatpush1.xpose.msra.mxu0 %v2459
    %2465 = vmatprep.subr.mxu0 0.0
    %2466 = vmatpush1.xpose.msra.mxu0 0.0
    %2467 = vmatprep.subr.mxu0 0.0
    %2468 = vmatpush1.xpose.msra.mxu0 0.0
    %2469 = vmatprep.subr.mxu0 0.0
    %2470 = vmatpush1.xpose.msra.mxu0 0.0
    %2471 = vmatprep.subr.mxu0 0.0
    %2472 = vmatpush1.xpose.msra.mxu0 0.0
    %2473 = vmatprep.subr.mxu0 0.0
    %2474 = vmatpush1.xpose.msra.mxu0 0.0
    %2475 = vmatprep.subr.mxu0 0.0
    %2476 = vmatpush1.xpose.msra.mxu0 0.0
    %2477 = vmatprep.subr.mxu0 0.0
    %2478 = vmatpush1.xpose.msra.mxu0 0.0
    %2479 = vmatprep.subr.mxu0 0.0
    %2480 = vmatpush1.xpose.msra.mxu0 0.0
    %2481 = vmatprep.subr.mxu0 0.0
    %2482 = vmatpush1.xpose.msra.mxu0 0.0
    %2483 = vmatprep.subr.mxu0 0.0
    %2484 = vmatpush1.xpose.msra.mxu0 0.0
    %2485 = vmatprep.subr.mxu0 0.0
    %2486 = vmatpush1.xpose.msra.mxu0 0.0
    %2487 = vmatprep.subr.mxu0 0.0
    %2488 = vmatpush1.xpose.msra.mxu0 0.0
    %2489 = vmatprep.subr.mxu0 0.0
    %2490 = vmatpush1.xpose.msra.mxu0 0.0
    %2491 = vmatprep.subr.mxu0 0.0
    %2492 = vmatpush1.xpose.msra.mxu0 0.0
    %2493 = vmatprep.subr.mxu0 0.0
    %2494 = vmatpush1.xpose.msra.mxu0 0.0
    %2495 = vmatprep.subr.mxu0 0.0
    %2496 = vmatpush1.xpose.msra.mxu0 0.0
    %2497 = vmatprep.subr.mxu0 0.0
    %2498 = vmatpush1.xpose.msra.mxu0 0.0
    %2499 = vmatprep.subr.mxu0 0.0
    %2500 = vmatpush1.xpose.msra.mxu0 0.0
    %2501 = vmatprep.subr.mxu0 0.0
    %2502 = vmatpush1.xpose.msra.mxu0 0.0
    %2503 = vmatprep.subr.mxu0 0.0
    %2504 = vmatpush1.xpose.msra.mxu0 0.0
    %2505 = vmatprep.subr.mxu0 0.0
    %2506 = vmatpush1.xpose.msra.mxu0 0.0
    %2507 = vmatprep.subr.mxu0 0.0
    %2508 = vmatpush1.xpose.msra.mxu0 0.0
    %2509 = vmatprep.subr.mxu0 0.0
    %2510 = vmatpush1.xpose.msra.mxu0 0.0
    %2511 = vmatprep.subr.mxu0 0.0
    %2512 = vmatpush1.xpose.msra.mxu0 0.0
    %2513 = vmatprep.subr.mxu0 0.0
    %2514 = vmatpush1.xpose.msra.mxu0 0.0
    %2515 = vmatprep.subr.mxu0 0.0
    %2516 = vmatpush1.xpose.msra.mxu0 0.0
    %2517 = vmatprep.subr.mxu0 0.0
    %2518 = vmatpush1.xpose.msra.mxu0 0.0
    %2519 = vmatprep.subr.mxu0 0.0
    %2520 = vmatpush1.xpose.msra.mxu0 0.0
    %2521 = vmatprep.subr.mxu0 0.0
    %2522 = vmatpush1.xpose.msra.mxu0 0.0
    %2523 = vmatprep.subr.mxu0 0.0
    %2524 = vmatpush1.xpose.msra.mxu0 0.0
    %2525 = vmatprep.mubr.f32.mxu0 0.0
    %2526 = vmatmul.mubr.f32.gmra.mrb[0].mxu0 %v2450
    %v2527 = vpop.f32.mrb[0].mxu0
    %v2528 = vadd.f32 0.0, %v2527
    %v2529 = vpop.f32.mrb[0].mxu0
    %2530 = vmatprep.mubr.f32.mxu0 0.0
    %2531 = vmatmul.mubr.f32.gmra.mrb[0].mxu0 %v2453
    %v2532 = vpop.f32.mrb[0].mxu0
    %v2533 = vadd.f32 0.0, %v2532
    %v2534 = vpop.f32.mrb[0].mxu0
    %2535 = vdwg.mxu0
    %v2537 = vsel %vm1926, %v1507, 0
    %v2540 = vsel %vm1926, %v1643, 0
    %v2543 = vsel %vm1926, %v1511, 0
    %v2546 = vsel %vm1926, %v1647, 0
    %2548 = vmatprep.subr.mxu0 0.0
    %2549 = vmatpush1.xpose.msra.mxu0 %v2543
    %2550 = vmatprep.subr.mxu0 0.0
    %2551 = vmatpush1.xpose.msra.mxu0 %v2546
    %2552 = vmatprep.subr.mxu0 0.0
    %2553 = vmatpush1.xpose.msra.mxu0 0.0
    %2554 = vmatprep.subr.mxu0 0.0
    %2555 = vmatpush1.xpose.msra.mxu0 0.0
    %2556 = vmatprep.subr.mxu0 0.0
    %2557 = vmatpush1.xpose.msra.mxu0 0.0
    %2558 = vmatprep.subr.mxu0 0.0
    %2559 = vmatpush1.xpose.msra.mxu0 0.0
    %2560 = vmatprep.subr.mxu0 0.0
    %2561 = vmatpush1.xpose.msra.mxu0 0.0
    %2562 = vmatprep.subr.mxu0 0.0
    %2563 = vmatpush1.xpose.msra.mxu0 0.0
    %2564 = vmatprep.subr.mxu0 0.0
    %2565 = vmatpush1.xpose.msra.mxu0 0.0
    %2566 = vmatprep.subr.mxu0 0.0
    %2567 = vmatpush1.xpose.msra.mxu0 0.0
    %2568 = vmatprep.subr.mxu0 0.0
    %2569 = vmatpush1.xpose.msra.mxu0 0.0
    %2570 = vmatprep.subr.mxu0 0.0
    %2571 = vmatpush1.xpose.msra.mxu0 0.0
    %2572 = vmatprep.subr.mxu0 0.0
    %2573 = vmatpush1.xpose.msra.mxu0 0.0
    %2574 = vmatprep.subr.mxu0 0.0
    %2575 = vmatpush1.xpose.msra.mxu0 0.0
    %2576 = vmatprep.subr.mxu0 0.0
    %2577 = vmatpush1.xpose.msra.mxu0 0.0
    %2578 = vmatprep.subr.mxu0 0.0
    %2579 = vmatpush1.xpose.msra.mxu0 0.0
    %2580 = vmatprep.subr.mxu0 0.0
    %2581 = vmatpush1.xpose.msra.mxu0 0.0
    %2582 = vmatprep.subr.mxu0 0.0
    %2583 = vmatpush1.xpose.msra.mxu0 0.0
    %2584 = vmatprep.subr.mxu0 0.0
    %2585 = vmatpush1.xpose.msra.mxu0 0.0
    %2586 = vmatprep.subr.mxu0 0.0
    %2587 = vmatpush1.xpose.msra.mxu0 0.0
    %2588 = vmatprep.subr.mxu0 0.0
    %2589 = vmatpush1.xpose.msra.mxu0 0.0
    %2590 = vmatprep.subr.mxu0 0.0
    %2591 = vmatpush1.xpose.msra.mxu0 0.0
    %2592 = vmatprep.subr.mxu0 0.0
    %2593 = vmatpush1.xpose.msra.mxu0 0.0
    %2594 = vmatprep.subr.mxu0 0.0
    %2595 = vmatpush1.xpose.msra.mxu0 0.0
    %2596 = vmatprep.subr.mxu0 0.0
    %2597 = vmatpush1.xpose.msra.mxu0 0.0
    %2598 = vmatprep.subr.mxu0 0.0
    %2599 = vmatpush1.xpose.msra.mxu0 0.0
    %2600 = vmatprep.subr.mxu0 0.0
    %2601 = vmatpush1.xpose.msra.mxu0 0.0
    %2602 = vmatprep.subr.mxu0 0.0
    %2603 = vmatpush1.xpose.msra.mxu0 0.0
    %2604 = vmatprep.subr.mxu0 0.0
    %2605 = vmatpush1.xpose.msra.mxu0 0.0
    %2606 = vmatprep.subr.mxu0 0.0
    %2607 = vmatpush1.xpose.msra.mxu0 0.0
    %2608 = vmatprep.subr.mxu0 0.0
    %2609 = vmatpush1.xpose.msra.mxu0 0.0
    %2610 = vmatprep.subr.mxu0 0.0
    %2611 = vmatpush1.xpose.msra.mxu0 0.0
    %2612 = vmatprep.mubr.f32.mxu0 0.0
    %2613 = vmatmul.mubr.f32.gmra.mrb[0].mxu0 %v2537
    %v2614 = vpop.f32.mrb[0].mxu0
    %v2615 = vadd.f32 0.0, %v2614
    %v2616 = vpop.f32.mrb[0].mxu0
    %2617 = vmatprep.mubr.f32.mxu0 0.0
    %2618 = vmatmul.mubr.f32.gmra.mrb[0].mxu0 %v2540
    %v2619 = vpop.f32.mrb[0].mxu0
    %v2620 = vadd.f32 0.0, %v2619
    %v2621 = vpop.f32.mrb[0].mxu0
    %2622 = vdwg.mxu0
    %v2623 = vmul.f32 %v2006, 0.35355338
    %v2624 = vmul.f32 %v2011, 0.35355338
    %v2625 = vmul.f32 %v2093, 0.35355338
    %v2626 = vmul.f32 %v2098, 0.35355338
    %v2627 = vmul.f32 %v2180, 0.35355338
    %v2628 = vmul.f32 %v2185, 0.35355338
    %v2629 = vmul.f32 %v2267, 0.35355338
    %v2630 = vmul.f32 %v2272, 0.35355338
    %v2631 = vmul.f32 %v2354, 0.35355338
    %v2632 = vmul.f32 %v2359, 0.35355338
    %v2633 = vmul.f32 %v2441, 0.35355338
    %v2634 = vmul.f32 %v2446, 0.35355338
    %v2635 = vmul.f32 %v2528, 0.35355338
    %v2636 = vmul.f32 %v2533, 0.35355338
    %v2637 = vmul.f32 %v2615, 0.35355338
    %v2638 = vmul.f32 %v2620, 0.35355338
    %v2641 = vlaneseq
    %v2642 = vshrl.u32 %v2641, 7
    %v2643 = vsub.s32 0, %v2642
    %v2644 = vrot.slane %v1924, %v2643
    %v2645 = vlaneseq
    %v2646 = vshrl.u32 %v2645, 7
    %v2647 = vsub.s32 0, %v2646
    %v2648 = vrot.slane %v1925, %v2647
    %v2651 = vadd.f32 %v2623, %v2644
    %v2652 = vadd.f32 %v2624, %v2644
    %v2653 = vadd.f32 %v2625, %v2648
    %v2654 = vadd.f32 %v2626, %v2648
    %v2655 = vadd.f32 %v2627, %v2644
    %v2656 = vadd.f32 %v2628, %v2644
    %v2657 = vadd.f32 %v2629, %v2648
    %v2658 = vadd.f32 %v2630, %v2648
    %v2659 = vadd.f32 %v2631, %v2644
    %v2660 = vadd.f32 %v2632, %v2644
    %v2661 = vadd.f32 %v2633, %v2648
    %v2662 = vadd.f32 %v2634, %v2648
    %v2663 = vadd.f32 %v2635, %v2644
    %v2664 = vadd.f32 %v2636, %v2644
    %v2665 = vadd.f32 %v2637, %v2648
    %v2666 = vadd.f32 %v2638, %v2648
    %vm2667 = vcmask 130048
    %v2668 = vsel %vm2667, %v2651, -inf
    %2669 = vmax.xlane.f32.xlu0 %v2668
    %v2670 = vpop.xlane.xlu0 %2669
    %v2671 = vsel %vm2667, %v2652, -inf
    %2672 = vmax.xlane.f32.xlu0 %v2671
    %v2673 = vpop.xlane.xlu0 %2672
    %v2674 = vsel %vm2667, %v2653, -inf
    %2675 = vmax.xlane.f32.xlu0 %v2674
    %v2676 = vpop.xlane.xlu0 %2675
    %v2677 = vsel %vm2667, %v2654, -inf
    %2678 = vmax.xlane.f32.xlu0 %v2677
    %v2679 = vpop.xlane.xlu0 %2678
    %v2680 = vsel %vm2667, %v2655, -inf
    %2681 = vmax.xlane.f32.xlu0 %v2680
    %v2682 = vpop.xlane.xlu0 %2681
    %v2683 = vsel %vm2667, %v2656, -inf
    %2684 = vmax.xlane.f32.xlu0 %v2683
    %v2685 = vpop.xlane.xlu0 %2684
    %v2686 = vsel %vm2667, %v2657, -inf
    %2687 = vmax.xlane.f32.xlu0 %v2686
    %v2688 = vpop.xlane.xlu0 %2687
    %v2689 = vsel %vm2667, %v2658, -inf
    %2690 = vmax.xlane.f32.xlu0 %v2689
    %v2691 = vpop.xlane.xlu0 %2690
    %v2692 = vsel %vm2667, %v2659, -inf
    %2693 = vmax.xlane.f32.xlu0 %v2692
    %v2694 = vpop.xlane.xlu0 %2693
    %v2695 = vsel %vm2667, %v2660, -inf
    %2696 = vmax.xlane.f32.xlu0 %v2695
    %v2697 = vpop.xlane.xlu0 %2696
    %v2698 = vsel %vm2667, %v2661, -inf
    %2699 = vmax.xlane.f32.xlu0 %v2698
    %v2700 = vpop.xlane.xlu0 %2699
    %v2701 = vsel %vm2667, %v2662, -inf
    %2702 = vmax.xlane.f32.xlu0 %v2701
    %v2703 = vpop.xlane.xlu0 %2702
    %v2704 = vsel %vm2667, %v2663, -inf
    %2705 = vmax.xlane.f32.xlu0 %v2704
    %v2706 = vpop.xlane.xlu0 %2705
    %v2707 = vsel %vm2667, %v2664, -inf
    %2708 = vmax.xlane.f32.xlu0 %v2707
    %v2709 = vpop.xlane.xlu0 %2708
    %v2710 = vsel %vm2667, %v2665, -inf
    %2711 = vmax.xlane.f32.xlu0 %v2710
    %v2712 = vpop.xlane.xlu0 %2711
    %v2713 = vsel %vm2667, %v2666, -inf
    %2714 = vmax.xlane.f32.xlu0 %v2713
    %v2715 = vpop.xlane.xlu0 %2714
    %v2716 = vsub.f32 %v2651, %v2670
    %v2717 = vsub.f32 %v2652, %v2673
    %v2718 = vsub.f32 %v2653, %v2676
    %v2719 = vsub.f32 %v2654, %v2679
    %v2720 = vsub.f32 %v2655, %v2682
    %v2721 = vsub.f32 %v2656, %v2685
    %v2722 = vsub.f32 %v2657, %v2688
    %v2723 = vsub.f32 %v2658, %v2691
    %v2724 = vsub.f32 %v2659, %v2694
    %v2725 = vsub.f32 %v2660, %v2697
    %v2726 = vsub.f32 %v2661, %v2700
    %v2727 = vsub.f32 %v2662, %v2703
    %v2728 = vsub.f32 %v2663, %v2706
    %v2729 = vsub.f32 %v2664, %v2709
    %v2730 = vsub.f32 %v2665, %v2712
    %v2731 = vsub.f32 %v2666, %v2715
    %v2732 = vmul.f32 %v2716, 1.442695
    %v2733 = vpow.pop %v2732
    %v2734 = vmul.f32 %v2717, 1.442695
    %v2735 = vpow.pop %v2734
    %v2736 = vmul.f32 %v2718, 1.442695
    %v2737 = vpow.pop %v2736
    %v2738 = vmul.f32 %v2719, 1.442695
    %v2739 = vpow.pop %v2738
    %v2740 = vmul.f32 %v2720, 1.442695
    %v2741 = vpow.pop %v2740
    %v2742 = vmul.f32 %v2721, 1.442695
    %v2743 = vpow.pop %v2742
    %v2744 = vmul.f32 %v2722, 1.442695
    %v2745 = vpow.pop %v2744
    %v2746 = vmul.f32 %v2723, 1.442695
    %v2747 = vpow.pop %v2746
    %v2748 = vmul.f32 %v2724, 1.442695
    %v2749 = vpow.pop %v2748
    %v2750 = vmul.f32 %v2725, 1.442695
    %v2751 = vpow.pop %v2750
    %v2752 = vmul.f32 %v2726, 1.442695
    %v2753 = vpow.pop %v2752
    %v2754 = vmul.f32 %v2727, 1.442695
    %v2755 = vpow.pop %v2754
    %v2756 = vmul.f32 %v2728, 1.442695
    %v2757 = vpow.pop %v2756
    %v2758 = vmul.f32 %v2729, 1.442695
    %v2759 = vpow.pop %v2758
    %v2760 = vmul.f32 %v2730, 1.442695
    %v2761 = vpow.pop %v2760
    %v2762 = vmul.f32 %v2731, 1.442695
    %v2763 = vpow.pop %v2762
    %v2764 = vsel %vm2667, %v2733, 0.0
    %2765 = vadd.xlane.f32.xlu0 %v2764
    %v2766 = vpop.xlane.xlu0 %2765
    %v2767 = vsel %vm2667, %v2735, 0.0
    %2768 = vadd.xlane.f32.xlu0 %v2767
    %v2769 = vpop.xlane.xlu0 %2768
    %v2770 = vsel %vm2667, %v2737, 0.0
    %2771 = vadd.xlane.f32.xlu0 %v2770
    %v2772 = vpop.xlane.xlu0 %2771
    %v2773 = vsel %vm2667, %v2739, 0.0
    %2774 = vadd.xlane.f32.xlu0 %v2773
    %v2775 = vpop.xlane.xlu0 %2774
    %v2776 = vsel %vm2667, %v2741, 0.0
    %2777 = vadd.xlane.f32.xlu0 %v2776
    %v2778 = vpop.xlane.xlu0 %2777
    %v2779 = vsel %vm2667, %v2743, 0.0
    %2780 = vadd.xlane.f32.xlu0 %v2779
    %v2781 = vpop.xlane.xlu0 %2780
    %v2782 = vsel %vm2667, %v2745, 0.0
    %2783 = vadd.xlane.f32.xlu0 %v2782
    %v2784 = vpop.xlane.xlu0 %2783
    %v2785 = vsel %vm2667, %v2747, 0.0
    %2786 = vadd.xlane.f32.xlu0 %v2785
    %v2787 = vpop.xlane.xlu0 %2786
    %v2788 = vsel %vm2667, %v2749, 0.0
    %2789 = vadd.xlane.f32.xlu0 %v2788
    %v2790 = vpop.xlane.xlu0 %2789
    %v2791 = vsel %vm2667, %v2751, 0.0
    %2792 = vadd.xlane.f32.xlu0 %v2791
    %v2793 = vpop.xlane.xlu0 %2792
    %v2794 = vsel %vm2667, %v2753, 0.0
    %2795 = vadd.xlane.f32.xlu0 %v2794
    %v2796 = vpop.xlane.xlu0 %2795
    %v2797 = vsel %vm2667, %v2755, 0.0
    %2798 = vadd.xlane.f32.xlu0 %v2797
    %v2799 = vpop.xlane.xlu0 %2798
    %v2800 = vsel %vm2667, %v2757, 0.0
    %2801 = vadd.xlane.f32.xlu0 %v2800
    %v2802 = vpop.xlane.xlu0 %2801
    %v2803 = vsel %vm2667, %v2759, 0.0
    %2804 = vadd.xlane.f32.xlu0 %v2803
    %v2805 = vpop.xlane.xlu0 %2804
    %v2806 = vsel %vm2667, %v2761, 0.0
    %2807 = vadd.xlane.f32.xlu0 %v2806
    %v2808 = vpop.xlane.xlu0 %2807
    %v2809 = vsel %vm2667, %v2763, 0.0
    %2810 = vadd.xlane.f32.xlu0 %v2809
    %v2811 = vpop.xlane.xlu0 %2810
    %v2812 = vrcp.pop %v2766
    %v2813 = vrcp.pop %v2769
    %v2814 = vrcp.pop %v2772
    %v2815 = vrcp.pop %v2775
    %v2816 = vrcp.pop %v2778
    %v2817 = vrcp.pop %v2781
    %v2818 = vrcp.pop %v2784
    %v2819 = vrcp.pop %v2787
    %v2820 = vrcp.pop %v2790
    %v2821 = vrcp.pop %v2793
    %v2822 = vrcp.pop %v2796
    %v2823 = vrcp.pop %v2799
    %v2824 = vrcp.pop %v2802
    %v2825 = vrcp.pop %v2805
    %v2826 = vrcp.pop %v2808
    %v2827 = vrcp.pop %v2811
    %v2828 = vmul.f32 %v2733, %v2812
    %v2829 = vmul.f32 %v2735, %v2813
    %v2830 = vmul.f32 %v2737, %v2814
    %v2831 = vmul.f32 %v2739, %v2815
    %v2832 = vmul.f32 %v2741, %v2816
    %v2833 = vmul.f32 %v2743, %v2817
    %v2834 = vmul.f32 %v2745, %v2818
    %v2835 = vmul.f32 %v2747, %v2819
    %v2836 = vmul.f32 %v2749, %v2820
    %v2837 = vmul.f32 %v2751, %v2821
    %v2838 = vmul.f32 %v2753, %v2822
    %v2839 = vmul.f32 %v2755, %v2823
    %v2840 = vmul.f32 %v2757, %v2824
    %v2841 = vmul.f32 %v2759, %v2825
    %v2842 = vmul.f32 %v2761, %v2826
    %v2843 = vmul.f32 %v2763, %v2827
    %v2845 = vsel %vm2667, %v2828, 0
    %v2848 = vsel %vm2667, %v2829, 0
    %2850 = vmatprep.subr.mxu0 0.0
    %2851 = vmatpush1.msra.mxu0 %v1712
    %2852 = vmatprep.subr.mxu0 0.0
    %2853 = vmatpush1.msra.mxu0 %v1780
    %2854 = vmatprep.subr.mxu0 0.0
    %2855 = vmatpush1.msra.mxu0 0.0
    %2856 = vmatprep.subr.mxu0 0.0
    %2857 = vmatpush1.msra.mxu0 0.0
    %2858 = vmatprep.subr.mxu0 0.0
    %2859 = vmatpush1.msra.mxu0 0.0
    %2860 = vmatprep.subr.mxu0 0.0
    %2861 = vmatpush1.msra.mxu0 0.0
    %2862 = vmatprep.subr.mxu0 0.0
    %2863 = vmatpush1.msra.mxu0 0.0
    %2864 = vmatprep.subr.mxu0 0.0
    %2865 = vmatpush1.msra.mxu0 0.0
    %2866 = vmatprep.subr.mxu0 0.0
    %2867 = vmatpush1.msra.mxu0 0.0
    %2868 = vmatprep.subr.mxu0 0.0
    %2869 = vmatpush1.msra.mxu0 0.0
    %2870 = vmatprep.subr.mxu0 0.0
    %2871 = vmatpush1.msra.mxu0 0.0
    %2872 = vmatprep.subr.mxu0 0.0
    %2873 = vmatpush1.msra.mxu0 0.0
    %2874 = vmatprep.subr.mxu0 0.0
    %2875 = vmatpush1.msra.mxu0 0.0
    %2876 = vmatprep.subr.mxu0 0.0
    %2877 = vmatpush1.msra.mxu0 0.0
    %2878 = vmatprep.subr.mxu0 0.0
    %2879 = vmatpush1.msra.mxu0 0.0
    %2880 = vmatprep.subr.mxu0 0.0
    %2881 = vmatpush1.msra.mxu0 0.0
    %2882 = vmatprep.subr.mxu0 0.0
    %2883 = vmatpush1.msra.mxu0 0.0
    %2884 = vmatprep.subr.mxu0 0.0
    %2885 = vmatpush1.msra.mxu0 0.0
    %2886 = vmatprep.subr.mxu0 0.0
    %2887 = vmatpush1.msra.mxu0 0.0
    %2888 = vmatprep.subr.mxu0 0.0
    %2889 = vmatpush1.msra.mxu0 0.0
    %2890 = vmatprep.subr.mxu0 0.0
    %2891 = vmatpush1.msra.mxu0 0.0
    %2892 = vmatprep.subr.mxu0 0.0
    %2893 = vmatpush1.msra.mxu0 0.0
    %2894 = vmatprep.subr.mxu0 0.0
    %2895 = vmatpush1.msra.mxu0 0.0
    %2896 = vmatprep.subr.mxu0 0.0
    %2897 = vmatpush1.msra.mxu0 0.0
    %2898 = vmatprep.subr.mxu0 0.0
    %2899 = vmatpush1.msra.mxu0 0.0
    %2900 = vmatprep.subr.mxu0 0.0
    %2901 = vmatpush1.msra.mxu0 0.0
    %2902 = vmatprep.subr.mxu0 0.0
    %2903 = vmatpush1.msra.mxu0 0.0
    %2904 = vmatprep.subr.mxu0 0.0
    %2905 = vmatpush1.msra.mxu0 0.0
    %2906 = vmatprep.subr.mxu0 0.0
    %2907 = vmatpush1.msra.mxu0 0.0
    %2908 = vmatprep.subr.mxu0 0.0
    %2909 = vmatpush1.msra.mxu0 0.0
    %2910 = vmatprep.subr.mxu0 0.0
    %2911 = vmatpush1.msra.mxu0 0.0
    %2912 = vmatprep.subr.mxu0 0.0
    %2913 = vmatpush1.msra.mxu0 0.0
    %2914 = vmatprep.mubr.f32.mxu0 0.0
    %2915 = vmatmul.mubr.f32.gmra.mrb[0].mxu0 %v2845
    %v2916 = vpop.f32.mrb[0].mxu0
    %v2917 = vadd.f32 0.0, %v2916
    %v2918 = vpop.f32.mrb[0].mxu0
    %2919 = vmatprep.mubr.f32.mxu0 0.0
    %2920 = vmatmul.mubr.f32.gmra.mrb[0].mxu0 %v2848
    %v2921 = vpop.f32.mrb[0].mxu0
    %v2922 = vadd.f32 0.0, %v2921
    %v2923 = vpop.f32.mrb[0].mxu0
    %2924 = vdwg.mxu0
    %v2926 = vsel %vm2667, %v2830, 0
    %v2929 = vsel %vm2667, %v2831, 0
    %2931 = vmatprep.subr.mxu0 0.0
    %2932 = vmatpush1.msra.mxu0 %v1848
    %2933 = vmatprep.subr.mxu0 0.0
    %2934 = vmatpush1.msra.mxu0 %v1916
    %2935 = vmatprep.subr.mxu0 0.0
    %2936 = vmatpush1.msra.mxu0 0.0
    %2937 = vmatprep.subr.mxu0 0.0
    %2938 = vmatpush1.msra.mxu0 0.0
    %2939 = vmatprep.subr.mxu0 0.0
    %2940 = vmatpush1.msra.mxu0 0.0
    %2941 = vmatprep.subr.mxu0 0.0
    %2942 = vmatpush1.msra.mxu0 0.0
    %2943 = vmatprep.subr.mxu0 0.0
    %2944 = vmatpush1.msra.mxu0 0.0
    %2945 = vmatprep.subr.mxu0 0.0
    %2946 = vmatpush1.msra.mxu0 0.0
    %2947 = vmatprep.subr.mxu0 0.0
    %2948 = vmatpush1.msra.mxu0 0.0
    %2949 = vmatprep.subr.mxu0 0.0
    %2950 = vmatpush1.msra.mxu0 0.0
    %2951 = vmatprep.subr.mxu0 0.0
    %2952 = vmatpush1.msra.mxu0 0.0
    %2953 = vmatprep.subr.mxu0 0.0
    %2954 = vmatpush1.msra.mxu0 0.0
    %2955 = vmatprep.subr.mxu0 0.0
    %2956 = vmatpush1.msra.mxu0 0.0
    %2957 = vmatprep.subr.mxu0 0.0
    %2958 = vmatpush1.msra.mxu0 0.0
    %2959 = vmatprep.subr.mxu0 0.0
    %2960 = vmatpush1.msra.mxu0 0.0
    %2961 = vmatprep.subr.mxu0 0.0
    %2962 = vmatpush1.msra.mxu0 0.0
    %2963 = vmatprep.subr.mxu0 0.0
    %2964 = vmatpush1.msra.mxu0 0.0
    %2965 = vmatprep.subr.mxu0 0.0
    %2966 = vmatpush1.msra.mxu0 0.0
    %2967 = vmatprep.subr.mxu0 0.0
    %2968 = vmatpush1.msra.mxu0 0.0
    %2969 = vmatprep.subr.mxu0 0.0
    %2970 = vmatpush1.msra.mxu0 0.0
    %2971 = vmatprep.subr.mxu0 0.0
    %2972 = vmatpush1.msra.mxu0 0.0
    %2973 = vmatprep.subr.mxu0 0.0
    %2974 = vmatpush1.msra.mxu0 0.0
    %2975 = vmatprep.subr.mxu0 0.0
    %2976 = vmatpush1.msra.mxu0 0.0
    %2977 = vmatprep.subr.mxu0 0.0
    %2978 = vmatpush1.msra.mxu0 0.0
    %2979 = vmatprep.subr.mxu0 0.0
    %2980 = vmatpush1.msra.mxu0 0.0
    %2981 = vmatprep.subr.mxu0 0.0
    %2982 = vmatpush1.msra.mxu0 0.0
    %2983 = vmatprep.subr.mxu0 0.0
    %2984 = vmatpush1.msra.mxu0 0.0
    %2985 = vmatprep.subr.mxu0 0.0
    %2986 = vmatpush1.msra.mxu0 0.0
    %2987 = vmatprep.subr.mxu0 0.0
    %2988 = vmatpush1.msra.mxu0 0.0
    %2989 = vmatprep.subr.mxu0 0.0
    %2990 = vmatpush1.msra.mxu0 0.0
    %2991 = vmatprep.subr.mxu0 0.0
    %2992 = vmatpush1.msra.mxu0 0.0
    %2993 = vmatprep.subr.mxu0 0.0
    %2994 = vmatpush1.msra.mxu0 0.0
    %2995 = vmatprep.mubr.f32.mxu0 0.0
    %2996 = vmatmul.mubr.f32.gmra.mrb[0].mxu0 %v2926
    %v2997 = vpop.f32.mrb[0].mxu0
    %v2998 = vadd.f32 0.0, %v2997
    %v2999 = vpop.f32.mrb[0].mxu0
    %3000 = vmatprep.mubr.f32.mxu0 0.0
    %3001 = vmatmul.mubr.f32.gmra.mrb[0].mxu0 %v2929
    %v3002 = vpop.f32.mrb[0].mxu0
    %v3003 = vadd.f32 0.0, %v3002
    %v3004 = vpop.f32.mrb[0].mxu0
    %3005 = vdwg.mxu0
    %v3007 = vsel %vm2667, %v2832, 0
    %v3010 = vsel %vm2667, %v2833, 0
    %3012 = vmatprep.subr.mxu0 0.0
    %3013 = vmatpush1.msra.mxu0 %v1713
    %3014 = vmatprep.subr.mxu0 0.0
    %3015 = vmatpush1.msra.mxu0 %v1781
    %3016 = vmatprep.subr.mxu0 0.0
    %3017 = vmatpush1.msra.mxu0 0.0
    %3018 = vmatprep.subr.mxu0 0.0
    %3019 = vmatpush1.msra.mxu0 0.0
    %3020 = vmatprep.subr.mxu0 0.0
    %3021 = vmatpush1.msra.mxu0 0.0
    %3022 = vmatprep.subr.mxu0 0.0
    %3023 = vmatpush1.msra.mxu0 0.0
    %3024 = vmatprep.subr.mxu0 0.0
    %3025 = vmatpush1.msra.mxu0 0.0
    %3026 = vmatprep.subr.mxu0 0.0
    %3027 = vmatpush1.msra.mxu0 0.0
    %3028 = vmatprep.subr.mxu0 0.0
    %3029 = vmatpush1.msra.mxu0 0.0
    %3030 = vmatprep.subr.mxu0 0.0
    %3031 = vmatpush1.msra.mxu0 0.0
    %3032 = vmatprep.subr.mxu0 0.0
    %3033 = vmatpush1.msra.mxu0 0.0
    %3034 = vmatprep.subr.mxu0 0.0
    %3035 = vmatpush1.msra.mxu0 0.0
    %3036 = vmatprep.subr.mxu0 0.0
    %3037 = vmatpush1.msra.mxu0 0.0
    %3038 = vmatprep.subr.mxu0 0.0
    %3039 = vmatpush1.msra.mxu0 0.0
    %3040 = vmatprep.subr.mxu0 0.0
    %3041 = vmatpush1.msra.mxu0 0.0
    %3042 = vmatprep.subr.mxu0 0.0
    %3043 = vmatpush1.msra.mxu0 0.0
    %3044 = vmatprep.subr.mxu0 0.0
    %3045 = vmatpush1.msra.mxu0 0.0
    %3046 = vmatprep.subr.mxu0 0.0
    %3047 = vmatpush1.msra.mxu0 0.0
    %3048 = vmatprep.subr.mxu0 0.0
    %3049 = vmatpush1.msra.mxu0 0.0
    %3050 = vmatprep.subr.mxu0 0.0
    %3051 = vmatpush1.msra.mxu0 0.0
    %3052 = vmatprep.subr.mxu0 0.0
    %3053 = vmatpush1.msra.mxu0 0.0
    %3054 = vmatprep.subr.mxu0 0.0
    %3055 = vmatpush1.msra.mxu0 0.0
    %3056 = vmatprep.subr.mxu0 0.0
    %3057 = vmatpush1.msra.mxu0 0.0
    %3058 = vmatprep.subr.mxu0 0.0
    %3059 = vmatpush1.msra.mxu0 0.0
    %3060 = vmatprep.subr.mxu0 0.0
    %3061 = vmatpush1.msra.mxu0 0.0
    %3062 = vmatprep.subr.mxu0 0.0
    %3063 = vmatpush1.msra.mxu0 0.0
    %3064 = vmatprep.subr.mxu0 0.0
    %3065 = vmatpush1.msra.mxu0 0.0
    %3066 = vmatprep.subr.mxu0 0.0
    %3067 = vmatpush1.msra.mxu0 0.0
    %3068 = vmatprep.subr.mxu0 0.0
    %3069 = vmatpush1.msra.mxu0 0.0
    %3070 = vmatprep.subr.mxu0 0.0
    %3071 = vmatpush1.msra.mxu0 0.0
    %3072 = vmatprep.subr.mxu0 0.0
    %3073 = vmatpush1.msra.mxu0 0.0
    %3074 = vmatprep.subr.mxu0 0.0
    %3075 = vmatpush1.msra.mxu0 0.0
    %3076 = vmatprep.mubr.f32.mxu0 0.0
    %3077 = vmatmul.mubr.f32.gmra.mrb[0].mxu0 %v3007
    %v3078 = vpop.f32.mrb[0].mxu0
    %v3079 = vadd.f32 0.0, %v3078
    %v3080 = vpop.f32.mrb[0].mxu0
    %3081 = vmatprep.mubr.f32.mxu0 0.0
    %3082 = vmatmul.mubr.f32.gmra.mrb[0].mxu0 %v3010
    %v3083 = vpop.f32.mrb[0].mxu0
    %v3084 = vadd.f32 0.0, %v3083
    %v3085 = vpop.f32.mrb[0].mxu0
    %3086 = vdwg.mxu0
    %v3088 = vsel %vm2667, %v2834, 0
    %v3091 = vsel %vm2667, %v2835, 0
    %3093 = vmatprep.subr.mxu0 0.0
    %3094 = vmatpush1.msra.mxu0 %v1849
    %3095 = vmatprep.subr.mxu0 0.0
    %3096 = vmatpush1.msra.mxu0 %v1917
    %3097 = vmatprep.subr.mxu0 0.0
    %3098 = vmatpush1.msra.mxu0 0.0
    %3099 = vmatprep.subr.mxu0 0.0
    %3100 = vmatpush1.msra.mxu0 0.0
    %3101 = vmatprep.subr.mxu0 0.0
    %3102 = vmatpush1.msra.mxu0 0.0
    %3103 = vmatprep.subr.mxu0 0.0
    %3104 = vmatpush1.msra.mxu0 0.0
    %3105 = vmatprep.subr.mxu0 0.0
    %3106 = vmatpush1.msra.mxu0 0.0
    %3107 = vmatprep.subr.mxu0 0.0
    %3108 = vmatpush1.msra.mxu0 0.0
    %3109 = vmatprep.subr.mxu0 0.0
    %3110 = vmatpush1.msra.mxu0 0.0
    %3111 = vmatprep.subr.mxu0 0.0
    %3112 = vmatpush1.msra.mxu0 0.0
    %3113 = vmatprep.subr.mxu0 0.0
    %3114 = vmatpush1.msra.mxu0 0.0
    %3115 = vmatprep.subr.mxu0 0.0
    %3116 = vmatpush1.msra.mxu0 0.0
    %3117 = vmatprep.subr.mxu0 0.0
    %3118 = vmatpush1.msra.mxu0 0.0
    %3119 = vmatprep.subr.mxu0 0.0
    %3120 = vmatpush1.msra.mxu0 0.0
    %3121 = vmatprep.subr.mxu0 0.0
    %3122 = vmatpush1.msra.mxu0 0.0
    %3123 = vmatprep.subr.mxu0 0.0
    %3124 = vmatpush1.msra.mxu0 0.0
    %3125 = vmatprep.subr.mxu0 0.0
    %3126 = vmatpush1.msra.mxu0 0.0
    %3127 = vmatprep.subr.mxu0 0.0
    %3128 = vmatpush1.msra.mxu0 0.0
    %3129 = vmatprep.subr.mxu0 0.0
    %3130 = vmatpush1.msra.mxu0 0.0
    %3131 = vmatprep.subr.mxu0 0.0
    %3132 = vmatpush1.msra.mxu0 0.0
    %3133 = vmatprep.subr.mxu0 0.0
    %3134 = vmatpush1.msra.mxu0 0.0
    %3135 = vmatprep.subr.mxu0 0.0
    %3136 = vmatpush1.msra.mxu0 0.0
    %3137 = vmatprep.subr.mxu0 0.0
    %3138 = vmatpush1.msra.mxu0 0.0
    %3139 = vmatprep.subr.mxu0 0.0
    %3140 = vmatpush1.msra.mxu0 0.0
    %3141 = vmatprep.subr.mxu0 0.0
    %3142 = vmatpush1.msra.mxu0 0.0
    %3143 = vmatprep.subr.mxu0 0.0
    %3144 = vmatpush1.msra.mxu0 0.0
    %3145 = vmatprep.subr.mxu0 0.0
    %3146 = vmatpush1.msra.mxu0 0.0
    %3147 = vmatprep.subr.mxu0 0.0
    %3148 = vmatpush1.msra.mxu0 0.0
    %3149 = vmatprep.subr.mxu0 0.0
    %3150 = vmatpush1.msra.mxu0 0.0
    %3151 = vmatprep.subr.mxu0 0.0
    %3152 = vmatpush1.msra.mxu0 0.0
    %3153 = vmatprep.subr.mxu0 0.0
    %3154 = vmatpush1.msra.mxu0 0.0
    %3155 = vmatprep.subr.mxu0 0.0
    %3156 = vmatpush1.msra.mxu0 0.0
    %3157 = vmatprep.mubr.f32.mxu0 0.0
    %3158 = vmatmul.mubr.f32.gmra.mrb[0].mxu0 %v3088
    %v3159 = vpop.f32.mrb[0].mxu0
    %v3160 = vadd.f32 0.0, %v3159
    %v3161 = vpop.f32.mrb[0].mxu0
    %3162 = vmatprep.mubr.f32.mxu0 0.0
    %3163 = vmatmul.mubr.f32.gmra.mrb[0].mxu0 %v3091
    %v3164 = vpop.f32.mrb[0].mxu0
    %v3165 = vadd.f32 0.0, %v3164
    %v3166 = vpop.f32.mrb[0].mxu0
    %3167 = vdwg.mxu0
    %v3169 = vsel %vm2667, %v2836, 0
    %v3172 = vsel %vm2667, %v2837, 0
    %3174 = vmatprep.subr.mxu0 0.0
    %3175 = vmatpush1.msra.mxu0 %v1714
    %3176 = vmatprep.subr.mxu0 0.0
    %3177 = vmatpush1.msra.mxu0 %v1782
    %3178 = vmatprep.subr.mxu0 0.0
    %3179 = vmatpush1.msra.mxu0 0.0
    %3180 = vmatprep.subr.mxu0 0.0
    %3181 = vmatpush1.msra.mxu0 0.0
    %3182 = vmatprep.subr.mxu0 0.0
    %3183 = vmatpush1.msra.mxu0 0.0
    %3184 = vmatprep.subr.mxu0 0.0
    %3185 = vmatpush1.msra.mxu0 0.0
    %3186 = vmatprep.subr.mxu0 0.0
    %3187 = vmatpush1.msra.mxu0 0.0
    %3188 = vmatprep.subr.mxu0 0.0
    %3189 = vmatpush1.msra.mxu0 0.0
    %3190 = vmatprep.subr.mxu0 0.0
    %3191 = vmatpush1.msra.mxu0 0.0
    %3192 = vmatprep.subr.mxu0 0.0
    %3193 = vmatpush1.msra.mxu0 0.0
    %3194 = vmatprep.subr.mxu0 0.0
    %3195 = vmatpush1.msra.mxu0 0.0
    %3196 = vmatprep.subr.mxu0 0.0
    %3197 = vmatpush1.msra.mxu0 0.0
    %3198 = vmatprep.subr.mxu0 0.0
    %3199 = vmatpush1.msra.mxu0 0.0
    %3200 = vmatprep.subr.mxu0 0.0
    %3201 = vmatpush1.msra.mxu0 0.0
    %3202 = vmatprep.subr.mxu0 0.0
    %3203 = vmatpush1.msra.mxu0 0.0
    %3204 = vmatprep.subr.mxu0 0.0
    %3205 = vmatpush1.msra.mxu0 0.0
    %3206 = vmatprep.subr.mxu0 0.0
    %3207 = vmatpush1.msra.mxu0 0.0
    %3208 = vmatprep.subr.mxu0 0.0
    %3209 = vmatpush1.msra.mxu0 0.0
    %3210 = vmatprep.subr.mxu0 0.0
    %3211 = vmatpush1.msra.mxu0 0.0
    %3212 = vmatprep.subr.mxu0 0.0
    %3213 = vmatpush1.msra.mxu0 0.0
    %3214 = vmatprep.subr.mxu0 0.0
    %3215 = vmatpush1.msra.mxu0 0.0
    %3216 = vmatprep.subr.mxu0 0.0
    %3217 = vmatpush1.msra.mxu0 0.0
    %3218 = vmatprep.subr.mxu0 0.0
    %3219 = vmatpush1.msra.mxu0 0.0
    %3220 = vmatprep.subr.mxu0 0.0
    %3221 = vmatpush1.msra.mxu0 0.0
    %3222 = vmatprep.subr.mxu0 0.0
    %3223 = vmatpush1.msra.mxu0 0.0
    %3224 = vmatprep.subr.mxu0 0.0
    %3225 = vmatpush1.msra.mxu0 0.0
    %3226 = vmatprep.subr.mxu0 0.0
    %3227 = vmatpush1.msra.mxu0 0.0
    %3228 = vmatprep.subr.mxu0 0.0
    %3229 = vmatpush1.msra.mxu0 0.0
    %3230 = vmatprep.subr.mxu0 0.0
    %3231 = vmatpush1.msra.mxu0 0.0
    %3232 = vmatprep.subr.mxu0 0.0
    %3233 = vmatpush1.msra.mxu0 0.0
    %3234 = vmatprep.subr.mxu0 0.0
    %3235 = vmatpush1.msra.mxu0 0.0
    %3236 = vmatprep.subr.mxu0 0.0
    %3237 = vmatpush1.msra.mxu0 0.0
    %3238 = vmatprep.mubr.f32.mxu0 0.0
    %3239 = vmatmul.mubr.f32.gmra.mrb[0].mxu0 %v3169
    %v3240 = vpop.f32.mrb[0].mxu0
    %v3241 = vadd.f32 0.0, %v3240
    %v3242 = vpop.f32.mrb[0].mxu0
    %3243 = vmatprep.mubr.f32.mxu0 0.0
    %3244 = vmatmul.mubr.f32.gmra.mrb[0].mxu0 %v3172
    %v3245 = vpop.f32.mrb[0].mxu0
    %v3246 = vadd.f32 0.0, %v3245
    %v3247 = vpop.f32.mrb[0].mxu0
    %3248 = vdwg.mxu0
    %v3250 = vsel %vm2667, %v2838, 0
    %v3253 = vsel %vm2667, %v2839, 0
    %3255 = vmatprep.subr.mxu0 0.0
    %3256 = vmatpush1.msra.mxu0 %v1850
    %3257 = vmatprep.subr.mxu0 0.0
    %3258 = vmatpush1.msra.mxu0 %v1918
    %3259 = vmatprep.subr.mxu0 0.0
    %3260 = vmatpush1.msra.mxu0 0.0
    %3261 = vmatprep.subr.mxu0 0.0
    %3262 = vmatpush1.msra.mxu0 0.0
    %3263 = vmatprep.subr.mxu0 0.0
    %3264 = vmatpush1.msra.mxu0 0.0
    %3265 = vmatprep.subr.mxu0 0.0
    %3266 = vmatpush1.msra.mxu0 0.0
    %3267 = vmatprep.subr.mxu0 0.0
    %3268 = vmatpush1.msra.mxu0 0.0
    %3269 = vmatprep.subr.mxu0 0.0
    %3270 = vmatpush1.msra.mxu0 0.0
    %3271 = vmatprep.subr.mxu0 0.0
    %3272 = vmatpush1.msra.mxu0 0.0
    %3273 = vmatprep.subr.mxu0 0.0
    %3274 = vmatpush1.msra.mxu0 0.0
    %3275 = vmatprep.subr.mxu0 0.0
    %3276 = vmatpush1.msra.mxu0 0.0
    %3277 = vmatprep.subr.mxu0 0.0
    %3278 = vmatpush1.msra.mxu0 0.0
    %3279 = vmatprep.subr.mxu0 0.0
    %3280 = vmatpush1.msra.mxu0 0.0
    %3281 = vmatprep.subr.mxu0 0.0
    %3282 = vmatpush1.msra.mxu0 0.0
    %3283 = vmatprep.subr.mxu0 0.0
    %3284 = vmatpush1.msra.mxu0 0.0
    %3285 = vmatprep.subr.mxu0 0.0
    %3286 = vmatpush1.msra.mxu0 0.0
    %3287 = vmatprep.subr.mxu0 0.0
    %3288 = vmatpush1.msra.mxu0 0.0
    %3289 = vmatprep.subr.mxu0 0.0
    %3290 = vmatpush1.msra.mxu0 0.0
    %3291 = vmatprep.subr.mxu0 0.0
    %3292 = vmatpush1.msra.mxu0 0.0
    %3293 = vmatprep.subr.mxu0 0.0
    %3294 = vmatpush1.msra.mxu0 0.0
    %3295 = vmatprep.subr.mxu0 0.0
    %3296 = vmatpush1.msra.mxu0 0.0
    %3297 = vmatprep.subr.mxu0 0.0
    %3298 = vmatpush1.msra.mxu0 0.0
    %3299 = vmatprep.subr.mxu0 0.0
    %3300 = vmatpush1.msra.mxu0 0.0
    %3301 = vmatprep.subr.mxu0 0.0
    %3302 = vmatpush1.msra.mxu0 0.0
    %3303 = vmatprep.subr.mxu0 0.0
    %3304 = vmatpush1.msra.mxu0 0.0
    %3305 = vmatprep.subr.mxu0 0.0
    %3306 = vmatpush1.msra.mxu0 0.0
    %3307 = vmatprep.subr.mxu0 0.0
    %3308 = vmatpush1.msra.mxu0 0.0
    %3309 = vmatprep.subr.mxu0 0.0
    %3310 = vmatpush1.msra.mxu0 0.0
    %3311 = vmatprep.subr.mxu0 0.0
    %3312 = vmatpush1.msra.mxu0 0.0
    %3313 = vmatprep.subr.mxu0 0.0
    %3314 = vmatpush1.msra.mxu0 0.0
    %3315 = vmatprep.subr.mxu0 0.0
    %3316 = vmatpush1.msra.mxu0 0.0
    %3317 = vmatprep.subr.mxu0 0.0
    %3318 = vmatpush1.msra.mxu0 0.0
    %3319 = vmatprep.mubr.f32.mxu0 0.0
    %3320 = vmatmul.mubr.f32.gmra.mrb[0].mxu0 %v3250
    %v3321 = vpop.f32.mrb[0].mxu0
    %v3322 = vadd.f32 0.0, %v3321
    %v3323 = vpop.f32.mrb[0].mxu0
    %3324 = vmatprep.mubr.f32.mxu0 0.0
    %3325 = vmatmul.mubr.f32.gmra.mrb[0].mxu0 %v3253
    %v3326 = vpop.f32.mrb[0].mxu0
    %v3327 = vadd.f32 0.0, %v3326
    %v3328 = vpop.f32.mrb[0].mxu0
    %3329 = vdwg.mxu0
    %v3331 = vsel %vm2667, %v2840, 0
    %v3334 = vsel %vm2667, %v2841, 0
    %3336 = vmatprep.subr.mxu0 0.0
    %3337 = vmatpush1.msra.mxu0 %v1715
    %3338 = vmatprep.subr.mxu0 0.0
    %3339 = vmatpush1.msra.mxu0 %v1783
    %3340 = vmatprep.subr.mxu0 0.0
    %3341 = vmatpush1.msra.mxu0 0.0
    %3342 = vmatprep.subr.mxu0 0.0
    %3343 = vmatpush1.msra.mxu0 0.0
    %3344 = vmatprep.subr.mxu0 0.0
    %3345 = vmatpush1.msra.mxu0 0.0
    %3346 = vmatprep.subr.mxu0 0.0
    %3347 = vmatpush1.msra.mxu0 0.0
    %3348 = vmatprep.subr.mxu0 0.0
    %3349 = vmatpush1.msra.mxu0 0.0
    %3350 = vmatprep.subr.mxu0 0.0
    %3351 = vmatpush1.msra.mxu0 0.0
    %3352 = vmatprep.subr.mxu0 0.0
    %3353 = vmatpush1.msra.mxu0 0.0
    %3354 = vmatprep.subr.mxu0 0.0
    %3355 = vmatpush1.msra.mxu0 0.0
    %3356 = vmatprep.subr.mxu0 0.0
    %3357 = vmatpush1.msra.mxu0 0.0
    %3358 = vmatprep.subr.mxu0 0.0
    %3359 = vmatpush1.msra.mxu0 0.0
    %3360 = vmatprep.subr.mxu0 0.0
    %3361 = vmatpush1.msra.mxu0 0.0
    %3362 = vmatprep.subr.mxu0 0.0
    %3363 = vmatpush1.msra.mxu0 0.0
    %3364 = vmatprep.subr.mxu0 0.0
    %3365 = vmatpush1.msra.mxu0 0.0
    %3366 = vmatprep.subr.mxu0 0.0
    %3367 = vmatpush1.msra.mxu0 0.0
    %3368 = vmatprep.subr.mxu0 0.0
    %3369 = vmatpush1.msra.mxu0 0.0
    %3370 = vmatprep.subr.mxu0 0.0
    %3371 = vmatpush1.msra.mxu0 0.0
    %3372 = vmatprep.subr.mxu0 0.0
    %3373 = vmatpush1.msra.mxu0 0.0
    %3374 = vmatprep.subr.mxu0 0.0
    %3375 = vmatpush1.msra.mxu0 0.0
    %3376 = vmatprep.subr.mxu0 0.0
    %3377 = vmatpush1.msra.mxu0 0.0
    %3378 = vmatprep.subr.mxu0 0.0
    %3379 = vmatpush1.msra.mxu0 0.0
    %3380 = vmatprep.subr.mxu0 0.0
    %3381 = vmatpush1.msra.mxu0 0.0
    %3382 = vmatprep.subr.mxu0 0.0
    %3383 = vmatpush1.msra.mxu0 0.0
    %3384 = vmatprep.subr.mxu0 0.0
    %3385 = vmatpush1.msra.mxu0 0.0
    %3386 = vmatprep.subr.mxu0 0.0
    %3387 = vmatpush1.msra.mxu0 0.0
    %3388 = vmatprep.subr.mxu0 0.0
    %3389 = vmatpush1.msra.mxu0 0.0
    %3390 = vmatprep.subr.mxu0 0.0
    %3391 = vmatpush1.msra.mxu0 0.0
    %3392 = vmatprep.subr.mxu0 0.0
    %3393 = vmatpush1.msra.mxu0 0.0
    %3394 = vmatprep.subr.mxu0 0.0
    %3395 = vmatpush1.msra.mxu0 0.0
    %3396 = vmatprep.subr.mxu0 0.0
    %3397 = vmatpush1.msra.mxu0 0.0
    %3398 = vmatprep.subr.mxu0 0.0
    %3399 = vmatpush1.msra.mxu0 0.0
    %3400 = vmatprep.mubr.f32.mxu0 0.0
    %3401 = vmatmul.mubr.f32.gmra.mrb[0].mxu0 %v3331
    %v3402 = vpop.f32.mrb[0].mxu0
    %v3403 = vadd.f32 0.0, %v3402
    %v3404 = vpop.f32.mrb[0].mxu0
    %3405 = vmatprep.mubr.f32.mxu0 0.0
    %3406 = vmatmul.mubr.f32.gmra.mrb[0].mxu0 %v3334
    %v3407 = vpop.f32.mrb[0].mxu0
    %v3408 = vadd.f32 0.0, %v3407
    %v3409 = vpop.f32.mrb[0].mxu0
    %3410 = vdwg.mxu0
    %v3412 = vsel %vm2667, %v2842, 0
    %v3415 = vsel %vm2667, %v2843, 0
    %3417 = vmatprep.subr.mxu0 0.0
    %3418 = vmatpush1.msra.mxu0 %v1851
    %3419 = vmatprep.subr.mxu0 0.0
    %3420 = vmatpush1.msra.mxu0 %v1919
    %3421 = vmatprep.subr.mxu0 0.0
    %3422 = vmatpush1.msra.mxu0 0.0
    %3423 = vmatprep.subr.mxu0 0.0
    %3424 = vmatpush1.msra.mxu0 0.0
    %3425 = vmatprep.subr.mxu0 0.0
    %3426 = vmatpush1.msra.mxu0 0.0
    %3427 = vmatprep.subr.mxu0 0.0
    %3428 = vmatpush1.msra.mxu0 0.0
    %3429 = vmatprep.subr.mxu0 0.0
    %3430 = vmatpush1.msra.mxu0 0.0
    %3431 = vmatprep.subr.mxu0 0.0
    %3432 = vmatpush1.msra.mxu0 0.0
    %3433 = vmatprep.subr.mxu0 0.0
    %3434 = vmatpush1.msra.mxu0 0.0
    %3435 = vmatprep.subr.mxu0 0.0
    %3436 = vmatpush1.msra.mxu0 0.0
    %3437 = vmatprep.subr.mxu0 0.0
    %3438 = vmatpush1.msra.mxu0 0.0
    %3439 = vmatprep.subr.mxu0 0.0
    %3440 = vmatpush1.msra.mxu0 0.0
    %3441 = vmatprep.subr.mxu0 0.0
    %3442 = vmatpush1.msra.mxu0 0.0
    %3443 = vmatprep.subr.mxu0 0.0
    %3444 = vmatpush1.msra.mxu0 0.0
    %3445 = vmatprep.subr.mxu0 0.0
    %3446 = vmatpush1.msra.mxu0 0.0
    %3447 = vmatprep.subr.mxu0 0.0
    %3448 = vmatpush1.msra.mxu0 0.0
    %3449 = vmatprep.subr.mxu0 0.0
    %3450 = vmatpush1.msra.mxu0 0.0
    %3451 = vmatprep.subr.mxu0 0.0
    %3452 = vmatpush1.msra.mxu0 0.0
    %3453 = vmatprep.subr.mxu0 0.0
    %3454 = vmatpush1.msra.mxu0 0.0
    %3455 = vmatprep.subr.mxu0 0.0
    %3456 = vmatpush1.msra.mxu0 0.0
    %3457 = vmatprep.subr.mxu0 0.0
    %3458 = vmatpush1.msra.mxu0 0.0
    %3459 = vmatprep.subr.mxu0 0.0
    %3460 = vmatpush1.msra.mxu0 0.0
    %3461 = vmatprep.subr.mxu0 0.0
    %3462 = vmatpush1.msra.mxu0 0.0
    %3463 = vmatprep.subr.mxu0 0.0
    %3464 = vmatpush1.msra.mxu0 0.0
    %3465 = vmatprep.subr.mxu0 0.0
    %3466 = vmatpush1.msra.mxu0 0.0
    %3467 = vmatprep.subr.mxu0 0.0
    %3468 = vmatpush1.msra.mxu0 0.0
    %3469 = vmatprep.subr.mxu0 0.0
    %3470 = vmatpush1.msra.mxu0 0.0
    %3471 = vmatprep.subr.mxu0 0.0
    %3472 = vmatpush1.msra.mxu0 0.0
    %3473 = vmatprep.subr.mxu0 0.0
    %3474 = vmatpush1.msra.mxu0 0.0
    %3475 = vmatprep.subr.mxu0 0.0
    %3476 = vmatpush1.msra.mxu0 0.0
    %3477 = vmatprep.subr.mxu0 0.0
    %3478 = vmatpush1.msra.mxu0 0.0
    %3479 = vmatprep.subr.mxu0 0.0
    %3480 = vmatpush1.msra.mxu0 0.0
    %3481 = vmatprep.mubr.f32.mxu0 0.0
    %3482 = vmatmul.mubr.f32.gmra.mrb[0].mxu0 %v3412
    %v3483 = vpop.f32.mrb[0].mxu0
    %v3484 = vadd.f32 0.0, %v3483
    %v3485 = vpop.f32.mrb[0].mxu0
    %3486 = vmatprep.mubr.f32.mxu0 0.0
    %3487 = vmatmul.mubr.f32.gmra.mrb[0].mxu0 %v3415
    %v3488 = vpop.f32.mrb[0].mxu0
    %v3489 = vadd.f32 0.0, %v3488
    %v3490 = vpop.f32.mrb[0].mxu0
    %3491 = vdwg.mxu0
    %v3492 = vcombine.low %v2917, %v3241
    %v3493 = vcombine.high %v2917, %v3241
    %v3495 = vunpack.c.l.s4 1983009808
    %v3496 = vunpack.c.0.s8 %v3495
    %v3497 = vlaneseq
    %v3498 = vshrl.u32 %v3497, 7
    %v3499 = vsub.s32 %v3496, %v3498
    %v3500 = vrot.slane %v3492, %v3499
    %v3502 = vunpack.c.l.s4 1983009808
    %v3503 = vunpack.c.0.s8 %v3502
    %v3504 = vlaneseq
    %v3505 = vshrl.u32 %v3504, 7
    %v3506 = vsub.s32 %v3503, %v3505
    %v3507 = vrot.slane %v3493, %v3506
    %v3508 = vcombine.low %v3079, %v3403
    %v3509 = vcombine.high %v3079, %v3403
    %v3511 = vunpack.c.l.s4 1983009808
    %v3512 = vunpack.c.0.s8 %v3511
    %v3513 = vlaneseq
    %v3514 = vshrl.u32 %v3513, 7
    %v3515 = vsub.s32 %v3512, %v3514
    %v3516 = vrot.slane %v3508, %v3515
    %v3518 = vunpack.c.l.s4 1983009808
    %v3519 = vunpack.c.0.s8 %v3518
    %v3520 = vlaneseq
    %v3521 = vshrl.u32 %v3520, 7
    %v3522 = vsub.s32 %v3519, %v3521
    %v3523 = vrot.slane %v3509, %v3522
    %v3524 = vcombine.low %v3500, %v3516
    %v3525 = vcombine.high %v3500, %v3516
    %v3527 = vunpack.c.l.s4 1934713408
    %v3528 = vunpack.c.0.s8 %v3527
    %v3529 = vlaneseq
    %v3530 = vshrl.u32 %v3529, 7
    %v3531 = vsub.s32 %v3528, %v3530
    %v3532 = vrot.slane %v3524, %v3531
    %v3534 = vunpack.c.l.s4 1934713408
    %v3535 = vunpack.c.0.s8 %v3534
    %v3536 = vlaneseq
    %v3537 = vshrl.u32 %v3536, 7
    %v3538 = vsub.s32 %v3535, %v3537
    %v3539 = vrot.slane %v3525, %v3538
    %v3540 = vcombine.low %v3507, %v3523
    %v3541 = vcombine.high %v3507, %v3523
    %v3543 = vunpack.c.l.s4 1934713408
    %v3544 = vunpack.c.0.s8 %v3543
    %v3545 = vlaneseq
    %v3546 = vshrl.u32 %v3545, 7
    %v3547 = vsub.s32 %v3544, %v3546
    %v3548 = vrot.slane %v3540, %v3547
    %v3550 = vunpack.c.l.s4 1934713408
    %v3551 = vunpack.c.0.s8 %v3550
    %v3552 = vlaneseq
    %v3553 = vshrl.u32 %v3552, 7
    %v3554 = vsub.s32 %v3551, %v3553
    %v3555 = vrot.slane %v3541, %v3554
    %v3556 = vcombine.high %v3532, 0.0
    %v3557 = vcombine.high %v3539, 0.0
    %v3558 = vcombine.high %v3548, 0.0
    %v3559 = vcombine.high %v3555, 0.0
    %v3560 = vcombine.low %v2922, %v3246
    %v3561 = vcombine.high %v2922, %v3246
    %v3563 = vunpack.c.l.s4 1983009808
    %v3564 = vunpack.c.0.s8 %v3563
    %v3565 = vlaneseq
    %v3566 = vshrl.u32 %v3565, 7
    %v3567 = vsub.s32 %v3564, %v3566
    %v3568 = vrot.slane %v3560, %v3567
    %v3570 = vunpack.c.l.s4 1983009808
    %v3571 = vunpack.c.0.s8 %v3570
    %v3572 = vlaneseq
    %v3573 = vshrl.u32 %v3572, 7
    %v3574 = vsub.s32 %v3571, %v3573
    %v3575 = vrot.slane %v3561, %v3574
    %v3576 = vcombine.low %v3084, %v3408
    %v3577 = vcombine.high %v3084, %v3408
    %v3579 = vunpack.c.l.s4 1983009808
    %v3580 = vunpack.c.0.s8 %v3579
    %v3581 = vlaneseq
    %v3582 = vshrl.u32 %v3581, 7
    %v3583 = vsub.s32 %v3580, %v3582
    %v3584 = vrot.slane %v3576, %v3583
    %v3586 = vunpack.c.l.s4 1983009808
    %v3587 = vunpack.c.0.s8 %v3586
    %v3588 = vlaneseq
    %v3589 = vshrl.u32 %v3588, 7
    %v3590 = vsub.s32 %v3587, %v3589
    %v3591 = vrot.slane %v3577, %v3590
    %v3592 = vcombine.low %v3568, %v3584
    %v3593 = vcombine.high %v3568, %v3584
    %v3595 = vunpack.c.l.s4 1934713408
    %v3596 = vunpack.c.0.s8 %v3595
    %v3597 = vlaneseq
    %v3598 = vshrl.u32 %v3597, 7
    %v3599 = vsub.s32 %v3596, %v3598
    %v3600 = vrot.slane %v3592, %v3599
    %v3602 = vunpack.c.l.s4 1934713408
    %v3603 = vunpack.c.0.s8 %v3602
    %v3604 = vlaneseq
    %v3605 = vshrl.u32 %v3604, 7
    %v3606 = vsub.s32 %v3603, %v3605
    %v3607 = vrot.slane %v3593, %v3606
    %v3608 = vcombine.low %v3575, %v3591
    %v3609 = vcombine.high %v3575, %v3591
    %v3611 = vunpack.c.l.s4 1934713408
    %v3612 = vunpack.c.0.s8 %v3611
    %v3613 = vlaneseq
    %v3614 = vshrl.u32 %v3613, 7
    %v3615 = vsub.s32 %v3612, %v3614
    %v3616 = vrot.slane %v3608, %v3615
    %v3618 = vunpack.c.l.s4 1934713408
    %v3619 = vunpack.c.0.s8 %v3618
    %v3620 = vlaneseq
    %v3621 = vshrl.u32 %v3620, 7
    %v3622 = vsub.s32 %v3619, %v3621
    %v3623 = vrot.slane %v3609, %v3622
    %v3624 = vcombine.high %v3600, 0.0
    %v3625 = vcombine.high %v3607, 0.0
    %v3626 = vcombine.high %v3616, 0.0
    %v3627 = vcombine.high %v3623, 0.0
    %v3628 = vcombine.low %v2998, %v3322
    %v3629 = vcombine.high %v2998, %v3322
    %v3631 = vunpack.c.l.s4 1983009808
    %v3632 = vunpack.c.0.s8 %v3631
    %v3633 = vlaneseq
    %v3634 = vshrl.u32 %v3633, 7
    %v3635 = vsub.s32 %v3632, %v3634
    %v3636 = vrot.slane %v3628, %v3635
    %v3638 = vunpack.c.l.s4 1983009808
    %v3639 = vunpack.c.0.s8 %v3638
    %v3640 = vlaneseq
    %v3641 = vshrl.u32 %v3640, 7
    %v3642 = vsub.s32 %v3639, %v3641
    %v3643 = vrot.slane %v3629, %v3642
    %v3644 = vcombine.low %v3160, %v3484
    %v3645 = vcombine.high %v3160, %v3484
    %v3647 = vunpack.c.l.s4 1983009808
    %v3648 = vunpack.c.0.s8 %v3647
    %v3649 = vlaneseq
    %v3650 = vshrl.u32 %v3649, 7
    %v3651 = vsub.s32 %v3648, %v3650
    %v3652 = vrot.slane %v3644, %v3651
    %v3654 = vunpack.c.l.s4 1983009808
    %v3655 = vunpack.c.0.s8 %v3654
    %v3656 = vlaneseq
    %v3657 = vshrl.u32 %v3656, 7
    %v3658 = vsub.s32 %v3655, %v3657
    %v3659 = vrot.slane %v3645, %v3658
    %v3660 = vcombine.low %v3636, %v3652
    %v3661 = vcombine.high %v3636, %v3652
    %v3663 = vunpack.c.l.s4 1934713408
    %v3664 = vunpack.c.0.s8 %v3663
    %v3665 = vlaneseq
    %v3666 = vshrl.u32 %v3665, 7
    %v3667 = vsub.s32 %v3664, %v3666
    %v3668 = vrot.slane %v3660, %v3667
    %v3670 = vunpack.c.l.s4 1934713408
    %v3671 = vunpack.c.0.s8 %v3670
    %v3672 = vlaneseq
    %v3673 = vshrl.u32 %v3672, 7
    %v3674 = vsub.s32 %v3671, %v3673
    %v3675 = vrot.slane %v3661, %v3674
    %v3676 = vcombine.low %v3643, %v3659
    %v3677 = vcombine.high %v3643, %v3659
    %v3679 = vunpack.c.l.s4 1934713408
    %v3680 = vunpack.c.0.s8 %v3679
    %v3681 = vlaneseq
    %v3682 = vshrl.u32 %v3681, 7
    %v3683 = vsub.s32 %v3680, %v3682
    %v3684 = vrot.slane %v3676, %v3683
    %v3686 = vunpack.c.l.s4 1934713408
    %v3687 = vunpack.c.0.s8 %v3686
    %v3688 = vlaneseq
    %v3689 = vshrl.u32 %v3688, 7
    %v3690 = vsub.s32 %v3687, %v3689
    %v3691 = vrot.slane %v3677, %v3690
    %v3692 = vcombine.high %v3668, 0.0
    %v3693 = vcombine.high %v3675, 0.0
    %v3694 = vcombine.high %v3684, 0.0
    %v3695 = vcombine.high %v3691, 0.0
    %v3696 = vcombine.low %v3003, %v3327
    %v3697 = vcombine.high %v3003, %v3327
    %v3699 = vunpack.c.l.s4 1983009808
    %v3700 = vunpack.c.0.s8 %v3699
    %v3701 = vlaneseq
    %v3702 = vshrl.u32 %v3701, 7
    %v3703 = vsub.s32 %v3700, %v3702
    %v3704 = vrot.slane %v3696, %v3703
    %v3706 = vunpack.c.l.s4 1983009808
    %v3707 = vunpack.c.0.s8 %v3706
    %v3708 = vlaneseq
    %v3709 = vshrl.u32 %v3708, 7
    %v3710 = vsub.s32 %v3707, %v3709
    %v3711 = vrot.slane %v3697, %v3710
    %v3712 = vcombine.low %v3165, %v3489
    %v3713 = vcombine.high %v3165, %v3489
    %v3715 = vunpack.c.l.s4 1983009808
    %v3716 = vunpack.c.0.s8 %v3715
    %v3717 = vlaneseq
    %v3718 = vshrl.u32 %v3717, 7
    %v3719 = vsub.s32 %v3716, %v3718
    %v3720 = vrot.slane %v3712, %v3719
    %v3722 = vunpack.c.l.s4 1983009808
    %v3723 = vunpack.c.0.s8 %v3722
    %v3724 = vlaneseq
    %v3725 = vshrl.u32 %v3724, 7
    %v3726 = vsub.s32 %v3723, %v3725
    %v3727 = vrot.slane %v3713, %v3726
    %v3728 = vcombine.low %v3704, %v3720
    %v3729 = vcombine.high %v3704, %v3720
    %v3731 = vunpack.c.l.s4 1934713408
    %v3732 = vunpack.c.0.s8 %v3731
    %v3733 = vlaneseq
    %v3734 = vshrl.u32 %v3733, 7
    %v3735 = vsub.s32 %v3732, %v3734
    %v3736 = vrot.slane %v3728, %v3735
    %v3738 = vunpack.c.l.s4 1934713408
    %v3739 = vunpack.c.0.s8 %v3738
    %v3740 = vlaneseq
    %v3741 = vshrl.u32 %v3740, 7
    %v3742 = vsub.s32 %v3739, %v3741
    %v3743 = vrot.slane %v3729, %v3742
    %v3744 = vcombine.low %v3711, %v3727
    %v3745 = vcombine.high %v3711, %v3727
    %v3747 = vunpack.c.l.s4 1934713408
    %v3748 = vunpack.c.0.s8 %v3747
    %v3749 = vlaneseq
    %v3750 = vshrl.u32 %v3749, 7
    %v3751 = vsub.s32 %v3748, %v3750
    %v3752 = vrot.slane %v3744, %v3751
    %v3754 = vunpack.c.l.s4 1934713408
    %v3755 = vunpack.c.0.s8 %v3754
    %v3756 = vlaneseq
    %v3757 = vshrl.u32 %v3756, 7
    %v3758 = vsub.s32 %v3755, %v3757
    %v3759 = vrot.slane %v3745, %v3758
    %v3760 = vcombine.high %v3736, 0.0
    %v3761 = vcombine.high %v3743, 0.0
    %v3762 = vcombine.high %v3752, 0.0
    %v3763 = vcombine.high %v3759, 0.0
    %v3764 = vcombine.low %v3532, %v3539
    %v3766 = vunpack.c.l.s4 1983009808
    %v3767 = vunpack.c.0.s8 %v3766
    %v3768 = vlaneseq
    %v3769 = vshrl.u32 %v3768, 7
    %v3770 = vsub.s32 %v3767, %v3769
    %v3771 = vrot.slane %v3764, %v3770
    %v3772 = vcombine.low %v3556, %v3557
    %v3774 = vunpack.c.l.s4 1983009808
    %v3775 = vunpack.c.0.s8 %v3774
    %v3776 = vlaneseq
    %v3777 = vshrl.u32 %v3776, 7
    %v3778 = vsub.s32 %v3775, %v3777
    %v3779 = vrot.slane %v3772, %v3778
    %v3780 = vcombine.low %v3548, %v3555
    %v3782 = vunpack.c.l.s4 1983009808
    %v3783 = vunpack.c.0.s8 %v3782
    %v3784 = vlaneseq
    %v3785 = vshrl.u32 %v3784, 7
    %v3786 = vsub.s32 %v3783, %v3785
    %v3787 = vrot.slane %v3780, %v3786
    %v3788 = vcombine.low %v3558, %v3559
    %v3790 = vunpack.c.l.s4 1983009808
    %v3791 = vunpack.c.0.s8 %v3790
    %v3792 = vlaneseq
    %v3793 = vshrl.u32 %v3792, 7
    %v3794 = vsub.s32 %v3791, %v3793
    %v3795 = vrot.slane %v3788, %v3794
    %v3796 = vcombine.low %v3771, %v3779
    %v3797 = vcombine.high %v3771, %v3779
    %v3799 = vunpack.c.l.s4 1934713408
    %v3800 = vunpack.c.0.s8 %v3799
    %v3801 = vlaneseq
    %v3802 = vshrl.u32 %v3801, 7
    %v3803 = vsub.s32 %v3800, %v3802
    %v3804 = vrot.slane %v3796, %v3803
    %v3806 = vunpack.c.l.s4 1934713408
    %v3807 = vunpack.c.0.s8 %v3806
    %v3808 = vlaneseq
    %v3809 = vshrl.u32 %v3808, 7
    %v3810 = vsub.s32 %v3807, %v3809
    %v3811 = vrot.slane %v3797, %v3810
    %v3812 = vcombine.low %v3787, %v3795
    %v3813 = vcombine.high %v3787, %v3795
    %v3815 = vunpack.c.l.s4 1934713408
    %v3816 = vunpack.c.0.s8 %v3815
    %v3817 = vlaneseq
    %v3818 = vshrl.u32 %v3817, 7
    %v3819 = vsub.s32 %v3816, %v3818
    %v3820 = vrot.slane %v3812, %v3819
    %v3822 = vunpack.c.l.s4 1934713408
    %v3823 = vunpack.c.0.s8 %v3822
    %v3824 = vlaneseq
    %v3825 = vshrl.u32 %v3824, 7
    %v3826 = vsub.s32 %v3823, %v3825
    %v3827 = vrot.slane %v3813, %v3826
    %v3828 = vcombine.low %v3804, %v3820
    %v3829 = vcombine.high %v3804, %v3820
    %v3830 = vcombine.low %v3811, %v3827
    %v3831 = vcombine.high %v3811, %v3827
    %v3832 = vcombine.low %v3600, %v3607
    %v3834 = vunpack.c.l.s4 1983009808
    %v3835 = vunpack.c.0.s8 %v3834
    %v3836 = vlaneseq
    %v3837 = vshrl.u32 %v3836, 7
    %v3838 = vsub.s32 %v3835, %v3837
    %v3839 = vrot.slane %v3832, %v3838
    %v3840 = vcombine.low %v3624, %v3625
    %v3842 = vunpack.c.l.s4 1983009808
    %v3843 = vunpack.c.0.s8 %v3842
    %v3844 = vlaneseq
    %v3845 = vshrl.u32 %v3844, 7
    %v3846 = vsub.s32 %v3843, %v3845
    %v3847 = vrot.slane %v3840, %v3846
    %v3848 = vcombine.low %v3616, %v3623
    %v3850 = vunpack.c.l.s4 1983009808
    %v3851 = vunpack.c.0.s8 %v3850
    %v3852 = vlaneseq
    %v3853 = vshrl.u32 %v3852, 7
    %v3854 = vsub.s32 %v3851, %v3853
    %v3855 = vrot.slane %v3848, %v3854
    %v3856 = vcombine.low %v3626, %v3627
    %v3858 = vunpack.c.l.s4 1983009808
    %v3859 = vunpack.c.0.s8 %v3858
    %v3860 = vlaneseq
    %v3861 = vshrl.u32 %v3860, 7
    %v3862 = vsub.s32 %v3859, %v3861
    %v3863 = vrot.slane %v3856, %v3862
    %v3864 = vcombine.low %v3839, %v3847
    %v3865 = vcombine.high %v3839, %v3847
    %v3867 = vunpack.c.l.s4 1934713408
    %v3868 = vunpack.c.0.s8 %v3867
    %v3869 = vlaneseq
    %v3870 = vshrl.u32 %v3869, 7
    %v3871 = vsub.s32 %v3868, %v3870
    %v3872 = vrot.slane %v3864, %v3871
    %v3874 = vunpack.c.l.s4 1934713408
    %v3875 = vunpack.c.0.s8 %v3874
    %v3876 = vlaneseq
    %v3877 = vshrl.u32 %v3876, 7
    %v3878 = vsub.s32 %v3875, %v3877
    %v3879 = vrot.slane %v3865, %v3878
    %v3880 = vcombine.low %v3855, %v3863
    %v3881 = vcombine.high %v3855, %v3863
    %v3883 = vunpack.c.l.s4 1934713408
    %v3884 = vunpack.c.0.s8 %v3883
    %v3885 = vlaneseq
    %v3886 = vshrl.u32 %v3885, 7
    %v3887 = vsub.s32 %v3884, %v3886
    %v3888 = vrot.slane %v3880, %v3887
    %v3890 = vunpack.c.l.s4 1934713408
    %v3891 = vunpack.c.0.s8 %v3890
    %v3892 = vlaneseq
    %v3893 = vshrl.u32 %v3892, 7
    %v3894 = vsub.s32 %v3891, %v3893
    %v3895 = vrot.slane %v3881, %v3894
    %v3896 = vcombine.low %v3872, %v3888
    %v3897 = vcombine.high %v3872, %v3888
    %v3898 = vcombine.low %v3879, %v3895
    %v3899 = vcombine.high %v3879, %v3895
    %v3900 = vcombine.low %v3668, %v3675
    %v3902 = vunpack.c.l.s4 1983009808
    %v3903 = vunpack.c.0.s8 %v3902
    %v3904 = vlaneseq
    %v3905 = vshrl.u32 %v3904, 7
    %v3906 = vsub.s32 %v3903, %v3905
    %v3907 = vrot.slane %v3900, %v3906
    %v3908 = vcombine.low %v3692, %v3693
    %v3910 = vunpack.c.l.s4 1983009808
    %v3911 = vunpack.c.0.s8 %v3910
    %v3912 = vlaneseq
    %v3913 = vshrl.u32 %v3912, 7
    %v3914 = vsub.s32 %v3911, %v3913
    %v3915 = vrot.slane %v3908, %v3914
    %v3916 = vcombine.low %v3684, %v3691
    %v3918 = vunpack.c.l.s4 1983009808
    %v3919 = vunpack.c.0.s8 %v3918
    %v3920 = vlaneseq
    %v3921 = vshrl.u32 %v3920, 7
    %v3922 = vsub.s32 %v3919, %v3921
    %v3923 = vrot.slane %v3916, %v3922
    %v3924 = vcombine.low %v3694, %v3695
    %v3926 = vunpack.c.l.s4 1983009808
    %v3927 = vunpack.c.0.s8 %v3926
    %v3928 = vlaneseq
    %v3929 = vshrl.u32 %v3928, 7
    %v3930 = vsub.s32 %v3927, %v3929
    %v3931 = vrot.slane %v3924, %v3930
    %v3932 = vcombine.low %v3907, %v3915
    %v3933 = vcombine.high %v3907, %v3915
    %v3935 = vunpack.c.l.s4 1934713408
    %v3936 = vunpack.c.0.s8 %v3935
    %v3937 = vlaneseq
    %v3938 = vshrl.u32 %v3937, 7
    %v3939 = vsub.s32 %v3936, %v3938
    %v3940 = vrot.slane %v3932, %v3939
    %v3942 = vunpack.c.l.s4 1934713408
    %v3943 = vunpack.c.0.s8 %v3942
    %v3944 = vlaneseq
    %v3945 = vshrl.u32 %v3944, 7
    %v3946 = vsub.s32 %v3943, %v3945
    %v3947 = vrot.slane %v3933, %v3946
    %v3948 = vcombine.low %v3923, %v3931
    %v3949 = vcombine.high %v3923, %v3931
    %v3951 = vunpack.c.l.s4 1934713408
    %v3952 = vunpack.c.0.s8 %v3951
    %v3953 = vlaneseq
    %v3954 = vshrl.u32 %v3953, 7
    %v3955 = vsub.s32 %v3952, %v3954
    %v3956 = vrot.slane %v3948, %v3955
    %v3958 = vunpack.c.l.s4 1934713408
    %v3959 = vunpack.c.0.s8 %v3958
    %v3960 = vlaneseq
    %v3961 = vshrl.u32 %v3960, 7
    %v3962 = vsub.s32 %v3959, %v3961
    %v3963 = vrot.slane %v3949, %v3962
    %v3964 = vcombine.low %v3940, %v3956
    %v3965 = vcombine.high %v3940, %v3956
    %v3966 = vcombine.low %v3947, %v3963
    %v3967 = vcombine.high %v3947, %v3963
    %v3968 = vcombine.low %v3736, %v3743
    %v3970 = vunpack.c.l.s4 1983009808
    %v3971 = vunpack.c.0.s8 %v3970
    %v3972 = vlaneseq
    %v3973 = vshrl.u32 %v3972, 7
    %v3974 = vsub.s32 %v3971, %v3973
    %v3975 = vrot.slane %v3968, %v3974
    %v3976 = vcombine.low %v3760, %v3761
    %v3978 = vunpack.c.l.s4 1983009808
    %v3979 = vunpack.c.0.s8 %v3978
    %v3980 = vlaneseq
    %v3981 = vshrl.u32 %v3980, 7
    %v3982 = vsub.s32 %v3979, %v3981
    %v3983 = vrot.slane %v3976, %v3982
    %v3984 = vcombine.low %v3752, %v3759
    %v3986 = vunpack.c.l.s4 1983009808
    %v3987 = vunpack.c.0.s8 %v3986
    %v3988 = vlaneseq
    %v3989 = vshrl.u32 %v3988, 7
    %v3990 = vsub.s32 %v3987, %v3989
    %v3991 = vrot.slane %v3984, %v3990
    %v3992 = vcombine.low %v3762, %v3763
    %v3994 = vunpack.c.l.s4 1983009808
    %v3995 = vunpack.c.0.s8 %v3994
    %v3996 = vlaneseq
    %v3997 = vshrl.u32 %v3996, 7
    %v3998 = vsub.s32 %v3995, %v3997
    %v3999 = vrot.slane %v3992, %v3998
    %v4000 = vcombine.low %v3975, %v3983
    %v4001 = vcombine.high %v3975, %v3983
    %v4003 = vunpack.c.l.s4 1934713408
    %v4004 = vunpack.c.0.s8 %v4003
    %v4005 = vlaneseq
    %v4006 = vshrl.u32 %v4005, 7
    %v4007 = vsub.s32 %v4004, %v4006
    %v4008 = vrot.slane %v4000, %v4007
    %v4010 = vunpack.c.l.s4 1934713408
    %v4011 = vunpack.c.0.s8 %v4010
    %v4012 = vlaneseq
    %v4013 = vshrl.u32 %v4012, 7
    %v4014 = vsub.s32 %v4011, %v4013
    %v4015 = vrot.slane %v4001, %v4014
    %v4016 = vcombine.low %v3991, %v3999
    %v4017 = vcombine.high %v3991, %v3999
    %v4019 = vunpack.c.l.s4 1934713408
    %v4020 = vunpack.c.0.s8 %v4019
    %v4021 = vlaneseq
    %v4022 = vshrl.u32 %v4021, 7
    %v4023 = vsub.s32 %v4020, %v4022
    %v4024 = vrot.slane %v4016, %v4023
    %v4026 = vunpack.c.l.s4 1934713408
    %v4027 = vunpack.c.0.s8 %v4026
    %v4028 = vlaneseq
    %v4029 = vshrl.u32 %v4028, 7
    %v4030 = vsub.s32 %v4027, %v4029
    %v4031 = vrot.slane %v4017, %v4030
    %v4032 = vcombine.low %v4008, %v4024
    %v4033 = vcombine.high %v4008, %v4024
    %v4034 = vcombine.low %v4015, %v4031
    %v4035 = vcombine.high %v4015, %v4031
    %4040 = vrot.lane.b32.xlu0 %v3829, 8
    %v4041 = vpop.permute.xlu0 %4040
    %4042 = vrot.lane.b32.xlu0 %v3897, 8
    %v4043 = vpop.permute.xlu0 %4042
    %4044 = vrot.lane.b32.xlu0 %v3965, 8
    %v4045 = vpop.permute.xlu0 %4044
    %4046 = vrot.lane.b32.xlu0 %v4033, 8
    %v4047 = vpop.permute.xlu0 %4046
    %4056 = vrot.lane.b32.xlu0 %v3830, 16
    %v4057 = vpop.permute.xlu0 %4056
    %4058 = vrot.lane.b32.xlu0 %v3898, 16
    %v4059 = vpop.permute.xlu0 %4058
    %4060 = vrot.lane.b32.xlu0 %v3966, 16
    %v4061 = vpop.permute.xlu0 %4060
    %4062 = vrot.lane.b32.xlu0 %v4034, 16
    %v4063 = vpop.permute.xlu0 %4062
    %4072 = vrot.lane.b32.xlu0 %v3831, 24
    %v4073 = vpop.permute.xlu0 %4072
    %4074 = vrot.lane.b32.xlu0 %v3899, 24
    %v4075 = vpop.permute.xlu0 %4074
    %4076 = vrot.lane.b32.xlu0 %v3967, 24
    %v4077 = vpop.permute.xlu0 %4076
    %4078 = vrot.lane.b32.xlu0 %v4035, 24
    %v4079 = vpop.permute.xlu0 %4078
    %v4084 = vsel %vm1926, %v3828, %v4041
    %v4085 = vsel %vm1926, %v3896, %v4043
    %v4086 = vsel %vm1926, %v3964, %v4045
    %v4087 = vsel %vm1926, %v4032, %v4047
    %v4088 = vsel %vm2667, %v4084, %v4057
    %v4089 = vsel %vm2667, %v4085, %v4059
    %v4090 = vsel %vm2667, %v4086, %v4061
    %v4091 = vsel %vm2667, %v4087, %v4063
    %vm4092 = vcmask 195584
    %v4093 = vsel %vm4092, %v4088, %v4073
    %v4094 = vsel %vm4092, %v4089, %v4075
    %v4095 = vsel %vm4092, %v4090, %v4077
    %v4096 = vsel %vm4092, %v4091, %v4079
    %v4097 = vld [vmem:[%s3] sm:$0xff]
    %v4098 = vld [vmem:[%s3 + $0x8] sm:$0xff]
    %v4099 = vld [vmem:[%s3 + $0x10] sm:$0xff]
    %v4100 = vld [vmem:[%s3 + $0x18] sm:$0xff]
    %v4101 = vlaneseq
    %v4102 = vshrl.u32 %v4101, 7
    %v4103 = vsub.s32 1, %v4102
    %v4104 = vrot.slane %v45, %v4103
    %v4106 = vsel %vm54, %v4093, 0
    %v4109 = vsel %vm54, %v4094, 0
    %v4112 = vsel %vm54, %v4095, 0
    %v4115 = vsel %vm54, %v4096, 0
    %4117 = vmatprep.subr.mxu0 0.0
    %4118 = vmatpush1.msra.mxu0 %v4097
    %4119 = vmatprep.subr.mxu0 0.0
    %4120 = vmatpush1.msra.mxu0 %v4098
    %4121 = vmatprep.subr.mxu0 0.0
    %4122 = vmatpush1.msra.mxu0 %v4099
    %4123 = vmatprep.subr.mxu0 0.0
    %4124 = vmatpush1.msra.mxu0 %v4100
    %4125 = vmatprep.subr.mxu0 0.0
    %4126 = vmatpush1.msra.mxu0 0.0
    %4127 = vmatprep.subr.mxu0 0.0
    %4128 = vmatpush1.msra.mxu0 0.0
    %4129 = vmatprep.subr.mxu0 0.0
    %4130 = vmatpush1.msra.mxu0 0.0
    %4131 = vmatprep.subr.mxu0 0.0
    %4132 = vmatpush1.msra.mxu0 0.0
    %4133 = vmatprep.subr.mxu0 0.0
    %4134 = vmatpush1.msra.mxu0 0.0
    %4135 = vmatprep.subr.mxu0 0.0
    %4136 = vmatpush1.msra.mxu0 0.0
    %4137 = vmatprep.subr.mxu0 0.0
    %4138 = vmatpush1.msra.mxu0 0.0
    %4139 = vmatprep.subr.mxu0 0.0
    %4140 = vmatpush1.msra.mxu0 0.0
    %4141 = vmatprep.subr.mxu0 0.0
    %4142 = vmatpush1.msra.mxu0 0.0
    %4143 = vmatprep.subr.mxu0 0.0
    %4144 = vmatpush1.msra.mxu0 0.0
    %4145 = vmatprep.subr.mxu0 0.0
    %4146 = vmatpush1.msra.mxu0 0.0
    %4147 = vmatprep.subr.mxu0 0.0
    %4148 = vmatpush1.msra.mxu0 0.0
    %4149 = vmatprep.subr.mxu0 0.0
    %4150 = vmatpush1.msra.mxu0 0.0
    %4151 = vmatprep.subr.mxu0 0.0
    %4152 = vmatpush1.msra.mxu0 0.0
    %4153 = vmatprep.subr.mxu0 0.0
    %4154 = vmatpush1.msra.mxu0 0.0
    %4155 = vmatprep.subr.mxu0 0.0
    %4156 = vmatpush1.msra.mxu0 0.0
    %4157 = vmatprep.subr.mxu0 0.0
    %4158 = vmatpush1.msra.mxu0 0.0
    %4159 = vmatprep.subr.mxu0 0.0
    %4160 = vmatpush1.msra.mxu0 0.0
    %4161 = vmatprep.subr.mxu0 0.0
    %4162 = vmatpush1.msra.mxu0 0.0
    %4163 = vmatprep.subr.mxu0 0.0
    %4164 = vmatpush1.msra.mxu0 0.0
    %4165 = vmatprep.subr.mxu0 0.0
    %4166 = vmatpush1.msra.mxu0 0.0
    %4167 = vmatprep.subr.mxu0 0.0
    %4168 = vmatpush1.msra.mxu0 0.0
    %4169 = vmatprep.subr.mxu0 0.0
    %4170 = vmatpush1.msra.mxu0 0.0
    %4171 = vmatprep.subr.mxu0 0.0
    %4172 = vmatpush1.msra.mxu0 0.0
    %4173 = vmatprep.subr.mxu0 0.0
    %4174 = vmatpush1.msra.mxu0 0.0
    %4175 = vmatprep.subr.mxu0 0.0
    %4176 = vmatpush1.msra.mxu0 0.0
    %4177 = vmatprep.subr.mxu0 0.0
    %4178 = vmatpush1.msra.mxu0 0.0
    %4179 = vmatprep.subr.mxu0 0.0
    %4180 = vmatpush1.msra.mxu0 0.0
    %4181 = vmatprep.mubr.f32.mxu0 0.0
    %4182 = vmatmul.mubr.f32.gmra.mrb[0].mxu0 %v4106
    %v4183 = vpop.f32.mrb[0].mxu0
    %v4184 = vadd.f32 %v4104, %v4183
    %v4185 = vpop.f32.mrb[0].mxu0
    %4186 = vmatprep.mubr.f32.mxu0 0.0
    %4187 = vmatmul.mubr.f32.gmra.mrb[0].mxu0 %v4109
    %v4188 = vpop.f32.mrb[0].mxu0
    %v4189 = vadd.f32 %v4104, %v4188
    %v4190 = vpop.f32.mrb[0].mxu0
    %4191 = vmatprep.mubr.f32.mxu0 0.0
    %4192 = vmatmul.mubr.f32.gmra.mrb[0].mxu0 %v4112
    %v4193 = vpop.f32.mrb[0].mxu0
    %v4194 = vadd.f32 %v4104, %v4193
    %v4195 = vpop.f32.mrb[0].mxu0
    %4196 = vmatprep.mubr.f32.mxu0 0.0
    %4197 = vmatmul.mubr.f32.gmra.mrb[0].mxu0 %v4115
    %v4198 = vpop.f32.mrb[0].mxu0
    %v4199 = vadd.f32 %v4104, %v4198
    %v4200 = vpop.f32.mrb[0].mxu0
    %4201 = vdwg.mxu0
    %v4202 = vadd.f32 %v41, %v4184
    %v4203 = vadd.f32 %v42, %v4189
    %v4204 = vadd.f32 %v43, %v4194
    %v4205 = vadd.f32 %v44, %v4199
    %v4206 = vsel %vm54, %v4202, 0.0
    %4207 = vadd.xlane.f32.xlu0 %v4206
    %v4208 = vpop.xlane.xlu0 %4207
    %v4209 = vsel %vm54, %v4203, 0.0
    %4210 = vadd.xlane.f32.xlu0 %v4209
    %v4211 = vpop.xlane.xlu0 %4210
    %v4212 = vsel %vm54, %v4204, 0.0
    %4213 = vadd.xlane.f32.xlu0 %v4212
    %v4214 = vpop.xlane.xlu0 %4213
    %v4215 = vsel %vm54, %v4205, 0.0
    %4216 = vadd.xlane.f32.xlu0 %v4215
    %v4217 = vpop.xlane.xlu0 %4216
    %v4218 = vrcp.pop 32.0
    %v4219 = vmul.f32 %v4208, %v4218
    %v4220 = vmul.f32 %v4211, %v4218
    %v4221 = vmul.f32 %v4214, %v4218
    %v4222 = vmul.f32 %v4217, %v4218
    %v4223 = vsub.f32 %v4202, %v4219
    %v4224 = vsub.f32 %v4203, %v4220
    %v4225 = vsub.f32 %v4204, %v4221
    %v4226 = vsub.f32 %v4205, %v4222
    %v4227 = vmul.f32 %v4223, %v4223
    %v4228 = vmul.f32 %v4224, %v4224
    %v4229 = vmul.f32 %v4225, %v4225
    %v4230 = vmul.f32 %v4226, %v4226
    %v4231 = vsel %vm54, %v4227, 0.0
    %4232 = vadd.xlane.f32.xlu0 %v4231
    %v4233 = vpop.xlane.xlu0 %4232
    %v4234 = vsel %vm54, %v4228, 0.0
    %4235 = vadd.xlane.f32.xlu0 %v4234
    %v4236 = vpop.xlane.xlu0 %4235
    %v4237 = vsel %vm54, %v4229, 0.0
    %4238 = vadd.xlane.f32.xlu0 %v4237
    %v4239 = vpop.xlane.xlu0 %4238
    %v4240 = vsel %vm54, %v4230, 0.0
    %4241 = vadd.xlane.f32.xlu0 %v4240
    %v4242 = vpop.xlane.xlu0 %4241
    %v4243 = vmul.f32 %v4233, 0.032258064
    %v4244 = vmul.f32 %v4236, 0.032258064
    %v4245 = vmul.f32 %v4239, 0.032258064
    %v4246 = vmul.f32 %v4242, 0.032258064
    %v4247 = vrsqrt.pop %v4243
    %v4248 = vmul.f32 %v4243, %v4247
    %vm4249 = vcmp.eq.f32.partialorder %v4243, inf
    %v4250 = vsel %vm4249, %v4243, %v4248
    %vm4251 = vcmp.eq.f32.partialorder %v4243, 0.0
    %v4252 = vand.u32 %v4243, 2147483648
    %v4253 = vsel %vm4251, %v4252, %v4250
    %v4254 = vrsqrt.pop %v4244
    %v4255 = vmul.f32 %v4244, %v4254
    %vm4256 = vcmp.eq.f32.partialorder %v4244, inf
    %v4257 = vsel %vm4256, %v4244, %v4255
    %vm4258 = vcmp.eq.f32.partialorder %v4244, 0.0
    %v4259 = vand.u32 %v4244, 2147483648
    %v4260 = vsel %vm4258, %v4259, %v4257
    %v4261 = vrsqrt.pop %v4245
    %v4262 = vmul.f32 %v4245, %v4261
    %vm4263 = vcmp.eq.f32.partialorder %v4245, inf
    %v4264 = vsel %vm4263, %v4245, %v4262
    %vm4265 = vcmp.eq.f32.partialorder %v4245, 0.0
    %v4266 = vand.u32 %v4245, 2147483648
    %v4267 = vsel %vm4265, %v4266, %v4264
    %v4268 = vrsqrt.pop %v4246
    %v4269 = vmul.f32 %v4246, %v4268
    %vm4270 = vcmp.eq.f32.partialorder %v4246, inf
    %v4271 = vsel %vm4270, %v4246, %v4269
    %vm4272 = vcmp.eq.f32.partialorder %v4246, 0.0
    %v4273 = vand.u32 %v4246, 2147483648
    %v4274 = vsel %vm4272, %v4273, %v4271
    %v4275 = vadd.f32 %v4253, 1e-06
    %v4276 = vadd.f32 %v4260, 1e-06
    %v4277 = vadd.f32 %v4267, 1e-06
    %v4278 = vadd.f32 %v4274, 1e-06
    %v4279 = vrcp.pop %v4275
    %v4280 = vrcp.pop %v4276
    %v4281 = vrcp.pop %v4277
    %v4282 = vrcp.pop %v4278
    %v4283 = vlaneseq
    %v4284 = vshrl.u32 %v4283, 7
    %v4285 = vsub.s32 4, %v4284
    %v4286 = vrot.slane %v45, %v4285
    %v4287 = vmul.f32 %v4286, %v4223
    %v4288 = vmul.f32 %v4286, %v4224
    %v4289 = vmul.f32 %v4286, %v4225
    %v4290 = vmul.f32 %v4286, %v4226
    %v4291 = vmul.f32 %v4287, %v4279
    %v4292 = vmul.f32 %v4288, %v4280
    %v4293 = vmul.f32 %v4289, %v4281
    %v4294 = vmul.f32 %v4290, %v4282
    %v4295 = vlaneseq
    %v4296 = vshrl.u32 %v4295, 7
    %v4297 = vsub.s32 5, %v4296
    %v4298 = vrot.slane %v45, %v4297
    %v4299 = vadd.f32 %v4291, %v4298
    %v4300 = vadd.f32 %v4292, %v4298
    %v4301 = vadd.f32 %v4293, %v4298
    %v4302 = vadd.f32 %v4294, %v4298
    %v4303 = vld [vmem:[#allocation2] sm:$0xff]
    %v4304 = vld [vmem:[#allocation2 + $0x8] sm:$0xff]
    %v4305 = vld [vmem:[#allocation2 + $0x10] sm:$0xff]
    %v4306 = vld [vmem:[#allocation2 + $0x18] sm:$0xff]
    %v4307 = vlaneseq
    %v4308 = vshrl.u32 %v4307, 7
    %v4309 = vsub.s32 2, %v4308
    %v4310 = vrot.slane %v45, %v4309
    %v4312 = vsel %vm54, %v4299, 0
    %v4315 = vsel %vm54, %v4300, 0
    %v4318 = vsel %vm54, %v4301, 0
    %v4321 = vsel %vm54, %v4302, 0
    %4323 = vmatprep.subr.mxu0 0.0
    %4324 = vmatpush1.msra.mxu0 %v4303
    %4325 = vmatprep.subr.mxu0 0.0
    %4326 = vmatpush1.msra.mxu0 %v4304
    %4327 = vmatprep.subr.mxu0 0.0
    %4328 = vmatpush1.msra.mxu0 %v4305
    %4329 = vmatprep.subr.mxu0 0.0
    %4330 = vmatpush1.msra.mxu0 %v4306
    %4331 = vmatprep.subr.mxu0 0.0
    %4332 = vmatpush1.msra.mxu0 0.0
    %4333 = vmatprep.subr.mxu0 0.0
    %4334 = vmatpush1.msra.mxu0 0.0
    %4335 = vmatprep.subr.mxu0 0.0
    %4336 = vmatpush1.msra.mxu0 0.0
    %4337 = vmatprep.subr.mxu0 0.0
    %4338 = vmatpush1.msra.mxu0 0.0
    %4339 = vmatprep.subr.mxu0 0.0
    %4340 = vmatpush1.msra.mxu0 0.0
    %4341 = vmatprep.subr.mxu0 0.0
    %4342 = vmatpush1.msra.mxu0 0.0
    %4343 = vmatprep.subr.mxu0 0.0
    %4344 = vmatpush1.msra.mxu0 0.0
    %4345 = vmatprep.subr.mxu0 0.0
    %4346 = vmatpush1.msra.mxu0 0.0
    %4347 = vmatprep.subr.mxu0 0.0
    %4348 = vmatpush1.msra.mxu0 0.0
    %4349 = vmatprep.subr.mxu0 0.0
    %4350 = vmatpush1.msra.mxu0 0.0
    %4351 = vmatprep.subr.mxu0 0.0
    %4352 = vmatpush1.msra.mxu0 0.0
    %4353 = vmatprep.subr.mxu0 0.0
    %4354 = vmatpush1.msra.mxu0 0.0
    %4355 = vmatprep.subr.mxu0 0.0
    %4356 = vmatpush1.msra.mxu0 0.0
    %4357 = vmatprep.subr.mxu0 0.0
    %4358 = vmatpush1.msra.mxu0 0.0
    %4359 = vmatprep.subr.mxu0 0.0
    %4360 = vmatpush1.msra.mxu0 0.0
    %4361 = vmatprep.subr.mxu0 0.0
    %4362 = vmatpush1.msra.mxu0 0.0
    %4363 = vmatprep.subr.mxu0 0.0
    %4364 = vmatpush1.msra.mxu0 0.0
    %4365 = vmatprep.subr.mxu0 0.0
    %4366 = vmatpush1.msra.mxu0 0.0
    %4367 = vmatprep.subr.mxu0 0.0
    %4368 = vmatpush1.msra.mxu0 0.0
    %4369 = vmatprep.subr.mxu0 0.0
    %4370 = vmatpush1.msra.mxu0 0.0
    %4371 = vmatprep.subr.mxu0 0.0
    %4372 = vmatpush1.msra.mxu0 0.0
    %4373 = vmatprep.subr.mxu0 0.0
    %4374 = vmatpush1.msra.mxu0 0.0
    %4375 = vmatprep.subr.mxu0 0.0
    %4376 = vmatpush1.msra.mxu0 0.0
    %4377 = vmatprep.subr.mxu0 0.0
    %4378 = vmatpush1.msra.mxu0 0.0
    %4379 = vmatprep.subr.mxu0 0.0
    %4380 = vmatpush1.msra.mxu0 0.0
    %4381 = vmatprep.subr.mxu0 0.0
    %4382 = vmatpush1.msra.mxu0 0.0
    %4383 = vmatprep.subr.mxu0 0.0
    %4384 = vmatpush1.msra.mxu0 0.0
    %4385 = vmatprep.subr.mxu0 0.0
    %4386 = vmatpush1.msra.mxu0 0.0
    %4387 = vmatprep.mubr.f32.mxu0 0.0
    %4388 = vmatmul.mubr.f32.gmra.mrb[0].mxu0 %v4312
    %v4389 = vpop.f32.mrb[0].mxu0
    %v4390 = vadd.f32 %v4310, %v4389
    %v4391 = vpop.f32.mrb[0].mxu0
    %4392 = vmatprep.mubr.f32.mxu0 0.0
    %4393 = vmatmul.mubr.f32.gmra.mrb[0].mxu0 %v4315
    %v4394 = vpop.f32.mrb[0].mxu0
    %v4395 = vadd.f32 %v4310, %v4394
    %v4396 = vpop.f32.mrb[0].mxu0
    %4397 = vmatprep.mubr.f32.mxu0 0.0
    %4398 = vmatmul.mubr.f32.gmra.mrb[0].mxu0 %v4318
    %v4399 = vpop.f32.mrb[0].mxu0
    %v4400 = vadd.f32 %v4310, %v4399
    %v4401 = vpop.f32.mrb[0].mxu0
    %4402 = vmatprep.mubr.f32.mxu0 0.0
    %4403 = vmatmul.mubr.f32.gmra.mrb[0].mxu0 %v4321
    %v4404 = vpop.f32.mrb[0].mxu0
    %v4405 = vadd.f32 %v4310, %v4404
    %v4406 = vpop.f32.mrb[0].mxu0
    %4407 = vdwg.mxu0
    %v4408 = vmax.f32 %v4390, 0.0
    %v4409 = vmax.f32 %v4395, 0.0
    %v4410 = vmax.f32 %v4400, 0.0
    %v4411 = vmax.f32 %v4405, 0.0
    %v4412 = vld [vmem:[%s5] sm:$0xff]
    %v4413 = vld [vmem:[%s5 + $0x8] sm:$0xff]
    %v4414 = vld [vmem:[%s5 + $0x10] sm:$0xff]
    %v4415 = vld [vmem:[%s5 + $0x18] sm:$0xff]
    %v4416 = vld [vmem:[%s5 + $0x20] sm:$0xff]
    %v4417 = vld [vmem:[%s5 + $0x28] sm:$0xff]
    %v4418 = vld [vmem:[%s5 + $0x30] sm:$0xff]
    %v4419 = vld [vmem:[%s5 + $0x38] sm:$0xff]
    %v4420 = vlaneseq
    %v4421 = vshrl.u32 %v4420, 7
    %v4422 = vsub.s32 3, %v4421
    %v4423 = vrot.slane %v45, %v4422
    %vm4424 = vcmask 523264
    %v4426 = vsel %vm4424, %v4408, 0
    %v4429 = vsel %vm4424, %v4409, 0
    %v4432 = vsel %vm4424, %v4410, 0
    %v4435 = vsel %vm4424, %v4411, 0
    %4437 = vmatprep.subr.mxu0 0.0
    %4438 = vmatpush1.msra.mxu0 %v4412
    %4439 = vmatprep.subr.mxu0 0.0
    %4440 = vmatpush1.msra.mxu0 %v4413
    %4441 = vmatprep.subr.mxu0 0.0
    %4442 = vmatpush1.msra.mxu0 %v4414
    %4443 = vmatprep.subr.mxu0 0.0
    %4444 = vmatpush1.msra.mxu0 %v4415
    %4445 = vmatprep.subr.mxu0 0.0
    %4446 = vmatpush1.msra.mxu0 %v4416
    %4447 = vmatprep.subr.mxu0 0.0
    %4448 = vmatpush1.msra.mxu0 %v4417
    %4449 = vmatprep.subr.mxu0 0.0
    %4450 = vmatpush1.msra.mxu0 %v4418
    %4451 = vmatprep.subr.mxu0 0.0
    %4452 = vmatpush1.msra.mxu0 %v4419
    %4453 = vmatprep.subr.mxu0 0.0
    %4454 = vmatpush1.msra.mxu0 0.0
    %4455 = vmatprep.subr.mxu0 0.0
    %4456 = vmatpush1.msra.mxu0 0.0
    %4457 = vmatprep.subr.mxu0 0.0
    %4458 = vmatpush1.msra.mxu0 0.0
    %4459 = vmatprep.subr.mxu0 0.0
    %4460 = vmatpush1.msra.mxu0 0.0
    %4461 = vmatprep.subr.mxu0 0.0
    %4462 = vmatpush1.msra.mxu0 0.0
    %4463 = vmatprep.subr.mxu0 0.0
    %4464 = vmatpush1.msra.mxu0 0.0
    %4465 = vmatprep.subr.mxu0 0.0
    %4466 = vmatpush1.msra.mxu0 0.0
    %4467 = vmatprep.subr.mxu0 0.0
    %4468 = vmatpush1.msra.mxu0 0.0
    %4469 = vmatprep.subr.mxu0 0.0
    %4470 = vmatpush1.msra.mxu0 0.0
    %4471 = vmatprep.subr.mxu0 0.0
    %4472 = vmatpush1.msra.mxu0 0.0
    %4473 = vmatprep.subr.mxu0 0.0
    %4474 = vmatpush1.msra.mxu0 0.0
    %4475 = vmatprep.subr.mxu0 0.0
    %4476 = vmatpush1.msra.mxu0 0.0
    %4477 = vmatprep.subr.mxu0 0.0
    %4478 = vmatpush1.msra.mxu0 0.0
    %4479 = vmatprep.subr.mxu0 0.0
    %4480 = vmatpush1.msra.mxu0 0.0
    %4481 = vmatprep.subr.mxu0 0.0
    %4482 = vmatpush1.msra.mxu0 0.0
    %4483 = vmatprep.subr.mxu0 0.0
    %4484 = vmatpush1.msra.mxu0 0.0
    %4485 = vmatprep.subr.mxu0 0.0
    %4486 = vmatpush1.msra.mxu0 0.0
    %4487 = vmatprep.subr.mxu0 0.0
    %4488 = vmatpush1.msra.mxu0 0.0
    %4489 = vmatprep.subr.mxu0 0.0
    %4490 = vmatpush1.msra.mxu0 0.0
    %4491 = vmatprep.subr.mxu0 0.0
    %4492 = vmatpush1.msra.mxu0 0.0
    %4493 = vmatprep.subr.mxu0 0.0
    %4494 = vmatpush1.msra.mxu0 0.0
    %4495 = vmatprep.subr.mxu0 0.0
    %4496 = vmatpush1.msra.mxu0 0.0
    %4497 = vmatprep.subr.mxu0 0.0
    %4498 = vmatpush1.msra.mxu0 0.0
    %4499 = vmatprep.subr.mxu0 0.0
    %4500 = vmatpush1.msra.mxu0 0.0
    %4501 = vmatprep.mubr.f32.mxu0 0.0
    %4502 = vmatmul.mubr.f32.gmra.mrb[0].mxu0 %v4426
    %v4503 = vpop.f32.mrb[0].mxu0
    %v4504 = vadd.f32 %v4423, %v4503
    %v4505 = vpop.f32.mrb[0].mxu0
    %4506 = vmatprep.mubr.f32.mxu0 0.0
    %4507 = vmatmul.mubr.f32.gmra.mrb[0].mxu0 %v4429
    %v4508 = vpop.f32.mrb[0].mxu0
    %v4509 = vadd.f32 %v4423, %v4508
    %v4510 = vpop.f32.mrb[0].mxu0
    %4511 = vmatprep.mubr.f32.mxu0 0.0
    %4512 = vmatmul.mubr.f32.gmra.mrb[0].mxu0 %v4432
    %v4513 = vpop.f32.mrb[0].mxu0
    %v4514 = vadd.f32 %v4423, %v4513
    %v4515 = vpop.f32.mrb[0].mxu0
    %4516 = vmatprep.mubr.f32.mxu0 0.0
    %4517 = vmatmul.mubr.f32.gmra.mrb[0].mxu0 %v4435
    %v4518 = vpop.f32.mrb[0].mxu0
    %v4519 = vadd.f32 %v4423, %v4518
    %v4520 = vpop.f32.mrb[0].mxu0
    %4521 = vdwg.mxu0
    %v4522 = vadd.f32 %v4299, %v4504
    %v4523 = vadd.f32 %v4300, %v4509
    %v4524 = vadd.f32 %v4301, %v4514
    %v4525 = vadd.f32 %v4302, %v4519
    %v4526 = vsel %vm54, %v4522, 0.0
    %4527 = vadd.xlane.f32.xlu0 %v4526
    %v4528 = vpop.xlane.xlu0 %4527
    %v4529 = vsel %vm54, %v4523, 0.0
    %4530 = vadd.xlane.f32.xlu0 %v4529
    %v4531 = vpop.xlane.xlu0 %4530
    %v4532 = vsel %vm54, %v4524, 0.0
    %4533 = vadd.xlane.f32.xlu0 %v4532
    %v4534 = vpop.xlane.xlu0 %4533
    %v4535 = vsel %vm54, %v4525, 0.0
    %4536 = vadd.xlane.f32.xlu0 %v4535
    %v4537 = vpop.xlane.xlu0 %4536
    %v4538 = vmul.f32 %v4528, %v4218
    %v4539 = vmul.f32 %v4531, %v4218
    %v4540 = vmul.f32 %v4534, %v4218
    %v4541 = vmul.f32 %v4537, %v4218
    %v4542 = vsub.f32 %v4522, %v4538
    %v4543 = vsub.f32 %v4523, %v4539
    %v4544 = vsub.f32 %v4524, %v4540
    %v4545 = vsub.f32 %v4525, %v4541
    %v4546 = vmul.f32 %v4542, %v4542
    %v4547 = vmul.f32 %v4543, %v4543
    %v4548 = vmul.f32 %v4544, %v4544
    %v4549 = vmul.f32 %v4545, %v4545
    %v4550 = vsel %vm54, %v4546, 0.0
    %4551 = vadd.xlane.f32.xlu0 %v4550
    %v4552 = vpop.xlane.xlu0 %4551
    %v4553 = vsel %vm54, %v4547, 0.0
    %4554 = vadd.xlane.f32.xlu0 %v4553
    %v4555 = vpop.xlane.xlu0 %4554
    %v4556 = vsel %vm54, %v4548, 0.0
    %4557 = vadd.xlane.f32.xlu0 %v4556
    %v4558 = vpop.xlane.xlu0 %4557
    %v4559 = vsel %vm54, %v4549, 0.0
    %4560 = vadd.xlane.f32.xlu0 %v4559
    %v4561 = vpop.xlane.xlu0 %4560
    %v4562 = vmul.f32 %v4552, 0.032258064
    %v4563 = vmul.f32 %v4555, 0.032258064
    %v4564 = vmul.f32 %v4558, 0.032258064
    %v4565 = vmul.f32 %v4561, 0.032258064
    %v4566 = vrsqrt.pop %v4562
    %v4567 = vmul.f32 %v4562, %v4566
    %vm4568 = vcmp.eq.f32.partialorder %v4562, inf
    %v4569 = vsel %vm4568, %v4562, %v4567
    %vm4570 = vcmp.eq.f32.partialorder %v4562, 0.0
    %v4571 = vand.u32 %v4562, 2147483648
    %v4572 = vsel %vm4570, %v4571, %v4569
    %v4573 = vrsqrt.pop %v4563
    %v4574 = vmul.f32 %v4563, %v4573
    %vm4575 = vcmp.eq.f32.partialorder %v4563, inf
    %v4576 = vsel %vm4575, %v4563, %v4574
    %vm4577 = vcmp.eq.f32.partialorder %v4563, 0.0
    %v4578 = vand.u32 %v4563, 2147483648
    %v4579 = vsel %vm4577, %v4578, %v4576
    %v4580 = vrsqrt.pop %v4564
    %v4581 = vmul.f32 %v4564, %v4580
    %vm4582 = vcmp.eq.f32.partialorder %v4564, inf
    %v4583 = vsel %vm4582, %v4564, %v4581
    %vm4584 = vcmp.eq.f32.partialorder %v4564, 0.0
    %v4585 = vand.u32 %v4564, 2147483648
    %v4586 = vsel %vm4584, %v4585, %v4583
    %v4587 = vrsqrt.pop %v4565
    %v4588 = vmul.f32 %v4565, %v4587
    %vm4589 = vcmp.eq.f32.partialorder %v4565, inf
    %v4590 = vsel %vm4589, %v4565, %v4588
    %vm4591 = vcmp.eq.f32.partialorder %v4565, 0.0
    %v4592 = vand.u32 %v4565, 2147483648
    %v4593 = vsel %vm4591, %v4592, %v4590
    %v4594 = vadd.f32 %v4572, 1e-06
    %v4595 = vadd.f32 %v4579, 1e-06
    %v4596 = vadd.f32 %v4586, 1e-06
    %v4597 = vadd.f32 %v4593, 1e-06
    %v4598 = vrcp.pop %v4594
    %v4599 = vrcp.pop %v4595
    %v4600 = vrcp.pop %v4596
    %v4601 = vrcp.pop %v4597
    %v4602 = vlaneseq
    %v4603 = vshrl.u32 %v4602, 7
    %v4604 = vsub.s32 6, %v4603
    %v4605 = vrot.slane %v45, %v4604
    %v4606 = vmul.f32 %v4605, %v4542
    %v4607 = vmul.f32 %v4605, %v4543
    %v4608 = vmul.f32 %v4605, %v4544
    %v4609 = vmul.f32 %v4605, %v4545
    %v4610 = vmul.f32 %v4606, %v4598
    %v4611 = vmul.f32 %v4607, %v4599
    %v4612 = vmul.f32 %v4608, %v4600
    %v4613 = vmul.f32 %v4609, %v4601
    %v4614 = vlaneseq
    %v4615 = vshrl.u32 %v4614, 7
    %v4616 = vsub.s32 7, %v4615
    %v4617 = vrot.slane %v45, %v4616
    %v4618 = vadd.f32 %v4610, %v4617
    %v4619 = vadd.f32 %v4611, %v4617
    %v4620 = vadd.f32 %v4612, %v4617
    %v4621 = vadd.f32 %v4613, %v4617
    %4622 = vst.msk [vmem:[#allocation5] sm:$0xff] %vm54, %v4618
    %4623 = vst.msk [vmem:[#allocation5 + $0x8] sm:$0xff] %vm54, %v4619
    %4624 = vst.msk [vmem:[#allocation5 + $0x10] sm:$0xff] %vm54, %v4620
    %4625 = vst.msk [vmem:[#allocation5 + $0x18] sm:$0xff] %vm54, %v4621
    // Predicated region
    $region34: #{tpu_custom_call.1} parent=1 // pred_check
      _
    $region35: #{tpu_custom_call.1} parent=1 // pred_check_branch
      %4627 = sbr.rel (0) target = $region37
    $region36: #{tpu_custom_call.1} parent=1 // pred_region
      %s4629 = ssub.s32 512, 512
      %4630 = vsyncadd [#allocation4], %s4629
      %s4631 = sshll.u32 [#allocation5], 4
      %s4632 = int_to_ptr.vmem [resolvable:$true] %s4631
      %4637 = dma.vmem_to_hbm [thread:$0]  %s4632, 512, %s7, [#allocation4], 128, 128, 8
    $region37: #{tpu_custom_call.1} parent=1 // pred_fallthru
      _
    // Predicated region
    $region38: #{tpu_custom_call.1} parent=1 // pred_check
      _
    $region39: #{tpu_custom_call.1} parent=1 // pred_check_branch
      %4639 = sbr.rel (0) target = $region41
    $region40: #{tpu_custom_call.1} parent=1 // pred_region
      %4640 = dma.done [#allocation4], 512
    $region41: #{tpu_custom_call.1} parent=1 // pred_fallthru
      _
    %4641 = vsyncpa [#allocation3], 1
    %4642 = vsyncpa [#allocation4], 1

</llo_original>
